<compile_context>
chip_gen: v5e
topology: v5e:2x2
jax: 0.10.0
libtpu: 0.0.40
codegen_flags: <defaults>
</compile_context>

<pallas_src>
import jax
import jax.numpy as jnp
from jax import lax
from jax.experimental import pallas as pl
from jax.experimental.pallas import tpu as pltpu

NEG_SLOPE = 0.2     # GATConv LeakyReLU default
BN_EPS = 1e-5       # BatchNorm1d default eps
MASK_BIG = 1e30

_VMEM_SPEC = pl.BlockSpec(memory_space=pltpu.MemorySpace.VMEM)


# --------------------------- fused forward kernel ---------------------------
def _gat_fused_kernel(x_ref, w_ref, att_dst_ref, att_src_t_ref, bias_ref,
                      gamma_ref, beta_ref, mask_ref, e_sum_ref,
                      lin_w_ref, lin_b_ref, out_ref):
    n_layers, _, hc = w_ref.shape            # hc = heads * out_channels
    heads = att_src_t_ref.shape[1]
    out_ch = hc // heads
    n = x_ref.shape[0]

    x = x_ref[...]                           # [N, Fpad]
    e_sum = e_sum_ref[...]                   # [H*N, H] head-block sum indicator

    for layer in range(n_layers):            # static unroll (4 layers)
        w = w_ref[layer]                                             # [Fpad, H*C]
        h = jnp.dot(x, w, preferred_element_type=jnp.float32)        # [N, H*C]

        # Attention logits on the MXU (no per-head elementwise reductions).
        a_dst = jnp.dot(h, att_dst_ref[layer],
                        preferred_element_type=jnp.float32)          # [N, H]
        a_src_t = lax.dot_general(                                   # [H, N]
            att_src_t_ref[layer], h,
            dimension_numbers=(((1,), (1,)), ((), ())),
            preferred_element_type=jnp.float32)

        # Lane-dense edge logits e[dst, h*N + src]; head h fills lanes
        # [h*N, (h+1)*N).  All heavy elementwise/EUP work runs at [32,128].
        e = jnp.concatenate(
            [a_dst[:, hh:hh + 1] + a_src_t[hh:hh + 1, :] for hh in range(heads)],
            axis=1)                                                   # [N, H*N]
        e = jnp.where(e > 0.0, e, NEG_SLOPE * e)                      # LeakyReLU
        e = e + mask_ref[layer]                                       # additive -1e30 mask

        # Numerically-stable masked softmax over sources, batched over heads.
        # Self-loops guarantee >=1 unmasked source per (dst, head) row.
        m = jnp.concatenate(
            [jnp.broadcast_to(
                jnp.max(e[:, hh * n:(hh + 1) * n], axis=-1, keepdims=True),
                (n, n)) for hh in range(heads)], axis=1)              # [N, H*N]
        p = jnp.exp(e - m)                                            # [N, H*N]
        denom = jnp.dot(p, e_sum, preferred_element_type=jnp.float32)  # [N, H]
        inv = pl.reciprocal(denom, approx=True)                       # [N, H]
        inv_exp = jnp.concatenate(
            [jnp.broadcast_to(inv[:, hh:hh + 1], (n, n)) for hh in range(heads)],
            axis=1)                                                   # [N, H*N]
        alpha = p * inv_exp

        # Per-head aggregation on the MXU, assembled into one [N, H*C] value.
        agg = jnp.concatenate(
            [jnp.dot(alpha[:, hh * n:(hh + 1) * n],
                     h[:, hh * out_ch:(hh + 1) * out_ch],
                     preferred_element_type=jnp.float32)
             for hh in range(heads)], axis=1)                         # [N, H*C]
        y = agg + bias_ref[layer]

        # BatchNorm (train-mode batch statistics, biased variance) + ReLU.
        mean = jnp.mean(y, axis=0, keepdims=True)
        var = jnp.mean(jnp.square(y - mean), axis=0, keepdims=True)
        y = (y - mean) * lax.rsqrt(var + BN_EPS) * gamma_ref[layer] + beta_ref[layer]
        x = jnp.maximum(y, 0.0)

    # Final Linear — single full-width store of the kernel output.
    out_ref[...] = (jnp.dot(x, lin_w_ref[...], preferred_element_type=jnp.float32)
                    + lin_b_ref[...])


# ----------------------------- host-side packing -----------------------------
def _block_diag_cols(att):
    """att [H, C] -> [H*C, H]: column h holds att[h] in rows h*C:(h+1)*C."""
    h, c = att.shape
    return (jnp.eye(h, dtype=att.dtype)[:, None, :] * att[:, :, None]).reshape(h * c, h)


def _block_diag_rows(att):
    """att [H, C] -> [H, H*C]: row h holds att[h] in cols h*C:(h+1)*C."""
    h, c = att.shape
    return (jnp.eye(h, dtype=att.dtype)[:, :, None] * att[None, :, :]).reshape(h, h * c)


def dense_adj(edge_index, n):
    """edge_index [2, E] with (src, dst) rows -> dense mask adj[dst, src].

    Duplicate edges are deduplicated (dense-mask semantics); PyG's sparse edge
    softmax would count them separately.  Self-loops are added (GATConv
    default add_self_loops=True)."""
    src, dst = edge_index[0], edge_index[1]
    adj = jnp.zeros((n, n), jnp.float32)
    adj = adj.at[dst, src].set(1.0)
    adj = jnp.maximum(adj, jnp.eye(n, dtype=jnp.float32))
    return adj


def gat_forward(x, adj_spatial, adj_temporal, gat_params, lin_w, lin_b, *, heads):
    n = x.shape[0]
    hc = gat_params[0][0].shape[1]                    # heads * out_channels (per stage)
    assert all(p[0].shape[1] == hc for p in gat_params)
    assert x.shape[1] <= hc
    fin_pad = hc                                      # pad layer-0 input width to H*C

    w_s, ad_s, as_s, b_s, g_s, be_s = [], [], [], [], [], []
    for (w, a_s, a_d, b, gamma, beta) in gat_params:
        w_pad = jnp.zeros((fin_pad, hc), jnp.float32).at[:w.shape[0], :].set(w)
        w_s.append(w_pad)
        ad_s.append(_block_diag_cols(a_d))            # [H*C, H]
        as_s.append(_block_diag_rows(a_s))            # [H, H*C]
        b_s.append(b.reshape(1, hc))
        g_s.append(gamma.reshape(1, hc))
        be_s.append(beta.reshape(1, hc))
    W = jnp.stack(w_s)                                # [L, H*C, H*C]
    ATT_DST = jnp.stack(ad_s)                         # [L, H*C, H]
    ATT_SRC_T = jnp.stack(as_s)                       # [L, H, H*C]
    BIAS, GAMMA, BETA = jnp.stack(b_s), jnp.stack(g_s), jnp.stack(be_s)

    # Forward uses: spatial, spatial, temporal, temporal adjacency.
    adjs = [adj_spatial, adj_spatial, adj_temporal, adj_temporal]
    MASK = jnp.stack([jnp.tile((a - 1.0) * MASK_BIG, (1, heads)) for a in adjs])  # [L,N,H*N]

    # Head-block sum indicator: E_SUM[h*N + s, h'] = (h == h').
    E_SUM = jnp.repeat(jnp.eye(heads, dtype=jnp.float32), n, axis=0)              # [H*N, H]

    x_pad = jnp.zeros((n, fin_pad), jnp.float32).at[:, :x.shape[1]].set(x)
    lin_b2 = lin_b.reshape(1, -1)
    out_dim = lin_w.shape[1]

    return pl.pallas_call(
        _gat_fused_kernel,
        out_shape=jax.ShapeDtypeStruct((n, out_dim), jnp.float32),
        in_specs=[_VMEM_SPEC] * 11,
        out_specs=_VMEM_SPEC,
    )(x_pad, W, ATT_DST, ATT_SRC_T, BIAS, GAMMA, BETA, MASK, E_SUM, lin_w, lin_b2)


# ----------------------------------- main ------------------------------------
if __name__ == "__main__":
    key = jax.random.PRNGKey(0)
    N = 32                       # number of graph nodes
    input_dim, output_dim = 8, 4
    widths = [16, 16, 16, 16]    # len 4 -> 4 GATConv stages + final Linear = 13 layers
    heads = 4
    dims = [input_dim] + widths + [output_dim]

    keys = jax.random.split(key, 32)
    x = jax.random.normal(keys[0], (N, input_dim), jnp.float32)
    edge_index_spatial = jax.random.randint(keys[1], (2, 64), 0, N)
    edge_index_temporal = jax.random.randint(keys[2], (2, 64), 0, N)
    adj_sp = dense_adj(edge_index_spatial, N)
    adj_tp = dense_adj(edge_index_temporal, N)

    # Deterministic synthetic parameters (shapes match the PyTorch module).
    gat_params = []
    ki = 3
    for i in range(4):
        fin = dims[i] if i == 0 else dims[i] * heads
        fout = dims[i + 1]
        w = 0.1 * jax.random.normal(keys[ki], (fin, heads * fout), jnp.float32); ki += 1
        a_s = 0.1 * jax.random.normal(keys[ki], (heads, fout), jnp.float32); ki += 1
        a_d = 0.1 * jax.random.normal(keys[ki], (heads, fout), jnp.float32); ki += 1
        b = jnp.zeros((heads * fout,), jnp.float32)       # GATConv bias init
        gamma = jnp.ones((heads * fout,), jnp.float32)    # BatchNorm weight
        beta = jnp.zeros((heads * fout,), jnp.float32)    # BatchNorm bias
        gat_params.append((w, a_s, a_d, b, gamma, beta))
    lin_w = 0.1 * jax.random.normal(keys[ki], (dims[-2] * heads, output_dim),
                                    jnp.float32); ki += 1
    lin_b = jnp.zeros((output_dim,), jnp.float32)

    out = gat_forward(x, adj_sp, adj_tp, gat_params, lin_w, lin_b, heads=heads)
    jax.block_until_ready(out)
    assert out.shape == (N, output_dim) and bool(jnp.all(jnp.isfinite(out)))
    print("KERNEL_OK")
</pallas_src>

<mosaic_0001>
module attributes {stable_mosaic.version = 11 : i64} {
  func.func @_gat_fused_kernel(%arg0: memref<32x64xf32, #tpu.memory_space<vmem>>, %arg1: memref<4x64x64xf32, #tpu.memory_space<vmem>>, %arg2: memref<4x64x4xf32, #tpu.memory_space<vmem>>, %arg3: memref<4x4x64xf32, #tpu.memory_space<vmem>>, %arg4: memref<4x1x64xf32, #tpu.memory_space<vmem>>, %arg5: memref<4x1x64xf32, #tpu.memory_space<vmem>>, %arg6: memref<4x1x64xf32, #tpu.memory_space<vmem>>, %arg7: memref<4x32x128xf32, #tpu.memory_space<vmem>>, %arg8: memref<128x4xf32, #tpu.memory_space<vmem>>, %arg9: memref<64x4xf32, #tpu.memory_space<vmem>>, %arg10: memref<1x4xf32, #tpu.memory_space<vmem>>, %arg11: memref<32x4xf32, #tpu.memory_space<vmem>>) attributes {dimension_semantics = [], scalar_prefetch = 0 : i64, scratch_operands = 0 : i64, tpu.core_type = #tpu.core_type<tc>} {
    %c0 = arith.constant 0 : index
    %c0_0 = arith.constant 0 : index
    %0 = vector.load %arg0[%c0, %c0_0] : memref<32x64xf32, #tpu.memory_space<vmem>>, vector<32x64xf32>
    %c0_1 = arith.constant 0 : index
    %c0_2 = arith.constant 0 : index
    %1 = vector.load %arg8[%c0_1, %c0_2] : memref<128x4xf32, #tpu.memory_space<vmem>>, vector<128x4xf32>
    %c0_3 = arith.constant 0 : index
    %c0_4 = arith.constant 0 : index
    %c0_5 = arith.constant 0 : index
    %2 = vector.load %arg1[%c0_3, %c0_4, %c0_5] : memref<4x64x64xf32, #tpu.memory_space<vmem>>, vector<1x64x64xf32>
    %3 = vector.shape_cast %2 : vector<1x64x64xf32> to vector<64x64xf32>
    %cst = arith.constant dense<0.000000e+00> : vector<32x64xf32>
    %4 = tpu.matmul %0, %3, %cst {dimension_numbers = #tpu.dot_dimension_numbers<[1], [0], [0], [1], [0, 0, 1, 1], [], []>} : vector<32x64xf32>, vector<64x64xf32>, vector<32x64xf32> -> vector<32x64xf32>
    %c0_6 = arith.constant 0 : index
    %c0_7 = arith.constant 0 : index
    %c0_8 = arith.constant 0 : index
    %5 = vector.load %arg2[%c0_6, %c0_7, %c0_8] : memref<4x64x4xf32, #tpu.memory_space<vmem>>, vector<1x64x4xf32>
    %6 = vector.shape_cast %5 : vector<1x64x4xf32> to vector<64x4xf32>
    %cst_9 = arith.constant dense<0.000000e+00> : vector<32x4xf32>
    %7 = tpu.matmul %4, %6, %cst_9 {dimension_numbers = #tpu.dot_dimension_numbers<[1], [0], [0], [1], [0, 0, 1, 1], [], []>} : vector<32x64xf32>, vector<64x4xf32>, vector<32x4xf32> -> vector<32x4xf32>
    %c0_10 = arith.constant 0 : index
    %c0_11 = arith.constant 0 : index
    %c0_12 = arith.constant 0 : index
    %8 = vector.load %arg3[%c0_10, %c0_11, %c0_12] : memref<4x4x64xf32, #tpu.memory_space<vmem>>, vector<1x4x64xf32>
    %9 = vector.shape_cast %8 : vector<1x4x64xf32> to vector<4x64xf32>
    %cst_13 = arith.constant dense<0.000000e+00> : vector<4x32xf32>
    %10 = tpu.matmul %9, %4, %cst_13 {dimension_numbers = #tpu.dot_dimension_numbers<[1], [1], [0], [0], [0, 0, 1, 0], [], []>} : vector<4x64xf32>, vector<32x64xf32>, vector<4x32xf32> -> vector<4x32xf32>
    %11 = vector.extract_strided_slice %7 {offsets = [0, 0], sizes = [32, 1], strides = [1, 1]} : vector<32x4xf32> to vector<32x1xf32>
    %12 = vector.extract_strided_slice %10 {offsets = [0, 0], sizes = [1, 32], strides = [1, 1]} : vector<4x32xf32> to vector<1x32xf32>
    %13 = vector.broadcast %11 : vector<32x1xf32> to vector<32x32xf32>
    %14 = vector.broadcast %12 : vector<1x32xf32> to vector<32x32xf32>
    %15 = arith.addf %13, %14 : vector<32x32xf32>
    %16 = vector.extract_strided_slice %7 {offsets = [0, 1], sizes = [32, 1], strides = [1, 1]} : vector<32x4xf32> to vector<32x1xf32>
    %17 = vector.extract_strided_slice %10 {offsets = [1, 0], sizes = [1, 32], strides = [1, 1]} : vector<4x32xf32> to vector<1x32xf32>
    %18 = vector.broadcast %16 : vector<32x1xf32> to vector<32x32xf32>
    %19 = vector.broadcast %17 : vector<1x32xf32> to vector<32x32xf32>
    %20 = arith.addf %18, %19 : vector<32x32xf32>
    %21 = vector.extract_strided_slice %7 {offsets = [0, 2], sizes = [32, 1], strides = [1, 1]} : vector<32x4xf32> to vector<32x1xf32>
    %22 = vector.extract_strided_slice %10 {offsets = [2, 0], sizes = [1, 32], strides = [1, 1]} : vector<4x32xf32> to vector<1x32xf32>
    %23 = vector.broadcast %21 : vector<32x1xf32> to vector<32x32xf32>
    %24 = vector.broadcast %22 : vector<1x32xf32> to vector<32x32xf32>
    %25 = arith.addf %23, %24 : vector<32x32xf32>
    %26 = vector.extract_strided_slice %7 {offsets = [0, 3], sizes = [32, 1], strides = [1, 1]} : vector<32x4xf32> to vector<32x1xf32>
    %27 = vector.extract_strided_slice %10 {offsets = [3, 0], sizes = [1, 32], strides = [1, 1]} : vector<4x32xf32> to vector<1x32xf32>
    %28 = vector.broadcast %26 : vector<32x1xf32> to vector<32x32xf32>
    %29 = vector.broadcast %27 : vector<1x32xf32> to vector<32x32xf32>
    %30 = arith.addf %28, %29 : vector<32x32xf32>
    %31 = tpu.concatenate %15, %20, %25, %30 in 1 : vector<32x32xf32>, vector<32x32xf32>, vector<32x32xf32>, vector<32x32xf32> -> vector<32x128xf32>
    %cst_14 = arith.constant 0.000000e+00 : f32
    %32 = vector.broadcast %cst_14 : f32 to vector<32x128xf32>
    %33 = arith.cmpf ogt, %31, %32 : vector<32x128xf32>
    %cst_15 = arith.constant 2.000000e-01 : f32
    %34 = vector.broadcast %cst_15 : f32 to vector<32x128xf32>
    %35 = arith.mulf %34, %31 : vector<32x128xf32>
    %36 = arith.select %33, %31, %35 : vector<32x128xi1>, vector<32x128xf32>
    %c0_16 = arith.constant 0 : index
    %c0_17 = arith.constant 0 : index
    %c0_18 = arith.constant 0 : index
    %37 = vector.load %arg7[%c0_16, %c0_17, %c0_18] : memref<4x32x128xf32, #tpu.memory_space<vmem>>, vector<1x32x128xf32>
    %38 = vector.shape_cast %37 : vector<1x32x128xf32> to vector<32x128xf32>
    %39 = arith.addf %36, %38 : vector<32x128xf32>
    %40 = vector.extract_strided_slice %39 {offsets = [0, 0], sizes = [32, 32], strides = [1, 1]} : vector<32x128xf32> to vector<32x32xf32>
    %cst_19 = arith.constant dense<0xFF800000> : vector<32xf32>
    %41 = vector.multi_reduction <maximumf>, %40, %cst_19 [1] : vector<32x32xf32> to vector<32xf32>
    %42 = vector.shape_cast %41 : vector<32xf32> to vector<32x1xf32>
    %43 = vector.shape_cast %42 : vector<32x1xf32> to vector<32x1xf32>
    %44 = vector.broadcast %43 : vector<32x1xf32> to vector<32x32xf32>
    %45 = vector.extract_strided_slice %39 {offsets = [0, 32], sizes = [32, 32], strides = [1, 1]} : vector<32x128xf32> to vector<32x32xf32>
    %cst_20 = arith.constant dense<0xFF800000> : vector<32xf32>
    %46 = vector.multi_reduction <maximumf>, %45, %cst_20 [1] : vector<32x32xf32> to vector<32xf32>
    %47 = vector.shape_cast %46 : vector<32xf32> to vector<32x1xf32>
    %48 = vector.shape_cast %47 : vector<32x1xf32> to vector<32x1xf32>
    %49 = vector.broadcast %48 : vector<32x1xf32> to vector<32x32xf32>
    %50 = vector.extract_strided_slice %39 {offsets = [0, 64], sizes = [32, 32], strides = [1, 1]} : vector<32x128xf32> to vector<32x32xf32>
    %cst_21 = arith.constant dense<0xFF800000> : vector<32xf32>
    %51 = vector.multi_reduction <maximumf>, %50, %cst_21 [1] : vector<32x32xf32> to vector<32xf32>
    %52 = vector.shape_cast %51 : vector<32xf32> to vector<32x1xf32>
    %53 = vector.shape_cast %52 : vector<32x1xf32> to vector<32x1xf32>
    %54 = vector.broadcast %53 : vector<32x1xf32> to vector<32x32xf32>
    %55 = vector.extract_strided_slice %39 {offsets = [0, 96], sizes = [32, 32], strides = [1, 1]} : vector<32x128xf32> to vector<32x32xf32>
    %cst_22 = arith.constant dense<0xFF800000> : vector<32xf32>
    %56 = vector.multi_reduction <maximumf>, %55, %cst_22 [1] : vector<32x32xf32> to vector<32xf32>
    %57 = vector.shape_cast %56 : vector<32xf32> to vector<32x1xf32>
    %58 = vector.shape_cast %57 : vector<32x1xf32> to vector<32x1xf32>
    %59 = vector.broadcast %58 : vector<32x1xf32> to vector<32x32xf32>
    %60 = tpu.concatenate %44, %49, %54, %59 in 1 : vector<32x32xf32>, vector<32x32xf32>, vector<32x32xf32>, vector<32x32xf32> -> vector<32x128xf32>
    %61 = arith.subf %39, %60 : vector<32x128xf32>
    %62 = math.exp %61 : vector<32x128xf32>
    %cst_23 = arith.constant dense<0.000000e+00> : vector<32x4xf32>
    %63 = tpu.matmul %62, %1, %cst_23 {dimension_numbers = #tpu.dot_dimension_numbers<[1], [0], [0], [1], [0, 0, 1, 1], [], []>} : vector<32x128xf32>, vector<128x4xf32>, vector<32x4xf32> -> vector<32x4xf32>
    %64 = tpu.reciprocal %63 {approx = true} : vector<32x4xf32> -> vector<32x4xf32>
    %65 = vector.extract_strided_slice %64 {offsets = [0, 0], sizes = [32, 1], strides = [1, 1]} : vector<32x4xf32> to vector<32x1xf32>
    %66 = vector.shape_cast %65 : vector<32x1xf32> to vector<32x1xf32>
    %67 = vector.broadcast %66 : vector<32x1xf32> to vector<32x32xf32>
    %68 = vector.extract_strided_slice %64 {offsets = [0, 1], sizes = [32, 1], strides = [1, 1]} : vector<32x4xf32> to vector<32x1xf32>
    %69 = vector.shape_cast %68 : vector<32x1xf32> to vector<32x1xf32>
    %70 = vector.broadcast %69 : vector<32x1xf32> to vector<32x32xf32>
    %71 = vector.extract_strided_slice %64 {offsets = [0, 2], sizes = [32, 1], strides = [1, 1]} : vector<32x4xf32> to vector<32x1xf32>
    %72 = vector.shape_cast %71 : vector<32x1xf32> to vector<32x1xf32>
    %73 = vector.broadcast %72 : vector<32x1xf32> to vector<32x32xf32>
    %74 = vector.extract_strided_slice %64 {offsets = [0, 3], sizes = [32, 1], strides = [1, 1]} : vector<32x4xf32> to vector<32x1xf32>
    %75 = vector.shape_cast %74 : vector<32x1xf32> to vector<32x1xf32>
    %76 = vector.broadcast %75 : vector<32x1xf32> to vector<32x32xf32>
    %77 = tpu.concatenate %67, %70, %73, %76 in 1 : vector<32x32xf32>, vector<32x32xf32>, vector<32x32xf32>, vector<32x32xf32> -> vector<32x128xf32>
    %78 = arith.mulf %62, %77 : vector<32x128xf32>
    %79 = vector.extract_strided_slice %78 {offsets = [0, 0], sizes = [32, 32], strides = [1, 1]} : vector<32x128xf32> to vector<32x32xf32>
    %80 = vector.extract_strided_slice %4 {offsets = [0, 0], sizes = [32, 16], strides = [1, 1]} : vector<32x64xf32> to vector<32x16xf32>
    %cst_24 = arith.constant dense<0.000000e+00> : vector<32x16xf32>
    %81 = tpu.matmul %79, %80, %cst_24 {dimension_numbers = #tpu.dot_dimension_numbers<[1], [0], [0], [1], [0, 0, 1, 1], [], []>} : vector<32x32xf32>, vector<32x16xf32>, vector<32x16xf32> -> vector<32x16xf32>
    %82 = vector.extract_strided_slice %78 {offsets = [0, 32], sizes = [32, 32], strides = [1, 1]} : vector<32x128xf32> to vector<32x32xf32>
    %83 = vector.extract_strided_slice %4 {offsets = [0, 16], sizes = [32, 16], strides = [1, 1]} : vector<32x64xf32> to vector<32x16xf32>
    %cst_25 = arith.constant dense<0.000000e+00> : vector<32x16xf32>
    %84 = tpu.matmul %82, %83, %cst_25 {dimension_numbers = #tpu.dot_dimension_numbers<[1], [0], [0], [1], [0, 0, 1, 1], [], []>} : vector<32x32xf32>, vector<32x16xf32>, vector<32x16xf32> -> vector<32x16xf32>
    %85 = vector.extract_strided_slice %78 {offsets = [0, 64], sizes = [32, 32], strides = [1, 1]} : vector<32x128xf32> to vector<32x32xf32>
    %86 = vector.extract_strided_slice %4 {offsets = [0, 32], sizes = [32, 16], strides = [1, 1]} : vector<32x64xf32> to vector<32x16xf32>
    %cst_26 = arith.constant dense<0.000000e+00> : vector<32x16xf32>
    %87 = tpu.matmul %85, %86, %cst_26 {dimension_numbers = #tpu.dot_dimension_numbers<[1], [0], [0], [1], [0, 0, 1, 1], [], []>} : vector<32x32xf32>, vector<32x16xf32>, vector<32x16xf32> -> vector<32x16xf32>
    %88 = vector.extract_strided_slice %78 {offsets = [0, 96], sizes = [32, 32], strides = [1, 1]} : vector<32x128xf32> to vector<32x32xf32>
    %89 = vector.extract_strided_slice %4 {offsets = [0, 48], sizes = [32, 16], strides = [1, 1]} : vector<32x64xf32> to vector<32x16xf32>
    %cst_27 = arith.constant dense<0.000000e+00> : vector<32x16xf32>
    %90 = tpu.matmul %88, %89, %cst_27 {dimension_numbers = #tpu.dot_dimension_numbers<[1], [0], [0], [1], [0, 0, 1, 1], [], []>} : vector<32x32xf32>, vector<32x16xf32>, vector<32x16xf32> -> vector<32x16xf32>
    %91 = tpu.concatenate %81, %84, %87, %90 in 1 : vector<32x16xf32>, vector<32x16xf32>, vector<32x16xf32>, vector<32x16xf32> -> vector<32x64xf32>
    %c0_28 = arith.constant 0 : index
    %c0_29 = arith.constant 0 : index
    %c0_30 = arith.constant 0 : index
    %92 = vector.load %arg4[%c0_28, %c0_29, %c0_30] : memref<4x1x64xf32, #tpu.memory_space<vmem>>, vector<1x1x64xf32>
    %93 = vector.shape_cast %92 : vector<1x1x64xf32> to vector<1x64xf32>
    %94 = vector.broadcast %93 : vector<1x64xf32> to vector<32x64xf32>
    %95 = arith.addf %91, %94 : vector<32x64xf32>
    %cst_31 = arith.constant dense<0.000000e+00> : vector<64xf32>
    %96 = vector.multi_reduction <add>, %95, %cst_31 [0] : vector<32x64xf32> to vector<64xf32>
    %97 = vector.shape_cast %96 : vector<64xf32> to vector<1x64xf32>
    %cst_32 = arith.constant 3.200000e+01 : f32
    %98 = vector.broadcast %cst_32 : f32 to vector<1x64xf32>
    %99 = arith.divf %97, %98 : vector<1x64xf32>
    %100 = vector.broadcast %99 : vector<1x64xf32> to vector<32x64xf32>
    %101 = arith.subf %95, %100 : vector<32x64xf32>
    %102 = arith.mulf %101, %101 : vector<32x64xf32>
    %cst_33 = arith.constant dense<0.000000e+00> : vector<64xf32>
    %103 = vector.multi_reduction <add>, %102, %cst_33 [0] : vector<32x64xf32> to vector<64xf32>
    %104 = vector.shape_cast %103 : vector<64xf32> to vector<1x64xf32>
    %cst_34 = arith.constant 3.200000e+01 : f32
    %105 = vector.broadcast %cst_34 : f32 to vector<1x64xf32>
    %106 = arith.divf %104, %105 : vector<1x64xf32>
    %107 = vector.broadcast %99 : vector<1x64xf32> to vector<32x64xf32>
    %108 = arith.subf %95, %107 : vector<32x64xf32>
    %cst_35 = arith.constant 9.99999974E-6 : f32
    %109 = vector.broadcast %cst_35 : f32 to vector<1x64xf32>
    %110 = arith.addf %106, %109 : vector<1x64xf32>
    %111 = math.rsqrt %110 : vector<1x64xf32>
    %112 = vector.broadcast %111 : vector<1x64xf32> to vector<32x64xf32>
    %113 = arith.mulf %108, %112 : vector<32x64xf32>
    %c0_36 = arith.constant 0 : index
    %c0_37 = arith.constant 0 : index
    %c0_38 = arith.constant 0 : index
    %114 = vector.load %arg5[%c0_36, %c0_37, %c0_38] : memref<4x1x64xf32, #tpu.memory_space<vmem>>, vector<1x1x64xf32>
    %115 = vector.shape_cast %114 : vector<1x1x64xf32> to vector<1x64xf32>
    %116 = vector.broadcast %115 : vector<1x64xf32> to vector<32x64xf32>
    %117 = arith.mulf %113, %116 : vector<32x64xf32>
    %c0_39 = arith.constant 0 : index
    %c0_40 = arith.constant 0 : index
    %c0_41 = arith.constant 0 : index
    %118 = vector.load %arg6[%c0_39, %c0_40, %c0_41] : memref<4x1x64xf32, #tpu.memory_space<vmem>>, vector<1x1x64xf32>
    %119 = vector.shape_cast %118 : vector<1x1x64xf32> to vector<1x64xf32>
    %120 = vector.broadcast %119 : vector<1x64xf32> to vector<32x64xf32>
    %121 = arith.addf %117, %120 : vector<32x64xf32>
    %cst_42 = arith.constant 0.000000e+00 : f32
    %122 = vector.broadcast %cst_42 : f32 to vector<32x64xf32>
    %123 = arith.maximumf %121, %122 : vector<32x64xf32>
    %c1 = arith.constant 1 : index
    %c0_43 = arith.constant 0 : index
    %c0_44 = arith.constant 0 : index
    %124 = vector.load %arg1[%c1, %c0_43, %c0_44] : memref<4x64x64xf32, #tpu.memory_space<vmem>>, vector<1x64x64xf32>
    %125 = vector.shape_cast %124 : vector<1x64x64xf32> to vector<64x64xf32>
    %cst_45 = arith.constant dense<0.000000e+00> : vector<32x64xf32>
    %126 = tpu.matmul %123, %125, %cst_45 {dimension_numbers = #tpu.dot_dimension_numbers<[1], [0], [0], [1], [0, 0, 1, 1], [], []>} : vector<32x64xf32>, vector<64x64xf32>, vector<32x64xf32> -> vector<32x64xf32>
    %c1_46 = arith.constant 1 : index
    %c0_47 = arith.constant 0 : index
    %c0_48 = arith.constant 0 : index
    %127 = vector.load %arg2[%c1_46, %c0_47, %c0_48] : memref<4x64x4xf32, #tpu.memory_space<vmem>>, vector<1x64x4xf32>
    %128 = vector.shape_cast %127 : vector<1x64x4xf32> to vector<64x4xf32>
    %cst_49 = arith.constant dense<0.000000e+00> : vector<32x4xf32>
    %129 = tpu.matmul %126, %128, %cst_49 {dimension_numbers = #tpu.dot_dimension_numbers<[1], [0], [0], [1], [0, 0, 1, 1], [], []>} : vector<32x64xf32>, vector<64x4xf32>, vector<32x4xf32> -> vector<32x4xf32>
    %c1_50 = arith.constant 1 : index
    %c0_51 = arith.constant 0 : index
    %c0_52 = arith.constant 0 : index
    %130 = vector.load %arg3[%c1_50, %c0_51, %c0_52] : memref<4x4x64xf32, #tpu.memory_space<vmem>>, vector<1x4x64xf32>
    %131 = vector.shape_cast %130 : vector<1x4x64xf32> to vector<4x64xf32>
    %cst_53 = arith.constant dense<0.000000e+00> : vector<4x32xf32>
    %132 = tpu.matmul %131, %126, %cst_53 {dimension_numbers = #tpu.dot_dimension_numbers<[1], [1], [0], [0], [0, 0, 1, 0], [], []>} : vector<4x64xf32>, vector<32x64xf32>, vector<4x32xf32> -> vector<4x32xf32>
    %133 = vector.extract_strided_slice %129 {offsets = [0, 0], sizes = [32, 1], strides = [1, 1]} : vector<32x4xf32> to vector<32x1xf32>
    %134 = vector.extract_strided_slice %132 {offsets = [0, 0], sizes = [1, 32], strides = [1, 1]} : vector<4x32xf32> to vector<1x32xf32>
    %135 = vector.broadcast %133 : vector<32x1xf32> to vector<32x32xf32>
    %136 = vector.broadcast %134 : vector<1x32xf32> to vector<32x32xf32>
    %137 = arith.addf %135, %136 : vector<32x32xf32>
    %138 = vector.extract_strided_slice %129 {offsets = [0, 1], sizes = [32, 1], strides = [1, 1]} : vector<32x4xf32> to vector<32x1xf32>
    %139 = vector.extract_strided_slice %132 {offsets = [1, 0], sizes = [1, 32], strides = [1, 1]} : vector<4x32xf32> to vector<1x32xf32>
    %140 = vector.broadcast %138 : vector<32x1xf32> to vector<32x32xf32>
    %141 = vector.broadcast %139 : vector<1x32xf32> to vector<32x32xf32>
    %142 = arith.addf %140, %141 : vector<32x32xf32>
    %143 = vector.extract_strided_slice %129 {offsets = [0, 2], sizes = [32, 1], strides = [1, 1]} : vector<32x4xf32> to vector<32x1xf32>
    %144 = vector.extract_strided_slice %132 {offsets = [2, 0], sizes = [1, 32], strides = [1, 1]} : vector<4x32xf32> to vector<1x32xf32>
    %145 = vector.broadcast %143 : vector<32x1xf32> to vector<32x32xf32>
    %146 = vector.broadcast %144 : vector<1x32xf32> to vector<32x32xf32>
    %147 = arith.addf %145, %146 : vector<32x32xf32>
    %148 = vector.extract_strided_slice %129 {offsets = [0, 3], sizes = [32, 1], strides = [1, 1]} : vector<32x4xf32> to vector<32x1xf32>
    %149 = vector.extract_strided_slice %132 {offsets = [3, 0], sizes = [1, 32], strides = [1, 1]} : vector<4x32xf32> to vector<1x32xf32>
    %150 = vector.broadcast %148 : vector<32x1xf32> to vector<32x32xf32>
    %151 = vector.broadcast %149 : vector<1x32xf32> to vector<32x32xf32>
    %152 = arith.addf %150, %151 : vector<32x32xf32>
    %153 = tpu.concatenate %137, %142, %147, %152 in 1 : vector<32x32xf32>, vector<32x32xf32>, vector<32x32xf32>, vector<32x32xf32> -> vector<32x128xf32>
    %cst_54 = arith.constant 0.000000e+00 : f32
    %154 = vector.broadcast %cst_54 : f32 to vector<32x128xf32>
    %155 = arith.cmpf ogt, %153, %154 : vector<32x128xf32>
    %cst_55 = arith.constant 2.000000e-01 : f32
    %156 = vector.broadcast %cst_55 : f32 to vector<32x128xf32>
    %157 = arith.mulf %156, %153 : vector<32x128xf32>
    %158 = arith.select %155, %153, %157 : vector<32x128xi1>, vector<32x128xf32>
    %c1_56 = arith.constant 1 : index
    %c0_57 = arith.constant 0 : index
    %c0_58 = arith.constant 0 : index
    %159 = vector.load %arg7[%c1_56, %c0_57, %c0_58] : memref<4x32x128xf32, #tpu.memory_space<vmem>>, vector<1x32x128xf32>
    %160 = vector.shape_cast %159 : vector<1x32x128xf32> to vector<32x128xf32>
    %161 = arith.addf %158, %160 : vector<32x128xf32>
    %162 = vector.extract_strided_slice %161 {offsets = [0, 0], sizes = [32, 32], strides = [1, 1]} : vector<32x128xf32> to vector<32x32xf32>
    %cst_59 = arith.constant dense<0xFF800000> : vector<32xf32>
    %163 = vector.multi_reduction <maximumf>, %162, %cst_59 [1] : vector<32x32xf32> to vector<32xf32>
    %164 = vector.shape_cast %163 : vector<32xf32> to vector<32x1xf32>
    %165 = vector.shape_cast %164 : vector<32x1xf32> to vector<32x1xf32>
    %166 = vector.broadcast %165 : vector<32x1xf32> to vector<32x32xf32>
    %167 = vector.extract_strided_slice %161 {offsets = [0, 32], sizes = [32, 32], strides = [1, 1]} : vector<32x128xf32> to vector<32x32xf32>
    %cst_60 = arith.constant dense<0xFF800000> : vector<32xf32>
    %168 = vector.multi_reduction <maximumf>, %167, %cst_60 [1] : vector<32x32xf32> to vector<32xf32>
    %169 = vector.shape_cast %168 : vector<32xf32> to vector<32x1xf32>
    %170 = vector.shape_cast %169 : vector<32x1xf32> to vector<32x1xf32>
    %171 = vector.broadcast %170 : vector<32x1xf32> to vector<32x32xf32>
    %172 = vector.extract_strided_slice %161 {offsets = [0, 64], sizes = [32, 32], strides = [1, 1]} : vector<32x128xf32> to vector<32x32xf32>
    %cst_61 = arith.constant dense<0xFF800000> : vector<32xf32>
    %173 = vector.multi_reduction <maximumf>, %172, %cst_61 [1] : vector<32x32xf32> to vector<32xf32>
    %174 = vector.shape_cast %173 : vector<32xf32> to vector<32x1xf32>
    %175 = vector.shape_cast %174 : vector<32x1xf32> to vector<32x1xf32>
    %176 = vector.broadcast %175 : vector<32x1xf32> to vector<32x32xf32>
    %177 = vector.extract_strided_slice %161 {offsets = [0, 96], sizes = [32, 32], strides = [1, 1]} : vector<32x128xf32> to vector<32x32xf32>
    %cst_62 = arith.constant dense<0xFF800000> : vector<32xf32>
    %178 = vector.multi_reduction <maximumf>, %177, %cst_62 [1] : vector<32x32xf32> to vector<32xf32>
    %179 = vector.shape_cast %178 : vector<32xf32> to vector<32x1xf32>
    %180 = vector.shape_cast %179 : vector<32x1xf32> to vector<32x1xf32>
    %181 = vector.broadcast %180 : vector<32x1xf32> to vector<32x32xf32>
    %182 = tpu.concatenate %166, %171, %176, %181 in 1 : vector<32x32xf32>, vector<32x32xf32>, vector<32x32xf32>, vector<32x32xf32> -> vector<32x128xf32>
    %183 = arith.subf %161, %182 : vector<32x128xf32>
    %184 = math.exp %183 : vector<32x128xf32>
    %cst_63 = arith.constant dense<0.000000e+00> : vector<32x4xf32>
    %185 = tpu.matmul %184, %1, %cst_63 {dimension_numbers = #tpu.dot_dimension_numbers<[1], [0], [0], [1], [0, 0, 1, 1], [], []>} : vector<32x128xf32>, vector<128x4xf32>, vector<32x4xf32> -> vector<32x4xf32>
    %186 = tpu.reciprocal %185 {approx = true} : vector<32x4xf32> -> vector<32x4xf32>
    %187 = vector.extract_strided_slice %186 {offsets = [0, 0], sizes = [32, 1], strides = [1, 1]} : vector<32x4xf32> to vector<32x1xf32>
    %188 = vector.shape_cast %187 : vector<32x1xf32> to vector<32x1xf32>
    %189 = vector.broadcast %188 : vector<32x1xf32> to vector<32x32xf32>
    %190 = vector.extract_strided_slice %186 {offsets = [0, 1], sizes = [32, 1], strides = [1, 1]} : vector<32x4xf32> to vector<32x1xf32>
    %191 = vector.shape_cast %190 : vector<32x1xf32> to vector<32x1xf32>
    %192 = vector.broadcast %191 : vector<32x1xf32> to vector<32x32xf32>
    %193 = vector.extract_strided_slice %186 {offsets = [0, 2], sizes = [32, 1], strides = [1, 1]} : vector<32x4xf32> to vector<32x1xf32>
    %194 = vector.shape_cast %193 : vector<32x1xf32> to vector<32x1xf32>
    %195 = vector.broadcast %194 : vector<32x1xf32> to vector<32x32xf32>
    %196 = vector.extract_strided_slice %186 {offsets = [0, 3], sizes = [32, 1], strides = [1, 1]} : vector<32x4xf32> to vector<32x1xf32>
    %197 = vector.shape_cast %196 : vector<32x1xf32> to vector<32x1xf32>
    %198 = vector.broadcast %197 : vector<32x1xf32> to vector<32x32xf32>
    %199 = tpu.concatenate %189, %192, %195, %198 in 1 : vector<32x32xf32>, vector<32x32xf32>, vector<32x32xf32>, vector<32x32xf32> -> vector<32x128xf32>
    %200 = arith.mulf %184, %199 : vector<32x128xf32>
    %201 = vector.extract_strided_slice %200 {offsets = [0, 0], sizes = [32, 32], strides = [1, 1]} : vector<32x128xf32> to vector<32x32xf32>
    %202 = vector.extract_strided_slice %126 {offsets = [0, 0], sizes = [32, 16], strides = [1, 1]} : vector<32x64xf32> to vector<32x16xf32>
    %cst_64 = arith.constant dense<0.000000e+00> : vector<32x16xf32>
    %203 = tpu.matmul %201, %202, %cst_64 {dimension_numbers = #tpu.dot_dimension_numbers<[1], [0], [0], [1], [0, 0, 1, 1], [], []>} : vector<32x32xf32>, vector<32x16xf32>, vector<32x16xf32> -> vector<32x16xf32>
    %204 = vector.extract_strided_slice %200 {offsets = [0, 32], sizes = [32, 32], strides = [1, 1]} : vector<32x128xf32> to vector<32x32xf32>
    %205 = vector.extract_strided_slice %126 {offsets = [0, 16], sizes = [32, 16], strides = [1, 1]} : vector<32x64xf32> to vector<32x16xf32>
    %cst_65 = arith.constant dense<0.000000e+00> : vector<32x16xf32>
    %206 = tpu.matmul %204, %205, %cst_65 {dimension_numbers = #tpu.dot_dimension_numbers<[1], [0], [0], [1], [0, 0, 1, 1], [], []>} : vector<32x32xf32>, vector<32x16xf32>, vector<32x16xf32> -> vector<32x16xf32>
    %207 = vector.extract_strided_slice %200 {offsets = [0, 64], sizes = [32, 32], strides = [1, 1]} : vector<32x128xf32> to vector<32x32xf32>
    %208 = vector.extract_strided_slice %126 {offsets = [0, 32], sizes = [32, 16], strides = [1, 1]} : vector<32x64xf32> to vector<32x16xf32>
    %cst_66 = arith.constant dense<0.000000e+00> : vector<32x16xf32>
    %209 = tpu.matmul %207, %208, %cst_66 {dimension_numbers = #tpu.dot_dimension_numbers<[1], [0], [0], [1], [0, 0, 1, 1], [], []>} : vector<32x32xf32>, vector<32x16xf32>, vector<32x16xf32> -> vector<32x16xf32>
    %210 = vector.extract_strided_slice %200 {offsets = [0, 96], sizes = [32, 32], strides = [1, 1]} : vector<32x128xf32> to vector<32x32xf32>
    %211 = vector.extract_strided_slice %126 {offsets = [0, 48], sizes = [32, 16], strides = [1, 1]} : vector<32x64xf32> to vector<32x16xf32>
    %cst_67 = arith.constant dense<0.000000e+00> : vector<32x16xf32>
    %212 = tpu.matmul %210, %211, %cst_67 {dimension_numbers = #tpu.dot_dimension_numbers<[1], [0], [0], [1], [0, 0, 1, 1], [], []>} : vector<32x32xf32>, vector<32x16xf32>, vector<32x16xf32> -> vector<32x16xf32>
    %213 = tpu.concatenate %203, %206, %209, %212 in 1 : vector<32x16xf32>, vector<32x16xf32>, vector<32x16xf32>, vector<32x16xf32> -> vector<32x64xf32>
    %c1_68 = arith.constant 1 : index
    %c0_69 = arith.constant 0 : index
    %c0_70 = arith.constant 0 : index
    %214 = vector.load %arg4[%c1_68, %c0_69, %c0_70] : memref<4x1x64xf32, #tpu.memory_space<vmem>>, vector<1x1x64xf32>
    %215 = vector.shape_cast %214 : vector<1x1x64xf32> to vector<1x64xf32>
    %216 = vector.broadcast %215 : vector<1x64xf32> to vector<32x64xf32>
    %217 = arith.addf %213, %216 : vector<32x64xf32>
    %cst_71 = arith.constant dense<0.000000e+00> : vector<64xf32>
    %218 = vector.multi_reduction <add>, %217, %cst_71 [0] : vector<32x64xf32> to vector<64xf32>
    %219 = vector.shape_cast %218 : vector<64xf32> to vector<1x64xf32>
    %cst_72 = arith.constant 3.200000e+01 : f32
    %220 = vector.broadcast %cst_72 : f32 to vector<1x64xf32>
    %221 = arith.divf %219, %220 : vector<1x64xf32>
    %222 = vector.broadcast %221 : vector<1x64xf32> to vector<32x64xf32>
    %223 = arith.subf %217, %222 : vector<32x64xf32>
    %224 = arith.mulf %223, %223 : vector<32x64xf32>
    %cst_73 = arith.constant dense<0.000000e+00> : vector<64xf32>
    %225 = vector.multi_reduction <add>, %224, %cst_73 [0] : vector<32x64xf32> to vector<64xf32>
    %226 = vector.shape_cast %225 : vector<64xf32> to vector<1x64xf32>
    %cst_74 = arith.constant 3.200000e+01 : f32
    %227 = vector.broadcast %cst_74 : f32 to vector<1x64xf32>
    %228 = arith.divf %226, %227 : vector<1x64xf32>
    %229 = vector.broadcast %221 : vector<1x64xf32> to vector<32x64xf32>
    %230 = arith.subf %217, %229 : vector<32x64xf32>
    %cst_75 = arith.constant 9.99999974E-6 : f32
    %231 = vector.broadcast %cst_75 : f32 to vector<1x64xf32>
    %232 = arith.addf %228, %231 : vector<1x64xf32>
    %233 = math.rsqrt %232 : vector<1x64xf32>
    %234 = vector.broadcast %233 : vector<1x64xf32> to vector<32x64xf32>
    %235 = arith.mulf %230, %234 : vector<32x64xf32>
    %c1_76 = arith.constant 1 : index
    %c0_77 = arith.constant 0 : index
    %c0_78 = arith.constant 0 : index
    %236 = vector.load %arg5[%c1_76, %c0_77, %c0_78] : memref<4x1x64xf32, #tpu.memory_space<vmem>>, vector<1x1x64xf32>
    %237 = vector.shape_cast %236 : vector<1x1x64xf32> to vector<1x64xf32>
    %238 = vector.broadcast %237 : vector<1x64xf32> to vector<32x64xf32>
    %239 = arith.mulf %235, %238 : vector<32x64xf32>
    %c1_79 = arith.constant 1 : index
    %c0_80 = arith.constant 0 : index
    %c0_81 = arith.constant 0 : index
    %240 = vector.load %arg6[%c1_79, %c0_80, %c0_81] : memref<4x1x64xf32, #tpu.memory_space<vmem>>, vector<1x1x64xf32>
    %241 = vector.shape_cast %240 : vector<1x1x64xf32> to vector<1x64xf32>
    %242 = vector.broadcast %241 : vector<1x64xf32> to vector<32x64xf32>
    %243 = arith.addf %239, %242 : vector<32x64xf32>
    %cst_82 = arith.constant 0.000000e+00 : f32
    %244 = vector.broadcast %cst_82 : f32 to vector<32x64xf32>
    %245 = arith.maximumf %243, %244 : vector<32x64xf32>
    %c2 = arith.constant 2 : index
    %c0_83 = arith.constant 0 : index
    %c0_84 = arith.constant 0 : index
    %246 = vector.load %arg1[%c2, %c0_83, %c0_84] : memref<4x64x64xf32, #tpu.memory_space<vmem>>, vector<1x64x64xf32>
    %247 = vector.shape_cast %246 : vector<1x64x64xf32> to vector<64x64xf32>
    %cst_85 = arith.constant dense<0.000000e+00> : vector<32x64xf32>
    %248 = tpu.matmul %245, %247, %cst_85 {dimension_numbers = #tpu.dot_dimension_numbers<[1], [0], [0], [1], [0, 0, 1, 1], [], []>} : vector<32x64xf32>, vector<64x64xf32>, vector<32x64xf32> -> vector<32x64xf32>
    %c2_86 = arith.constant 2 : index
    %c0_87 = arith.constant 0 : index
    %c0_88 = arith.constant 0 : index
    %249 = vector.load %arg2[%c2_86, %c0_87, %c0_88] : memref<4x64x4xf32, #tpu.memory_space<vmem>>, vector<1x64x4xf32>
    %250 = vector.shape_cast %249 : vector<1x64x4xf32> to vector<64x4xf32>
    %cst_89 = arith.constant dense<0.000000e+00> : vector<32x4xf32>
    %251 = tpu.matmul %248, %250, %cst_89 {dimension_numbers = #tpu.dot_dimension_numbers<[1], [0], [0], [1], [0, 0, 1, 1], [], []>} : vector<32x64xf32>, vector<64x4xf32>, vector<32x4xf32> -> vector<32x4xf32>
    %c2_90 = arith.constant 2 : index
    %c0_91 = arith.constant 0 : index
    %c0_92 = arith.constant 0 : index
    %252 = vector.load %arg3[%c2_90, %c0_91, %c0_92] : memref<4x4x64xf32, #tpu.memory_space<vmem>>, vector<1x4x64xf32>
    %253 = vector.shape_cast %252 : vector<1x4x64xf32> to vector<4x64xf32>
    %cst_93 = arith.constant dense<0.000000e+00> : vector<4x32xf32>
    %254 = tpu.matmul %253, %248, %cst_93 {dimension_numbers = #tpu.dot_dimension_numbers<[1], [1], [0], [0], [0, 0, 1, 0], [], []>} : vector<4x64xf32>, vector<32x64xf32>, vector<4x32xf32> -> vector<4x32xf32>
    %255 = vector.extract_strided_slice %251 {offsets = [0, 0], sizes = [32, 1], strides = [1, 1]} : vector<32x4xf32> to vector<32x1xf32>
    %256 = vector.extract_strided_slice %254 {offsets = [0, 0], sizes = [1, 32], strides = [1, 1]} : vector<4x32xf32> to vector<1x32xf32>
    %257 = vector.broadcast %255 : vector<32x1xf32> to vector<32x32xf32>
    %258 = vector.broadcast %256 : vector<1x32xf32> to vector<32x32xf32>
    %259 = arith.addf %257, %258 : vector<32x32xf32>
    %260 = vector.extract_strided_slice %251 {offsets = [0, 1], sizes = [32, 1], strides = [1, 1]} : vector<32x4xf32> to vector<32x1xf32>
    %261 = vector.extract_strided_slice %254 {offsets = [1, 0], sizes = [1, 32], strides = [1, 1]} : vector<4x32xf32> to vector<1x32xf32>
    %262 = vector.broadcast %260 : vector<32x1xf32> to vector<32x32xf32>
    %263 = vector.broadcast %261 : vector<1x32xf32> to vector<32x32xf32>
    %264 = arith.addf %262, %263 : vector<32x32xf32>
    %265 = vector.extract_strided_slice %251 {offsets = [0, 2], sizes = [32, 1], strides = [1, 1]} : vector<32x4xf32> to vector<32x1xf32>
    %266 = vector.extract_strided_slice %254 {offsets = [2, 0], sizes = [1, 32], strides = [1, 1]} : vector<4x32xf32> to vector<1x32xf32>
    %267 = vector.broadcast %265 : vector<32x1xf32> to vector<32x32xf32>
    %268 = vector.broadcast %266 : vector<1x32xf32> to vector<32x32xf32>
    %269 = arith.addf %267, %268 : vector<32x32xf32>
    %270 = vector.extract_strided_slice %251 {offsets = [0, 3], sizes = [32, 1], strides = [1, 1]} : vector<32x4xf32> to vector<32x1xf32>
    %271 = vector.extract_strided_slice %254 {offsets = [3, 0], sizes = [1, 32], strides = [1, 1]} : vector<4x32xf32> to vector<1x32xf32>
    %272 = vector.broadcast %270 : vector<32x1xf32> to vector<32x32xf32>
    %273 = vector.broadcast %271 : vector<1x32xf32> to vector<32x32xf32>
    %274 = arith.addf %272, %273 : vector<32x32xf32>
    %275 = tpu.concatenate %259, %264, %269, %274 in 1 : vector<32x32xf32>, vector<32x32xf32>, vector<32x32xf32>, vector<32x32xf32> -> vector<32x128xf32>
    %cst_94 = arith.constant 0.000000e+00 : f32
    %276 = vector.broadcast %cst_94 : f32 to vector<32x128xf32>
    %277 = arith.cmpf ogt, %275, %276 : vector<32x128xf32>
    %cst_95 = arith.constant 2.000000e-01 : f32
    %278 = vector.broadcast %cst_95 : f32 to vector<32x128xf32>
    %279 = arith.mulf %278, %275 : vector<32x128xf32>
    %280 = arith.select %277, %275, %279 : vector<32x128xi1>, vector<32x128xf32>
    %c2_96 = arith.constant 2 : index
    %c0_97 = arith.constant 0 : index
    %c0_98 = arith.constant 0 : index
    %281 = vector.load %arg7[%c2_96, %c0_97, %c0_98] : memref<4x32x128xf32, #tpu.memory_space<vmem>>, vector<1x32x128xf32>
    %282 = vector.shape_cast %281 : vector<1x32x128xf32> to vector<32x128xf32>
    %283 = arith.addf %280, %282 : vector<32x128xf32>
    %284 = vector.extract_strided_slice %283 {offsets = [0, 0], sizes = [32, 32], strides = [1, 1]} : vector<32x128xf32> to vector<32x32xf32>
    %cst_99 = arith.constant dense<0xFF800000> : vector<32xf32>
    %285 = vector.multi_reduction <maximumf>, %284, %cst_99 [1] : vector<32x32xf32> to vector<32xf32>
    %286 = vector.shape_cast %285 : vector<32xf32> to vector<32x1xf32>
    %287 = vector.shape_cast %286 : vector<32x1xf32> to vector<32x1xf32>
    %288 = vector.broadcast %287 : vector<32x1xf32> to vector<32x32xf32>
    %289 = vector.extract_strided_slice %283 {offsets = [0, 32], sizes = [32, 32], strides = [1, 1]} : vector<32x128xf32> to vector<32x32xf32>
    %cst_100 = arith.constant dense<0xFF800000> : vector<32xf32>
    %290 = vector.multi_reduction <maximumf>, %289, %cst_100 [1] : vector<32x32xf32> to vector<32xf32>
    %291 = vector.shape_cast %290 : vector<32xf32> to vector<32x1xf32>
    %292 = vector.shape_cast %291 : vector<32x1xf32> to vector<32x1xf32>
    %293 = vector.broadcast %292 : vector<32x1xf32> to vector<32x32xf32>
    %294 = vector.extract_strided_slice %283 {offsets = [0, 64], sizes = [32, 32], strides = [1, 1]} : vector<32x128xf32> to vector<32x32xf32>
    %cst_101 = arith.constant dense<0xFF800000> : vector<32xf32>
    %295 = vector.multi_reduction <maximumf>, %294, %cst_101 [1] : vector<32x32xf32> to vector<32xf32>
    %296 = vector.shape_cast %295 : vector<32xf32> to vector<32x1xf32>
    %297 = vector.shape_cast %296 : vector<32x1xf32> to vector<32x1xf32>
    %298 = vector.broadcast %297 : vector<32x1xf32> to vector<32x32xf32>
    %299 = vector.extract_strided_slice %283 {offsets = [0, 96], sizes = [32, 32], strides = [1, 1]} : vector<32x128xf32> to vector<32x32xf32>
    %cst_102 = arith.constant dense<0xFF800000> : vector<32xf32>
    %300 = vector.multi_reduction <maximumf>, %299, %cst_102 [1] : vector<32x32xf32> to vector<32xf32>
    %301 = vector.shape_cast %300 : vector<32xf32> to vector<32x1xf32>
    %302 = vector.shape_cast %301 : vector<32x1xf32> to vector<32x1xf32>
    %303 = vector.broadcast %302 : vector<32x1xf32> to vector<32x32xf32>
    %304 = tpu.concatenate %288, %293, %298, %303 in 1 : vector<32x32xf32>, vector<32x32xf32>, vector<32x32xf32>, vector<32x32xf32> -> vector<32x128xf32>
    %305 = arith.subf %283, %304 : vector<32x128xf32>
    %306 = math.exp %305 : vector<32x128xf32>
    %cst_103 = arith.constant dense<0.000000e+00> : vector<32x4xf32>
    %307 = tpu.matmul %306, %1, %cst_103 {dimension_numbers = #tpu.dot_dimension_numbers<[1], [0], [0], [1], [0, 0, 1, 1], [], []>} : vector<32x128xf32>, vector<128x4xf32>, vector<32x4xf32> -> vector<32x4xf32>
    %308 = tpu.reciprocal %307 {approx = true} : vector<32x4xf32> -> vector<32x4xf32>
    %309 = vector.extract_strided_slice %308 {offsets = [0, 0], sizes = [32, 1], strides = [1, 1]} : vector<32x4xf32> to vector<32x1xf32>
    %310 = vector.shape_cast %309 : vector<32x1xf32> to vector<32x1xf32>
    %311 = vector.broadcast %310 : vector<32x1xf32> to vector<32x32xf32>
    %312 = vector.extract_strided_slice %308 {offsets = [0, 1], sizes = [32, 1], strides = [1, 1]} : vector<32x4xf32> to vector<32x1xf32>
    %313 = vector.shape_cast %312 : vector<32x1xf32> to vector<32x1xf32>
    %314 = vector.broadcast %313 : vector<32x1xf32> to vector<32x32xf32>
    %315 = vector.extract_strided_slice %308 {offsets = [0, 2], sizes = [32, 1], strides = [1, 1]} : vector<32x4xf32> to vector<32x1xf32>
    %316 = vector.shape_cast %315 : vector<32x1xf32> to vector<32x1xf32>
    %317 = vector.broadcast %316 : vector<32x1xf32> to vector<32x32xf32>
    %318 = vector.extract_strided_slice %308 {offsets = [0, 3], sizes = [32, 1], strides = [1, 1]} : vector<32x4xf32> to vector<32x1xf32>
    %319 = vector.shape_cast %318 : vector<32x1xf32> to vector<32x1xf32>
    %320 = vector.broadcast %319 : vector<32x1xf32> to vector<32x32xf32>
    %321 = tpu.concatenate %311, %314, %317, %320 in 1 : vector<32x32xf32>, vector<32x32xf32>, vector<32x32xf32>, vector<32x32xf32> -> vector<32x128xf32>
    %322 = arith.mulf %306, %321 : vector<32x128xf32>
    %323 = vector.extract_strided_slice %322 {offsets = [0, 0], sizes = [32, 32], strides = [1, 1]} : vector<32x128xf32> to vector<32x32xf32>
    %324 = vector.extract_strided_slice %248 {offsets = [0, 0], sizes = [32, 16], strides = [1, 1]} : vector<32x64xf32> to vector<32x16xf32>
    %cst_104 = arith.constant dense<0.000000e+00> : vector<32x16xf32>
    %325 = tpu.matmul %323, %324, %cst_104 {dimension_numbers = #tpu.dot_dimension_numbers<[1], [0], [0], [1], [0, 0, 1, 1], [], []>} : vector<32x32xf32>, vector<32x16xf32>, vector<32x16xf32> -> vector<32x16xf32>
    %326 = vector.extract_strided_slice %322 {offsets = [0, 32], sizes = [32, 32], strides = [1, 1]} : vector<32x128xf32> to vector<32x32xf32>
    %327 = vector.extract_strided_slice %248 {offsets = [0, 16], sizes = [32, 16], strides = [1, 1]} : vector<32x64xf32> to vector<32x16xf32>
    %cst_105 = arith.constant dense<0.000000e+00> : vector<32x16xf32>
    %328 = tpu.matmul %326, %327, %cst_105 {dimension_numbers = #tpu.dot_dimension_numbers<[1], [0], [0], [1], [0, 0, 1, 1], [], []>} : vector<32x32xf32>, vector<32x16xf32>, vector<32x16xf32> -> vector<32x16xf32>
    %329 = vector.extract_strided_slice %322 {offsets = [0, 64], sizes = [32, 32], strides = [1, 1]} : vector<32x128xf32> to vector<32x32xf32>
    %330 = vector.extract_strided_slice %248 {offsets = [0, 32], sizes = [32, 16], strides = [1, 1]} : vector<32x64xf32> to vector<32x16xf32>
    %cst_106 = arith.constant dense<0.000000e+00> : vector<32x16xf32>
    %331 = tpu.matmul %329, %330, %cst_106 {dimension_numbers = #tpu.dot_dimension_numbers<[1], [0], [0], [1], [0, 0, 1, 1], [], []>} : vector<32x32xf32>, vector<32x16xf32>, vector<32x16xf32> -> vector<32x16xf32>
    %332 = vector.extract_strided_slice %322 {offsets = [0, 96], sizes = [32, 32], strides = [1, 1]} : vector<32x128xf32> to vector<32x32xf32>
    %333 = vector.extract_strided_slice %248 {offsets = [0, 48], sizes = [32, 16], strides = [1, 1]} : vector<32x64xf32> to vector<32x16xf32>
    %cst_107 = arith.constant dense<0.000000e+00> : vector<32x16xf32>
    %334 = tpu.matmul %332, %333, %cst_107 {dimension_numbers = #tpu.dot_dimension_numbers<[1], [0], [0], [1], [0, 0, 1, 1], [], []>} : vector<32x32xf32>, vector<32x16xf32>, vector<32x16xf32> -> vector<32x16xf32>
    %335 = tpu.concatenate %325, %328, %331, %334 in 1 : vector<32x16xf32>, vector<32x16xf32>, vector<32x16xf32>, vector<32x16xf32> -> vector<32x64xf32>
    %c2_108 = arith.constant 2 : index
    %c0_109 = arith.constant 0 : index
    %c0_110 = arith.constant 0 : index
    %336 = vector.load %arg4[%c2_108, %c0_109, %c0_110] : memref<4x1x64xf32, #tpu.memory_space<vmem>>, vector<1x1x64xf32>
    %337 = vector.shape_cast %336 : vector<1x1x64xf32> to vector<1x64xf32>
    %338 = vector.broadcast %337 : vector<1x64xf32> to vector<32x64xf32>
    %339 = arith.addf %335, %338 : vector<32x64xf32>
    %cst_111 = arith.constant dense<0.000000e+00> : vector<64xf32>
    %340 = vector.multi_reduction <add>, %339, %cst_111 [0] : vector<32x64xf32> to vector<64xf32>
    %341 = vector.shape_cast %340 : vector<64xf32> to vector<1x64xf32>
    %cst_112 = arith.constant 3.200000e+01 : f32
    %342 = vector.broadcast %cst_112 : f32 to vector<1x64xf32>
    %343 = arith.divf %341, %342 : vector<1x64xf32>
    %344 = vector.broadcast %343 : vector<1x64xf32> to vector<32x64xf32>
    %345 = arith.subf %339, %344 : vector<32x64xf32>
    %346 = arith.mulf %345, %345 : vector<32x64xf32>
    %cst_113 = arith.constant dense<0.000000e+00> : vector<64xf32>
    %347 = vector.multi_reduction <add>, %346, %cst_113 [0] : vector<32x64xf32> to vector<64xf32>
    %348 = vector.shape_cast %347 : vector<64xf32> to vector<1x64xf32>
    %cst_114 = arith.constant 3.200000e+01 : f32
    %349 = vector.broadcast %cst_114 : f32 to vector<1x64xf32>
    %350 = arith.divf %348, %349 : vector<1x64xf32>
    %351 = vector.broadcast %343 : vector<1x64xf32> to vector<32x64xf32>
    %352 = arith.subf %339, %351 : vector<32x64xf32>
    %cst_115 = arith.constant 9.99999974E-6 : f32
    %353 = vector.broadcast %cst_115 : f32 to vector<1x64xf32>
    %354 = arith.addf %350, %353 : vector<1x64xf32>
    %355 = math.rsqrt %354 : vector<1x64xf32>
    %356 = vector.broadcast %355 : vector<1x64xf32> to vector<32x64xf32>
    %357 = arith.mulf %352, %356 : vector<32x64xf32>
    %c2_116 = arith.constant 2 : index
    %c0_117 = arith.constant 0 : index
    %c0_118 = arith.constant 0 : index
    %358 = vector.load %arg5[%c2_116, %c0_117, %c0_118] : memref<4x1x64xf32, #tpu.memory_space<vmem>>, vector<1x1x64xf32>
    %359 = vector.shape_cast %358 : vector<1x1x64xf32> to vector<1x64xf32>
    %360 = vector.broadcast %359 : vector<1x64xf32> to vector<32x64xf32>
    %361 = arith.mulf %357, %360 : vector<32x64xf32>
    %c2_119 = arith.constant 2 : index
    %c0_120 = arith.constant 0 : index
    %c0_121 = arith.constant 0 : index
    %362 = vector.load %arg6[%c2_119, %c0_120, %c0_121] : memref<4x1x64xf32, #tpu.memory_space<vmem>>, vector<1x1x64xf32>
    %363 = vector.shape_cast %362 : vector<1x1x64xf32> to vector<1x64xf32>
    %364 = vector.broadcast %363 : vector<1x64xf32> to vector<32x64xf32>
    %365 = arith.addf %361, %364 : vector<32x64xf32>
    %cst_122 = arith.constant 0.000000e+00 : f32
    %366 = vector.broadcast %cst_122 : f32 to vector<32x64xf32>
    %367 = arith.maximumf %365, %366 : vector<32x64xf32>
    %c3 = arith.constant 3 : index
    %c0_123 = arith.constant 0 : index
    %c0_124 = arith.constant 0 : index
    %368 = vector.load %arg1[%c3, %c0_123, %c0_124] : memref<4x64x64xf32, #tpu.memory_space<vmem>>, vector<1x64x64xf32>
    %369 = vector.shape_cast %368 : vector<1x64x64xf32> to vector<64x64xf32>
    %cst_125 = arith.constant dense<0.000000e+00> : vector<32x64xf32>
    %370 = tpu.matmul %367, %369, %cst_125 {dimension_numbers = #tpu.dot_dimension_numbers<[1], [0], [0], [1], [0, 0, 1, 1], [], []>} : vector<32x64xf32>, vector<64x64xf32>, vector<32x64xf32> -> vector<32x64xf32>
    %c3_126 = arith.constant 3 : index
    %c0_127 = arith.constant 0 : index
    %c0_128 = arith.constant 0 : index
    %371 = vector.load %arg2[%c3_126, %c0_127, %c0_128] : memref<4x64x4xf32, #tpu.memory_space<vmem>>, vector<1x64x4xf32>
    %372 = vector.shape_cast %371 : vector<1x64x4xf32> to vector<64x4xf32>
    %cst_129 = arith.constant dense<0.000000e+00> : vector<32x4xf32>
    %373 = tpu.matmul %370, %372, %cst_129 {dimension_numbers = #tpu.dot_dimension_numbers<[1], [0], [0], [1], [0, 0, 1, 1], [], []>} : vector<32x64xf32>, vector<64x4xf32>, vector<32x4xf32> -> vector<32x4xf32>
    %c3_130 = arith.constant 3 : index
    %c0_131 = arith.constant 0 : index
    %c0_132 = arith.constant 0 : index
    %374 = vector.load %arg3[%c3_130, %c0_131, %c0_132] : memref<4x4x64xf32, #tpu.memory_space<vmem>>, vector<1x4x64xf32>
    %375 = vector.shape_cast %374 : vector<1x4x64xf32> to vector<4x64xf32>
    %cst_133 = arith.constant dense<0.000000e+00> : vector<4x32xf32>
    %376 = tpu.matmul %375, %370, %cst_133 {dimension_numbers = #tpu.dot_dimension_numbers<[1], [1], [0], [0], [0, 0, 1, 0], [], []>} : vector<4x64xf32>, vector<32x64xf32>, vector<4x32xf32> -> vector<4x32xf32>
    %377 = vector.extract_strided_slice %373 {offsets = [0, 0], sizes = [32, 1], strides = [1, 1]} : vector<32x4xf32> to vector<32x1xf32>
    %378 = vector.extract_strided_slice %376 {offsets = [0, 0], sizes = [1, 32], strides = [1, 1]} : vector<4x32xf32> to vector<1x32xf32>
    %379 = vector.broadcast %377 : vector<32x1xf32> to vector<32x32xf32>
    %380 = vector.broadcast %378 : vector<1x32xf32> to vector<32x32xf32>
    %381 = arith.addf %379, %380 : vector<32x32xf32>
    %382 = vector.extract_strided_slice %373 {offsets = [0, 1], sizes = [32, 1], strides = [1, 1]} : vector<32x4xf32> to vector<32x1xf32>
    %383 = vector.extract_strided_slice %376 {offsets = [1, 0], sizes = [1, 32], strides = [1, 1]} : vector<4x32xf32> to vector<1x32xf32>
    %384 = vector.broadcast %382 : vector<32x1xf32> to vector<32x32xf32>
    %385 = vector.broadcast %383 : vector<1x32xf32> to vector<32x32xf32>
    %386 = arith.addf %384, %385 : vector<32x32xf32>
    %387 = vector.extract_strided_slice %373 {offsets = [0, 2], sizes = [32, 1], strides = [1, 1]} : vector<32x4xf32> to vector<32x1xf32>
    %388 = vector.extract_strided_slice %376 {offsets = [2, 0], sizes = [1, 32], strides = [1, 1]} : vector<4x32xf32> to vector<1x32xf32>
    %389 = vector.broadcast %387 : vector<32x1xf32> to vector<32x32xf32>
    %390 = vector.broadcast %388 : vector<1x32xf32> to vector<32x32xf32>
    %391 = arith.addf %389, %390 : vector<32x32xf32>
    %392 = vector.extract_strided_slice %373 {offsets = [0, 3], sizes = [32, 1], strides = [1, 1]} : vector<32x4xf32> to vector<32x1xf32>
    %393 = vector.extract_strided_slice %376 {offsets = [3, 0], sizes = [1, 32], strides = [1, 1]} : vector<4x32xf32> to vector<1x32xf32>
    %394 = vector.broadcast %392 : vector<32x1xf32> to vector<32x32xf32>
    %395 = vector.broadcast %393 : vector<1x32xf32> to vector<32x32xf32>
    %396 = arith.addf %394, %395 : vector<32x32xf32>
    %397 = tpu.concatenate %381, %386, %391, %396 in 1 : vector<32x32xf32>, vector<32x32xf32>, vector<32x32xf32>, vector<32x32xf32> -> vector<32x128xf32>
    %cst_134 = arith.constant 0.000000e+00 : f32
    %398 = vector.broadcast %cst_134 : f32 to vector<32x128xf32>
    %399 = arith.cmpf ogt, %397, %398 : vector<32x128xf32>
    %cst_135 = arith.constant 2.000000e-01 : f32
    %400 = vector.broadcast %cst_135 : f32 to vector<32x128xf32>
    %401 = arith.mulf %400, %397 : vector<32x128xf32>
    %402 = arith.select %399, %397, %401 : vector<32x128xi1>, vector<32x128xf32>
    %c3_136 = arith.constant 3 : index
    %c0_137 = arith.constant 0 : index
    %c0_138 = arith.constant 0 : index
    %403 = vector.load %arg7[%c3_136, %c0_137, %c0_138] : memref<4x32x128xf32, #tpu.memory_space<vmem>>, vector<1x32x128xf32>
    %404 = vector.shape_cast %403 : vector<1x32x128xf32> to vector<32x128xf32>
    %405 = arith.addf %402, %404 : vector<32x128xf32>
    %406 = vector.extract_strided_slice %405 {offsets = [0, 0], sizes = [32, 32], strides = [1, 1]} : vector<32x128xf32> to vector<32x32xf32>
    %cst_139 = arith.constant dense<0xFF800000> : vector<32xf32>
    %407 = vector.multi_reduction <maximumf>, %406, %cst_139 [1] : vector<32x32xf32> to vector<32xf32>
    %408 = vector.shape_cast %407 : vector<32xf32> to vector<32x1xf32>
    %409 = vector.shape_cast %408 : vector<32x1xf32> to vector<32x1xf32>
    %410 = vector.broadcast %409 : vector<32x1xf32> to vector<32x32xf32>
    %411 = vector.extract_strided_slice %405 {offsets = [0, 32], sizes = [32, 32], strides = [1, 1]} : vector<32x128xf32> to vector<32x32xf32>
    %cst_140 = arith.constant dense<0xFF800000> : vector<32xf32>
    %412 = vector.multi_reduction <maximumf>, %411, %cst_140 [1] : vector<32x32xf32> to vector<32xf32>
    %413 = vector.shape_cast %412 : vector<32xf32> to vector<32x1xf32>
    %414 = vector.shape_cast %413 : vector<32x1xf32> to vector<32x1xf32>
    %415 = vector.broadcast %414 : vector<32x1xf32> to vector<32x32xf32>
    %416 = vector.extract_strided_slice %405 {offsets = [0, 64], sizes = [32, 32], strides = [1, 1]} : vector<32x128xf32> to vector<32x32xf32>
    %cst_141 = arith.constant dense<0xFF800000> : vector<32xf32>
    %417 = vector.multi_reduction <maximumf>, %416, %cst_141 [1] : vector<32x32xf32> to vector<32xf32>
    %418 = vector.shape_cast %417 : vector<32xf32> to vector<32x1xf32>
    %419 = vector.shape_cast %418 : vector<32x1xf32> to vector<32x1xf32>
    %420 = vector.broadcast %419 : vector<32x1xf32> to vector<32x32xf32>
    %421 = vector.extract_strided_slice %405 {offsets = [0, 96], sizes = [32, 32], strides = [1, 1]} : vector<32x128xf32> to vector<32x32xf32>
    %cst_142 = arith.constant dense<0xFF800000> : vector<32xf32>
    %422 = vector.multi_reduction <maximumf>, %421, %cst_142 [1] : vector<32x32xf32> to vector<32xf32>
    %423 = vector.shape_cast %422 : vector<32xf32> to vector<32x1xf32>
    %424 = vector.shape_cast %423 : vector<32x1xf32> to vector<32x1xf32>
    %425 = vector.broadcast %424 : vector<32x1xf32> to vector<32x32xf32>
    %426 = tpu.concatenate %410, %415, %420, %425 in 1 : vector<32x32xf32>, vector<32x32xf32>, vector<32x32xf32>, vector<32x32xf32> -> vector<32x128xf32>
    %427 = arith.subf %405, %426 : vector<32x128xf32>
    %428 = math.exp %427 : vector<32x128xf32>
    %cst_143 = arith.constant dense<0.000000e+00> : vector<32x4xf32>
    %429 = tpu.matmul %428, %1, %cst_143 {dimension_numbers = #tpu.dot_dimension_numbers<[1], [0], [0], [1], [0, 0, 1, 1], [], []>} : vector<32x128xf32>, vector<128x4xf32>, vector<32x4xf32> -> vector<32x4xf32>
    %430 = tpu.reciprocal %429 {approx = true} : vector<32x4xf32> -> vector<32x4xf32>
    %431 = vector.extract_strided_slice %430 {offsets = [0, 0], sizes = [32, 1], strides = [1, 1]} : vector<32x4xf32> to vector<32x1xf32>
    %432 = vector.shape_cast %431 : vector<32x1xf32> to vector<32x1xf32>
    %433 = vector.broadcast %432 : vector<32x1xf32> to vector<32x32xf32>
    %434 = vector.extract_strided_slice %430 {offsets = [0, 1], sizes = [32, 1], strides = [1, 1]} : vector<32x4xf32> to vector<32x1xf32>
    %435 = vector.shape_cast %434 : vector<32x1xf32> to vector<32x1xf32>
    %436 = vector.broadcast %435 : vector<32x1xf32> to vector<32x32xf32>
    %437 = vector.extract_strided_slice %430 {offsets = [0, 2], sizes = [32, 1], strides = [1, 1]} : vector<32x4xf32> to vector<32x1xf32>
    %438 = vector.shape_cast %437 : vector<32x1xf32> to vector<32x1xf32>
    %439 = vector.broadcast %438 : vector<32x1xf32> to vector<32x32xf32>
    %440 = vector.extract_strided_slice %430 {offsets = [0, 3], sizes = [32, 1], strides = [1, 1]} : vector<32x4xf32> to vector<32x1xf32>
    %441 = vector.shape_cast %440 : vector<32x1xf32> to vector<32x1xf32>
    %442 = vector.broadcast %441 : vector<32x1xf32> to vector<32x32xf32>
    %443 = tpu.concatenate %433, %436, %439, %442 in 1 : vector<32x32xf32>, vector<32x32xf32>, vector<32x32xf32>, vector<32x32xf32> -> vector<32x128xf32>
    %444 = arith.mulf %428, %443 : vector<32x128xf32>
    %445 = vector.extract_strided_slice %444 {offsets = [0, 0], sizes = [32, 32], strides = [1, 1]} : vector<32x128xf32> to vector<32x32xf32>
    %446 = vector.extract_strided_slice %370 {offsets = [0, 0], sizes = [32, 16], strides = [1, 1]} : vector<32x64xf32> to vector<32x16xf32>
    %cst_144 = arith.constant dense<0.000000e+00> : vector<32x16xf32>
    %447 = tpu.matmul %445, %446, %cst_144 {dimension_numbers = #tpu.dot_dimension_numbers<[1], [0], [0], [1], [0, 0, 1, 1], [], []>} : vector<32x32xf32>, vector<32x16xf32>, vector<32x16xf32> -> vector<32x16xf32>
    %448 = vector.extract_strided_slice %444 {offsets = [0, 32], sizes = [32, 32], strides = [1, 1]} : vector<32x128xf32> to vector<32x32xf32>
    %449 = vector.extract_strided_slice %370 {offsets = [0, 16], sizes = [32, 16], strides = [1, 1]} : vector<32x64xf32> to vector<32x16xf32>
    %cst_145 = arith.constant dense<0.000000e+00> : vector<32x16xf32>
    %450 = tpu.matmul %448, %449, %cst_145 {dimension_numbers = #tpu.dot_dimension_numbers<[1], [0], [0], [1], [0, 0, 1, 1], [], []>} : vector<32x32xf32>, vector<32x16xf32>, vector<32x16xf32> -> vector<32x16xf32>
    %451 = vector.extract_strided_slice %444 {offsets = [0, 64], sizes = [32, 32], strides = [1, 1]} : vector<32x128xf32> to vector<32x32xf32>
    %452 = vector.extract_strided_slice %370 {offsets = [0, 32], sizes = [32, 16], strides = [1, 1]} : vector<32x64xf32> to vector<32x16xf32>
    %cst_146 = arith.constant dense<0.000000e+00> : vector<32x16xf32>
    %453 = tpu.matmul %451, %452, %cst_146 {dimension_numbers = #tpu.dot_dimension_numbers<[1], [0], [0], [1], [0, 0, 1, 1], [], []>} : vector<32x32xf32>, vector<32x16xf32>, vector<32x16xf32> -> vector<32x16xf32>
    %454 = vector.extract_strided_slice %444 {offsets = [0, 96], sizes = [32, 32], strides = [1, 1]} : vector<32x128xf32> to vector<32x32xf32>
    %455 = vector.extract_strided_slice %370 {offsets = [0, 48], sizes = [32, 16], strides = [1, 1]} : vector<32x64xf32> to vector<32x16xf32>
    %cst_147 = arith.constant dense<0.000000e+00> : vector<32x16xf32>
    %456 = tpu.matmul %454, %455, %cst_147 {dimension_numbers = #tpu.dot_dimension_numbers<[1], [0], [0], [1], [0, 0, 1, 1], [], []>} : vector<32x32xf32>, vector<32x16xf32>, vector<32x16xf32> -> vector<32x16xf32>
    %457 = tpu.concatenate %447, %450, %453, %456 in 1 : vector<32x16xf32>, vector<32x16xf32>, vector<32x16xf32>, vector<32x16xf32> -> vector<32x64xf32>
    %c3_148 = arith.constant 3 : index
    %c0_149 = arith.constant 0 : index
    %c0_150 = arith.constant 0 : index
    %458 = vector.load %arg4[%c3_148, %c0_149, %c0_150] : memref<4x1x64xf32, #tpu.memory_space<vmem>>, vector<1x1x64xf32>
    %459 = vector.shape_cast %458 : vector<1x1x64xf32> to vector<1x64xf32>
    %460 = vector.broadcast %459 : vector<1x64xf32> to vector<32x64xf32>
    %461 = arith.addf %457, %460 : vector<32x64xf32>
    %cst_151 = arith.constant dense<0.000000e+00> : vector<64xf32>
    %462 = vector.multi_reduction <add>, %461, %cst_151 [0] : vector<32x64xf32> to vector<64xf32>
    %463 = vector.shape_cast %462 : vector<64xf32> to vector<1x64xf32>
    %cst_152 = arith.constant 3.200000e+01 : f32
    %464 = vector.broadcast %cst_152 : f32 to vector<1x64xf32>
    %465 = arith.divf %463, %464 : vector<1x64xf32>
    %466 = vector.broadcast %465 : vector<1x64xf32> to vector<32x64xf32>
    %467 = arith.subf %461, %466 : vector<32x64xf32>
    %468 = arith.mulf %467, %467 : vector<32x64xf32>
    %cst_153 = arith.constant dense<0.000000e+00> : vector<64xf32>
    %469 = vector.multi_reduction <add>, %468, %cst_153 [0] : vector<32x64xf32> to vector<64xf32>
    %470 = vector.shape_cast %469 : vector<64xf32> to vector<1x64xf32>
    %cst_154 = arith.constant 3.200000e+01 : f32
    %471 = vector.broadcast %cst_154 : f32 to vector<1x64xf32>
    %472 = arith.divf %470, %471 : vector<1x64xf32>
    %473 = vector.broadcast %465 : vector<1x64xf32> to vector<32x64xf32>
    %474 = arith.subf %461, %473 : vector<32x64xf32>
    %cst_155 = arith.constant 9.99999974E-6 : f32
    %475 = vector.broadcast %cst_155 : f32 to vector<1x64xf32>
    %476 = arith.addf %472, %475 : vector<1x64xf32>
    %477 = math.rsqrt %476 : vector<1x64xf32>
    %478 = vector.broadcast %477 : vector<1x64xf32> to vector<32x64xf32>
    %479 = arith.mulf %474, %478 : vector<32x64xf32>
    %c3_156 = arith.constant 3 : index
    %c0_157 = arith.constant 0 : index
    %c0_158 = arith.constant 0 : index
    %480 = vector.load %arg5[%c3_156, %c0_157, %c0_158] : memref<4x1x64xf32, #tpu.memory_space<vmem>>, vector<1x1x64xf32>
    %481 = vector.shape_cast %480 : vector<1x1x64xf32> to vector<1x64xf32>
    %482 = vector.broadcast %481 : vector<1x64xf32> to vector<32x64xf32>
    %483 = arith.mulf %479, %482 : vector<32x64xf32>
    %c3_159 = arith.constant 3 : index
    %c0_160 = arith.constant 0 : index
    %c0_161 = arith.constant 0 : index
    %484 = vector.load %arg6[%c3_159, %c0_160, %c0_161] : memref<4x1x64xf32, #tpu.memory_space<vmem>>, vector<1x1x64xf32>
    %485 = vector.shape_cast %484 : vector<1x1x64xf32> to vector<1x64xf32>
    %486 = vector.broadcast %485 : vector<1x64xf32> to vector<32x64xf32>
    %487 = arith.addf %483, %486 : vector<32x64xf32>
    %cst_162 = arith.constant 0.000000e+00 : f32
    %488 = vector.broadcast %cst_162 : f32 to vector<32x64xf32>
    %489 = arith.maximumf %487, %488 : vector<32x64xf32>
    %c0_163 = arith.constant 0 : index
    %c0_164 = arith.constant 0 : index
    %490 = vector.load %arg9[%c0_163, %c0_164] : memref<64x4xf32, #tpu.memory_space<vmem>>, vector<64x4xf32>
    %cst_165 = arith.constant dense<0.000000e+00> : vector<32x4xf32>
    %491 = tpu.matmul %489, %490, %cst_165 {dimension_numbers = #tpu.dot_dimension_numbers<[1], [0], [0], [1], [0, 0, 1, 1], [], []>} : vector<32x64xf32>, vector<64x4xf32>, vector<32x4xf32> -> vector<32x4xf32>
    %c0_166 = arith.constant 0 : index
    %c0_167 = arith.constant 0 : index
    %492 = vector.load %arg10[%c0_166, %c0_167] : memref<1x4xf32, #tpu.memory_space<vmem>>, vector<1x4xf32>
    %493 = vector.broadcast %492 : vector<1x4xf32> to vector<32x4xf32>
    %494 = arith.addf %491, %493 : vector<32x4xf32>
    %c0_168 = arith.constant 0 : index
    %c0_169 = arith.constant 0 : index
    %495 = vector.load %arg11[%c0_168, %c0_169] : memref<32x4xf32, #tpu.memory_space<vmem>>, vector<32x4xf32>
    tpu.vector_store %arg11[%c0_168, %c0_169], %494 {strides = array<i32>} : memref<32x4xf32, #tpu.memory_space<vmem>>, vector<32x4xf32>,
    return
  }
}

</mosaic_0001>

<llo_original>
// kernel: tpu_custom_call.1
$region0: #{tpu_custom_call.1}
  #allocation0 [shape = 'u32[]', space=smem, size = 0x4, offset = 0x4, fixed_abs, tag = 'smem constant byte address 0x4 - core index']
  #allocation1 [shape = 'u32[72,128]{1,0:T(1,128)}', space=vmem, size = 0x9000, scoped, tag = 'internal scratch']
  %s0 = inlined_call_operand.vmem [shape: f32[32,64], index: 0, kind: input, shape index: {}]
  %s1 = inlined_call_operand.vmem [shape: f32[4,64,64], index: 1, kind: input, shape index: {}]
  %s2 = inlined_call_operand.vmem [shape: f32[4,64,4], index: 2, kind: input, shape index: {}]
  %s3 = inlined_call_operand.vmem [shape: f32[4,4,64], index: 3, kind: input, shape index: {}]
  %s4 = inlined_call_operand.vmem [shape: f32[4,1,64], index: 4, kind: input, shape index: {}]
  %s5 = inlined_call_operand.vmem [shape: f32[4,1,64], index: 5, kind: input, shape index: {}]
  %s6 = inlined_call_operand.vmem [shape: f32[4,1,64], index: 6, kind: input, shape index: {}]
  %s7 = inlined_call_operand.vmem [shape: f32[4,32,128], index: 7, kind: input, shape index: {}]
  %s8 = inlined_call_operand.vmem [shape: f32[128,4], index: 8, kind: input, shape index: {}]
  %s9 = inlined_call_operand.vmem [shape: f32[64,4], index: 9, kind: input, shape index: {}]
  %s10 = inlined_call_operand.vmem [shape: f32[1,4], index: 10, kind: input, shape index: {}]
  %s11 = inlined_call_operand.vmem [shape: f32[32,4], index: 11, kind: output, shape index: {}]
  %s12 = sld [smem:[#allocation0]]
  $region54: #{tpu_custom_call.1} parent=0
    _
  %s14 = ssub.s32 1, %s12
  %s15 = scalar_select 0, %s14, %s12
  // Predicated region
  $region2: #{tpu_custom_call.1} parent=0 // pred_check
    _
  $region3: #{tpu_custom_call.1} parent=0 // pred_check_branch
    %17 = sbr.rel (0) target = $region5
  $region4: #{tpu_custom_call.1} parent=0 // pred_region
    _
  $region5: #{tpu_custom_call.1} parent=0 // pred_fallthru
    _
  // Predicated region
  $region6: #{tpu_custom_call.1} parent=0 // pred_check
    _
  $region7: #{tpu_custom_call.1} parent=0 // pred_check_branch
    %19 = sbr.rel (0) target = $region9
  $region8: #{tpu_custom_call.1} parent=0 // pred_region
    _
  $region9: #{tpu_custom_call.1} parent=0 // pred_fallthru
    _
  // Predicated region
  $region10: #{tpu_custom_call.1} parent=0 // pred_check
    _
  $region11: #{tpu_custom_call.1} parent=0 // pred_check_branch
    %21 = sbr.rel (0) target = $region13
  $region12: #{tpu_custom_call.1} parent=0 // pred_region
    _
  $region13: #{tpu_custom_call.1} parent=0 // pred_fallthru
    _
  // Predicated region
  $region14: #{tpu_custom_call.1} parent=0 // pred_check
    _
  $region15: #{tpu_custom_call.1} parent=0 // pred_check_branch
    %23 = sbr.rel (0) target = $region17
  $region16: #{tpu_custom_call.1} parent=0 // pred_region
    _
  $region17: #{tpu_custom_call.1} parent=0 // pred_fallthru
    _
  // Predicated region
  $region18: #{tpu_custom_call.1} parent=0 // pred_check
    _
  $region19: #{tpu_custom_call.1} parent=0 // pred_check_branch
    %25 = sbr.rel (0) target = $region21
  $region20: #{tpu_custom_call.1} parent=0 // pred_region
    _
  $region21: #{tpu_custom_call.1} parent=0 // pred_fallthru
    _
  // Predicated region
  $region22: #{tpu_custom_call.1} parent=0 // pred_check
    _
  $region23: #{tpu_custom_call.1} parent=0 // pred_check_branch
    %27 = sbr.rel (0) target = $region25
  $region24: #{tpu_custom_call.1} parent=0 // pred_region
    _
  $region25: #{tpu_custom_call.1} parent=0 // pred_fallthru
    _
  // Predicated region
  $region26: #{tpu_custom_call.1} parent=0 // pred_check
    _
  $region27: #{tpu_custom_call.1} parent=0 // pred_check_branch
    %29 = sbr.rel (0) target = $region29
  $region28: #{tpu_custom_call.1} parent=0 // pred_region
    _
  $region29: #{tpu_custom_call.1} parent=0 // pred_fallthru
    _
  // Predicated region
  $region30: #{tpu_custom_call.1} parent=0 // pred_check
    _
  $region31: #{tpu_custom_call.1} parent=0 // pred_check_branch
    %31 = sbr.rel (0) target = $region33
  $region32: #{tpu_custom_call.1} parent=0 // pred_region
    _
  $region33: #{tpu_custom_call.1} parent=0 // pred_fallthru
    _
  // Predicated region
  $region34: #{tpu_custom_call.1} parent=0 // pred_check
    _
  $region35: #{tpu_custom_call.1} parent=0 // pred_check_branch
    %33 = sbr.rel (0) target = $region37
  $region36: #{tpu_custom_call.1} parent=0 // pred_region
    _
  $region37: #{tpu_custom_call.1} parent=0 // pred_fallthru
    _
  // Predicated region
  $region38: #{tpu_custom_call.1} parent=0 // pred_check
    _
  $region39: #{tpu_custom_call.1} parent=0 // pred_check_branch
    %35 = sbr.rel (0) target = $region41
  $region40: #{tpu_custom_call.1} parent=0 // pred_region
    _
  $region41: #{tpu_custom_call.1} parent=0 // pred_fallthru
    _
  // Predicated region
  $region42: #{tpu_custom_call.1} parent=0 // pred_check
    _
  $region43: #{tpu_custom_call.1} parent=0 // pred_check_branch
    %37 = sbr.rel (0) target = $region45
  $region44: #{tpu_custom_call.1} parent=0 // pred_region
    _
  $region45: #{tpu_custom_call.1} parent=0 // pred_fallthru
    _
  %v38 = vld [vmem:[%s0] sm:$0xff]
  %v39 = vld [vmem:[%s0 + $0x8] sm:$0xff]
  %v40 = vld [vmem:[%s0 + $0x10] sm:$0xff]
  %v41 = vld [vmem:[%s0 + $0x18] sm:$0xff]
  %v42 = vld [vmem:[%s8] sm:$0xff]
  %v43 = vld [vmem:[%s8 + $0x8] sm:$0xff]
  %v44 = vld [vmem:[%s8 + $0x10] sm:$0xff]
  %v45 = vld [vmem:[%s8 + $0x18] sm:$0xff]
  %v46 = vld [vmem:[%s8 + $0x20] sm:$0xff]
  %v47 = vld [vmem:[%s8 + $0x28] sm:$0xff]
  %v48 = vld [vmem:[%s8 + $0x30] sm:$0xff]
  %v49 = vld [vmem:[%s8 + $0x38] sm:$0xff]
  %v50 = vld [vmem:[%s8 + $0x40] sm:$0xff]
  %v51 = vld [vmem:[%s8 + $0x48] sm:$0xff]
  %v52 = vld [vmem:[%s8 + $0x50] sm:$0xff]
  %v53 = vld [vmem:[%s8 + $0x58] sm:$0xff]
  %v54 = vld [vmem:[%s8 + $0x60] sm:$0xff]
  %v55 = vld [vmem:[%s8 + $0x68] sm:$0xff]
  %v56 = vld [vmem:[%s8 + $0x70] sm:$0xff]
  %v57 = vld [vmem:[%s8 + $0x78] sm:$0xff]
  %v58 = vld [vmem:[%s1] sm:$0xff]
  %v59 = vld [vmem:[%s1 + $0x8] sm:$0xff]
  %v60 = vld [vmem:[%s1 + $0x10] sm:$0xff]
  %v61 = vld [vmem:[%s1 + $0x18] sm:$0xff]
  %v62 = vld [vmem:[%s1 + $0x20] sm:$0xff]
  %v63 = vld [vmem:[%s1 + $0x28] sm:$0xff]
  %v64 = vld [vmem:[%s1 + $0x30] sm:$0xff]
  %v65 = vld [vmem:[%s1 + $0x38] sm:$0xff]
  %vm66 = vcmask 523264
  %v68 = vsel %vm66, %v38, 0
  %v71 = vsel %vm66, %v39, 0
  %v74 = vsel %vm66, %v40, 0
  %v77 = vsel %vm66, %v41, 0
  %79 = vmatpush.msra.mxu0 0.0
  %80 = vmatpush.msra.mxu0 0.0
  %81 = vmatpush.msra.mxu0 0.0
  %82 = vmatpush.msra.mxu0 0.0
  %83 = vmatpush.msra.mxu0 0.0
  %84 = vmatpush.msra.mxu0 0.0
  %85 = vmatpush.msra.mxu0 0.0
  %86 = vmatpush.msra.mxu0 0.0
  %87 = vmatpush.msra.mxu0 %v65
  %88 = vmatpush.msra.mxu0 %v64
  %89 = vmatpush.msra.mxu0 %v63
  %90 = vmatpush.msra.mxu0 %v62
  %91 = vmatpush.msra.mxu0 %v61
  %92 = vmatpush.msra.mxu0 %v60
  %93 = vmatpush.msra.mxu0 %v59
  %94 = vmatpush.msra.mxu0 %v58
  %95 = vmatmul.f32.gmra.mxu0 %v68
  %v96 = vpop.f32.mrf.mxu0
  %v97 = vadd.f32 0.0, %v96
  %98 = vmatmul.f32.gmra.mxu0 %v71
  %v99 = vpop.f32.mrf.mxu0
  %v100 = vadd.f32 0.0, %v99
  %101 = vmatmul.f32.gmra.mxu0 %v74
  %v102 = vpop.f32.mrf.mxu0
  %v103 = vadd.f32 0.0, %v102
  %104 = vmatmul.f32.gmra.mxu0 %v77
  %v105 = vpop.f32.mrf.mxu0
  %v106 = vadd.f32 0.0, %v105
  %107 = vdwg.mxu0
  %v108 = vld [vmem:[%s2] sm:$0xff]
  %v109 = vld [vmem:[%s2 + $0x8] sm:$0xff]
  %v110 = vld [vmem:[%s2 + $0x10] sm:$0xff]
  %v111 = vld [vmem:[%s2 + $0x18] sm:$0xff]
  %v112 = vld [vmem:[%s2 + $0x20] sm:$0xff]
  %v113 = vld [vmem:[%s2 + $0x28] sm:$0xff]
  %v114 = vld [vmem:[%s2 + $0x30] sm:$0xff]
  %v115 = vld [vmem:[%s2 + $0x38] sm:$0xff]
  %v117 = vsel %vm66, %v97, 0
  %v120 = vsel %vm66, %v100, 0
  %v123 = vsel %vm66, %v103, 0
  %v126 = vsel %vm66, %v106, 0
  %128 = vmatpush.msra.mxu0 0.0
  %129 = vmatpush.msra.mxu0 0.0
  %130 = vmatpush.msra.mxu0 0.0
  %131 = vmatpush.msra.mxu0 0.0
  %132 = vmatpush.msra.mxu0 0.0
  %133 = vmatpush.msra.mxu0 0.0
  %134 = vmatpush.msra.mxu0 0.0
  %135 = vmatpush.msra.mxu0 0.0
  %136 = vmatpush.msra.mxu0 %v115
  %137 = vmatpush.msra.mxu0 %v114
  %138 = vmatpush.msra.mxu0 %v113
  %139 = vmatpush.msra.mxu0 %v112
  %140 = vmatpush.msra.mxu0 %v111
  %141 = vmatpush.msra.mxu0 %v110
  %142 = vmatpush.msra.mxu0 %v109
  %143 = vmatpush.msra.mxu0 %v108
  %144 = vmatmul.f32.gmra.mxu0 %v117
  %v145 = vpop.f32.mrf.mxu0
  %v146 = vadd.f32 0.0, %v145
  %147 = vmatmul.f32.gmra.mxu0 %v120
  %v148 = vpop.f32.mrf.mxu0
  %v149 = vadd.f32 0.0, %v148
  %150 = vmatmul.f32.gmra.mxu0 %v123
  %v151 = vpop.f32.mrf.mxu0
  %v152 = vadd.f32 0.0, %v151
  %153 = vmatmul.f32.gmra.mxu0 %v126
  %v154 = vpop.f32.mrf.mxu0
  %v155 = vadd.f32 0.0, %v154
  %156 = vdwg.mxu0
  %v157 = vld [vmem:[%s3] sm:$0xf]
  %v159 = vsel %vm66, %v157, 0
  %161 = vmatpush.xpose.msra.mxu0 0.0
  %162 = vmatpush.xpose.msra.mxu0 0.0
  %163 = vmatpush.xpose.msra.mxu0 0.0
  %164 = vmatpush.xpose.msra.mxu0 0.0
  %165 = vmatpush.xpose.msra.mxu0 0.0
  %166 = vmatpush.xpose.msra.mxu0 0.0
  %167 = vmatpush.xpose.msra.mxu0 0.0
  %168 = vmatpush.xpose.msra.mxu0 0.0
  %169 = vmatpush.xpose.msra.mxu0 0.0
  %170 = vmatpush.xpose.msra.mxu0 0.0
  %171 = vmatpush.xpose.msra.mxu0 0.0
  %172 = vmatpush.xpose.msra.mxu0 0.0
  %173 = vmatpush.xpose.msra.mxu0 %v126
  %174 = vmatpush.xpose.msra.mxu0 %v123
  %175 = vmatpush.xpose.msra.mxu0 %v120
  %176 = vmatpush.xpose.msra.mxu0 %v117
  %177 = vmatmul.f32.gmra.mxu0 %v159
  %v178 = vpop.f32.mrf.mxu0
  %v179 = vadd.f32 0.0, %v178
  %180 = vdwg.mxu0
  %182 = vset.pattern.permute.xlu0 0
  %183 = vperm.xlu0 %182, %v146
  %v184 = vpop.permute.xlu0 %183
  %187 = vset.pattern.permute.xlu0 0
  %188 = vperm.xlu0 %187, %v149
  %v189 = vpop.permute.xlu0 %188
  %192 = vset.pattern.permute.xlu0 0
  %193 = vperm.xlu0 %192, %v152
  %v194 = vpop.permute.xlu0 %193
  %197 = vset.pattern.permute.xlu0 0
  %198 = vperm.xlu0 %197, %v155
  %v199 = vpop.permute.xlu0 %198
  %v201 = vperm.slane %v179, 0
  %v202 = vadd.f32 %v184, %v201
  %v203 = vadd.f32 %v189, %v201
  %v204 = vadd.f32 %v194, %v201
  %v205 = vadd.f32 %v199, %v201
  %206 = vset.pattern.permute.xlu0 1
  %207 = vperm.xlu0 %206, %v146
  %v208 = vpop.permute.xlu0 %207
  %210 = vset.pattern.permute.xlu0 1
  %211 = vperm.xlu0 %210, %v149
  %v212 = vpop.permute.xlu0 %211
  %214 = vset.pattern.permute.xlu0 1
  %215 = vperm.xlu0 %214, %v152
  %v216 = vpop.permute.xlu0 %215
  %218 = vset.pattern.permute.xlu0 1
  %219 = vperm.xlu0 %218, %v155
  %v220 = vpop.permute.xlu0 %219
  %v222 = vperm.slane %v179, 1
  %v223 = vadd.f32 %v208, %v222
  %v224 = vadd.f32 %v212, %v222
  %v225 = vadd.f32 %v216, %v222
  %v226 = vadd.f32 %v220, %v222
  %227 = vset.pattern.permute.xlu0 2
  %228 = vperm.xlu0 %227, %v146
  %v229 = vpop.permute.xlu0 %228
  %231 = vset.pattern.permute.xlu0 2
  %232 = vperm.xlu0 %231, %v149
  %v233 = vpop.permute.xlu0 %232
  %235 = vset.pattern.permute.xlu0 2
  %236 = vperm.xlu0 %235, %v152
  %v237 = vpop.permute.xlu0 %236
  %239 = vset.pattern.permute.xlu0 2
  %240 = vperm.xlu0 %239, %v155
  %v241 = vpop.permute.xlu0 %240
  %v243 = vperm.slane %v179, 2
  %v244 = vadd.f32 %v229, %v243
  %v245 = vadd.f32 %v233, %v243
  %v246 = vadd.f32 %v237, %v243
  %v247 = vadd.f32 %v241, %v243
  %248 = vset.pattern.permute.xlu0 3
  %249 = vperm.xlu0 %248, %v146
  %v250 = vpop.permute.xlu0 %249
  %252 = vset.pattern.permute.xlu0 3
  %253 = vperm.xlu0 %252, %v149
  %v254 = vpop.permute.xlu0 %253
  %256 = vset.pattern.permute.xlu0 3
  %257 = vperm.xlu0 %256, %v152
  %v258 = vpop.permute.xlu0 %257
  %260 = vset.pattern.permute.xlu0 3
  %261 = vperm.xlu0 %260, %v155
  %v262 = vpop.permute.xlu0 %261
  %v264 = vperm.slane %v179, 3
  %v265 = vadd.f32 %v250, %v264
  %v266 = vadd.f32 %v254, %v264
  %v267 = vadd.f32 %v258, %v264
  %v268 = vadd.f32 %v262, %v264
  %273 = vrot.lane.b32.xlu0 %v223, 32
  %v274 = vpop.permute.xlu0 %273
  %275 = vrot.lane.b32.xlu0 %v224, 32
  %v276 = vpop.permute.xlu0 %275
  %277 = vrot.lane.b32.xlu0 %v225, 32
  %v278 = vpop.permute.xlu0 %277
  %279 = vrot.lane.b32.xlu0 %v226, 32
  %v280 = vpop.permute.xlu0 %279
  %289 = vrot.lane.b32.xlu0 %v244, 64
  %v290 = vpop.permute.xlu0 %289
  %291 = vrot.lane.b32.xlu0 %v245, 64
  %v292 = vpop.permute.xlu0 %291
  %293 = vrot.lane.b32.xlu0 %v246, 64
  %v294 = vpop.permute.xlu0 %293
  %295 = vrot.lane.b32.xlu0 %v247, 64
  %v296 = vpop.permute.xlu0 %295
  %305 = vrot.lane.b32.xlu0 %v265, 96
  %v306 = vpop.permute.xlu0 %305
  %307 = vrot.lane.b32.xlu0 %v266, 96
  %v308 = vpop.permute.xlu0 %307
  %309 = vrot.lane.b32.xlu0 %v267, 96
  %v310 = vpop.permute.xlu0 %309
  %311 = vrot.lane.b32.xlu0 %v268, 96
  %v312 = vpop.permute.xlu0 %311
  %vm317 = vcmask 261120
  %v318 = vsel %vm317, %v202, %v274
  %v319 = vsel %vm317, %v203, %v276
  %v320 = vsel %vm317, %v204, %v278
  %v321 = vsel %vm317, %v205, %v280
  %v322 = vsel %vm66, %v318, %v290
  %v323 = vsel %vm66, %v319, %v292
  %v324 = vsel %vm66, %v320, %v294
  %v325 = vsel %vm66, %v321, %v296
  %vm326 = vcmask 785408
  %v327 = vsel %vm326, %v322, %v306
  %v328 = vsel %vm326, %v323, %v308
  %v329 = vsel %vm326, %v324, %v310
  %v330 = vsel %vm326, %v325, %v312
  %vm331 = vcmp.gt.f32.partialorder %v327, 0.0
  %vm332 = vcmp.gt.f32.partialorder %v328, 0.0
  %vm333 = vcmp.gt.f32.partialorder %v329, 0.0
  %vm334 = vcmp.gt.f32.partialorder %v330, 0.0
  %v335 = vmul.f32 %v327, 0.2
  %v336 = vmul.f32 %v328, 0.2
  %v337 = vmul.f32 %v329, 0.2
  %v338 = vmul.f32 %v330, 0.2
  %v339 = vsel %vm331, %v327, %v335
  %v340 = vsel %vm332, %v328, %v336
  %v341 = vsel %vm333, %v329, %v337
  %v342 = vsel %vm334, %v330, %v338
  %v343 = vld [vmem:[%s7] sm:$0xff]
  %v344 = vld [vmem:[%s7 + $0x8] sm:$0xff]
  %v345 = vld [vmem:[%s7 + $0x10] sm:$0xff]
  %v346 = vld [vmem:[%s7 + $0x18] sm:$0xff]
  %v347 = vadd.f32 %v339, %v343
  %v348 = vadd.f32 %v340, %v344
  %v349 = vadd.f32 %v341, %v345
  %v350 = vadd.f32 %v342, %v346
  %v351 = vsel %vm317, %v347, -inf
  %352 = vmax.xlane.f32.xlu0 %v351
  %v353 = vpop.xlane.xlu0 %352
  %v354 = vsel %vm317, %v348, -inf
  %355 = vmax.xlane.f32.xlu0 %v354
  %v356 = vpop.xlane.xlu0 %355
  %v357 = vsel %vm317, %v349, -inf
  %358 = vmax.xlane.f32.xlu0 %v357
  %v359 = vpop.xlane.xlu0 %358
  %v360 = vsel %vm317, %v350, -inf
  %361 = vmax.xlane.f32.xlu0 %v360
  %v362 = vpop.xlane.xlu0 %361
  %vm363 = vcmask 523520
  %v364 = vsel %vm363, %v347, -inf
  %365 = vmax.xlane.f32.xlu0 %v364
  %v366 = vpop.xlane.xlu0 %365
  %v367 = vsel %vm363, %v348, -inf
  %368 = vmax.xlane.f32.xlu0 %v367
  %v369 = vpop.xlane.xlu0 %368
  %v370 = vsel %vm363, %v349, -inf
  %371 = vmax.xlane.f32.xlu0 %v370
  %v372 = vpop.xlane.xlu0 %371
  %v373 = vsel %vm363, %v350, -inf
  %374 = vmax.xlane.f32.xlu0 %v373
  %v375 = vpop.xlane.xlu0 %374
  %vm376 = vcmask 785920
  %v377 = vsel %vm376, %v347, -inf
  %378 = vmax.xlane.f32.xlu0 %v377
  %v379 = vpop.xlane.xlu0 %378
  %v380 = vsel %vm376, %v348, -inf
  %381 = vmax.xlane.f32.xlu0 %v380
  %v382 = vpop.xlane.xlu0 %381
  %v383 = vsel %vm376, %v349, -inf
  %384 = vmax.xlane.f32.xlu0 %v383
  %v385 = vpop.xlane.xlu0 %384
  %v386 = vsel %vm376, %v350, -inf
  %387 = vmax.xlane.f32.xlu0 %v386
  %v388 = vpop.xlane.xlu0 %387
  %vm389 = vcmask 1048320
  %v390 = vsel %vm389, %v347, -inf
  %391 = vmax.xlane.f32.xlu0 %v390
  %v392 = vpop.xlane.xlu0 %391
  %v393 = vsel %vm389, %v348, -inf
  %394 = vmax.xlane.f32.xlu0 %v393
  %v395 = vpop.xlane.xlu0 %394
  %v396 = vsel %vm389, %v349, -inf
  %397 = vmax.xlane.f32.xlu0 %v396
  %v398 = vpop.xlane.xlu0 %397
  %v399 = vsel %vm389, %v350, -inf
  %400 = vmax.xlane.f32.xlu0 %v399
  %v401 = vpop.xlane.xlu0 %400
  %v402 = vsel %vm317, %v353, %v366
  %v403 = vsel %vm317, %v356, %v369
  %v404 = vsel %vm317, %v359, %v372
  %v405 = vsel %vm317, %v362, %v375
  %v406 = vsel %vm66, %v402, %v379
  %v407 = vsel %vm66, %v403, %v382
  %v408 = vsel %vm66, %v404, %v385
  %v409 = vsel %vm66, %v405, %v388
  %v410 = vsel %vm326, %v406, %v392
  %v411 = vsel %vm326, %v407, %v395
  %v412 = vsel %vm326, %v408, %v398
  %v413 = vsel %vm326, %v409, %v401
  %v414 = vsub.f32 %v347, %v410
  %v415 = vsub.f32 %v348, %v411
  %v416 = vsub.f32 %v349, %v412
  %v417 = vsub.f32 %v350, %v413
  %v418 = vmul.f32 %v414, 1.442695
  %v419 = vpow.pop %v418
  %v420 = vmul.f32 %v415, 1.442695
  %v421 = vpow.pop %v420
  %v422 = vmul.f32 %v416, 1.442695
  %v423 = vpow.pop %v422
  %v424 = vmul.f32 %v417, 1.442695
  %v425 = vpow.pop %v424
  %426 = vmatpush.msra.mxu0 %v57
  %427 = vmatpush.msra.mxu0 %v56
  %428 = vmatpush.msra.mxu0 %v55
  %429 = vmatpush.msra.mxu0 %v54
  %430 = vmatpush.msra.mxu0 %v53
  %431 = vmatpush.msra.mxu0 %v52
  %432 = vmatpush.msra.mxu0 %v51
  %433 = vmatpush.msra.mxu0 %v50
  %434 = vmatpush.msra.mxu0 %v49
  %435 = vmatpush.msra.mxu0 %v48
  %436 = vmatpush.msra.mxu0 %v47
  %437 = vmatpush.msra.mxu0 %v46
  %438 = vmatpush.msra.mxu0 %v45
  %439 = vmatpush.msra.mxu0 %v44
  %440 = vmatpush.msra.mxu0 %v43
  %441 = vmatpush.msra.mxu0 %v42
  %442 = vmatmul.f32.gmra.mxu0 %v419
  %v443 = vpop.f32.mrf.mxu0
  %v444 = vadd.f32 0.0, %v443
  %445 = vmatmul.f32.gmra.mxu0 %v421
  %v446 = vpop.f32.mrf.mxu0
  %v447 = vadd.f32 0.0, %v446
  %448 = vmatmul.f32.gmra.mxu0 %v423
  %v449 = vpop.f32.mrf.mxu0
  %v450 = vadd.f32 0.0, %v449
  %451 = vmatmul.f32.gmra.mxu0 %v425
  %v452 = vpop.f32.mrf.mxu0
  %v453 = vadd.f32 0.0, %v452
  %454 = vdwg.mxu0
  %v455 = vrcp.pop %v444
  %v456 = vrcp.pop %v447
  %v457 = vrcp.pop %v450
  %v458 = vrcp.pop %v453
  %460 = vset.pattern.permute.xlu0 0
  %461 = vperm.xlu0 %460, %v455
  %v462 = vpop.permute.xlu0 %461
  %465 = vset.pattern.permute.xlu0 0
  %466 = vperm.xlu0 %465, %v456
  %v467 = vpop.permute.xlu0 %466
  %470 = vset.pattern.permute.xlu0 0
  %471 = vperm.xlu0 %470, %v457
  %v472 = vpop.permute.xlu0 %471
  %475 = vset.pattern.permute.xlu0 0
  %476 = vperm.xlu0 %475, %v458
  %v477 = vpop.permute.xlu0 %476
  %479 = vset.pattern.permute.xlu0 1
  %480 = vperm.xlu0 %479, %v455
  %v481 = vpop.permute.xlu0 %480
  %483 = vset.pattern.permute.xlu0 1
  %484 = vperm.xlu0 %483, %v456
  %v485 = vpop.permute.xlu0 %484
  %487 = vset.pattern.permute.xlu0 1
  %488 = vperm.xlu0 %487, %v457
  %v489 = vpop.permute.xlu0 %488
  %491 = vset.pattern.permute.xlu0 1
  %492 = vperm.xlu0 %491, %v458
  %v493 = vpop.permute.xlu0 %492
  %495 = vset.pattern.permute.xlu0 2
  %496 = vperm.xlu0 %495, %v455
  %v497 = vpop.permute.xlu0 %496
  %499 = vset.pattern.permute.xlu0 2
  %500 = vperm.xlu0 %499, %v456
  %v501 = vpop.permute.xlu0 %500
  %503 = vset.pattern.permute.xlu0 2
  %504 = vperm.xlu0 %503, %v457
  %v505 = vpop.permute.xlu0 %504
  %507 = vset.pattern.permute.xlu0 2
  %508 = vperm.xlu0 %507, %v458
  %v509 = vpop.permute.xlu0 %508
  %511 = vset.pattern.permute.xlu0 3
  %512 = vperm.xlu0 %511, %v455
  %v513 = vpop.permute.xlu0 %512
  %515 = vset.pattern.permute.xlu0 3
  %516 = vperm.xlu0 %515, %v456
  %v517 = vpop.permute.xlu0 %516
  %519 = vset.pattern.permute.xlu0 3
  %520 = vperm.xlu0 %519, %v457
  %v521 = vpop.permute.xlu0 %520
  %523 = vset.pattern.permute.xlu0 3
  %524 = vperm.xlu0 %523, %v458
  %v525 = vpop.permute.xlu0 %524
  %v527 = vsel %vm317, %v462, %v481
  %v528 = vsel %vm317, %v467, %v485
  %v529 = vsel %vm317, %v472, %v489
  %v530 = vsel %vm317, %v477, %v493
  %v531 = vsel %vm66, %v527, %v497
  %v532 = vsel %vm66, %v528, %v501
  %v533 = vsel %vm66, %v529, %v505
  %v534 = vsel %vm66, %v530, %v509
  %v535 = vsel %vm326, %v531, %v513
  %v536 = vsel %vm326, %v532, %v517
  %v537 = vsel %vm326, %v533, %v521
  %v538 = vsel %vm326, %v534, %v525
  %v539 = vmul.f32 %v419, %v535
  %v540 = vmul.f32 %v421, %v536
  %v541 = vmul.f32 %v423, %v537
  %v542 = vmul.f32 %v425, %v538
  %v544 = vsel %vm317, %v539, 0
  %v547 = vsel %vm317, %v540, 0
  %v550 = vsel %vm317, %v541, 0
  %v553 = vsel %vm317, %v542, 0
  %555 = vmatpush.msra.mxu0 0.0
  %556 = vmatpush.msra.mxu0 0.0
  %557 = vmatpush.msra.mxu0 0.0
  %558 = vmatpush.msra.mxu0 0.0
  %559 = vmatpush.msra.mxu0 0.0
  %560 = vmatpush.msra.mxu0 0.0
  %561 = vmatpush.msra.mxu0 0.0
  %562 = vmatpush.msra.mxu0 0.0
  %563 = vmatpush.msra.mxu0 0.0
  %564 = vmatpush.msra.mxu0 0.0
  %565 = vmatpush.msra.mxu0 0.0
  %566 = vmatpush.msra.mxu0 0.0
  %567 = vmatpush.msra.mxu0 %v106
  %568 = vmatpush.msra.mxu0 %v103
  %569 = vmatpush.msra.mxu0 %v100
  %570 = vmatpush.msra.mxu0 %v97
  %571 = vmatmul.f32.gmra.mxu0 %v544
  %v572 = vpop.f32.mrf.mxu0
  %v573 = vadd.f32 0.0, %v572
  %574 = vmatmul.f32.gmra.mxu0 %v547
  %v575 = vpop.f32.mrf.mxu0
  %v576 = vadd.f32 0.0, %v575
  %577 = vmatmul.f32.gmra.mxu0 %v550
  %v578 = vpop.f32.mrf.mxu0
  %v579 = vadd.f32 0.0, %v578
  %580 = vmatmul.f32.gmra.mxu0 %v553
  %v581 = vpop.f32.mrf.mxu0
  %v582 = vadd.f32 0.0, %v581
  %583 = vdwg.mxu0
  %584 = vrot.lane.b32.xlu0 %v539, 96
  %v585 = vpop.permute.xlu0 %584
  %586 = vrot.lane.b32.xlu0 %v540, 96
  %v587 = vpop.permute.xlu0 %586
  %588 = vrot.lane.b32.xlu0 %v541, 96
  %v589 = vpop.permute.xlu0 %588
  %590 = vrot.lane.b32.xlu0 %v542, 96
  %v591 = vpop.permute.xlu0 %590
  %592 = vrot.lane.b32.xlu0 %v97, 112
  %v593 = vpop.permute.xlu0 %592
  %594 = vrot.lane.b32.xlu0 %v100, 112
  %v595 = vpop.permute.xlu0 %594
  %596 = vrot.lane.b32.xlu0 %v103, 112
  %v597 = vpop.permute.xlu0 %596
  %598 = vrot.lane.b32.xlu0 %v106, 112
  %v599 = vpop.permute.xlu0 %598
  %v604 = vsel %vm317, %v585, 0
  %v606 = vsel %vm317, %v587, 0
  %v608 = vsel %vm317, %v589, 0
  %v610 = vsel %vm317, %v591, 0
  %612 = vmatpush.msra.mxu0 0.0
  %613 = vmatpush.msra.mxu0 0.0
  %614 = vmatpush.msra.mxu0 0.0
  %615 = vmatpush.msra.mxu0 0.0
  %616 = vmatpush.msra.mxu0 0.0
  %617 = vmatpush.msra.mxu0 0.0
  %618 = vmatpush.msra.mxu0 0.0
  %619 = vmatpush.msra.mxu0 0.0
  %620 = vmatpush.msra.mxu0 0.0
  %621 = vmatpush.msra.mxu0 0.0
  %622 = vmatpush.msra.mxu0 0.0
  %623 = vmatpush.msra.mxu0 0.0
  %624 = vmatpush.msra.mxu0 %v599
  %625 = vmatpush.msra.mxu0 %v597
  %626 = vmatpush.msra.mxu0 %v595
  %627 = vmatpush.msra.mxu0 %v593
  %628 = vmatmul.f32.gmra.mxu0 %v604
  %v629 = vpop.f32.mrf.mxu0
  %v630 = vadd.f32 0.0, %v629
  %631 = vmatmul.f32.gmra.mxu0 %v606
  %v632 = vpop.f32.mrf.mxu0
  %v633 = vadd.f32 0.0, %v632
  %634 = vmatmul.f32.gmra.mxu0 %v608
  %v635 = vpop.f32.mrf.mxu0
  %v636 = vadd.f32 0.0, %v635
  %637 = vmatmul.f32.gmra.mxu0 %v610
  %v638 = vpop.f32.mrf.mxu0
  %v639 = vadd.f32 0.0, %v638
  %640 = vdwg.mxu0
  %641 = vrot.lane.b32.xlu0 %v539, 64
  %v642 = vpop.permute.xlu0 %641
  %643 = vrot.lane.b32.xlu0 %v540, 64
  %v644 = vpop.permute.xlu0 %643
  %645 = vrot.lane.b32.xlu0 %v541, 64
  %v646 = vpop.permute.xlu0 %645
  %647 = vrot.lane.b32.xlu0 %v542, 64
  %v648 = vpop.permute.xlu0 %647
  %649 = vrot.lane.b32.xlu0 %v97, 96
  %v650 = vpop.permute.xlu0 %649
  %651 = vrot.lane.b32.xlu0 %v100, 96
  %v652 = vpop.permute.xlu0 %651
  %653 = vrot.lane.b32.xlu0 %v103, 96
  %v654 = vpop.permute.xlu0 %653
  %655 = vrot.lane.b32.xlu0 %v106, 96
  %v656 = vpop.permute.xlu0 %655
  %v661 = vsel %vm317, %v642, 0
  %v663 = vsel %vm317, %v644, 0
  %v665 = vsel %vm317, %v646, 0
  %v667 = vsel %vm317, %v648, 0
  %669 = vmatpush.msra.mxu0 0.0
  %670 = vmatpush.msra.mxu0 0.0
  %671 = vmatpush.msra.mxu0 0.0
  %672 = vmatpush.msra.mxu0 0.0
  %673 = vmatpush.msra.mxu0 0.0
  %674 = vmatpush.msra.mxu0 0.0
  %675 = vmatpush.msra.mxu0 0.0
  %676 = vmatpush.msra.mxu0 0.0
  %677 = vmatpush.msra.mxu0 0.0
  %678 = vmatpush.msra.mxu0 0.0
  %679 = vmatpush.msra.mxu0 0.0
  %680 = vmatpush.msra.mxu0 0.0
  %681 = vmatpush.msra.mxu0 %v656
  %682 = vmatpush.msra.mxu0 %v654
  %683 = vmatpush.msra.mxu0 %v652
  %684 = vmatpush.msra.mxu0 %v650
  %685 = vmatmul.f32.gmra.mxu0 %v661
  %v686 = vpop.f32.mrf.mxu0
  %v687 = vadd.f32 0.0, %v686
  %688 = vmatmul.f32.gmra.mxu0 %v663
  %v689 = vpop.f32.mrf.mxu0
  %v690 = vadd.f32 0.0, %v689
  %691 = vmatmul.f32.gmra.mxu0 %v665
  %v692 = vpop.f32.mrf.mxu0
  %v693 = vadd.f32 0.0, %v692
  %694 = vmatmul.f32.gmra.mxu0 %v667
  %v695 = vpop.f32.mrf.mxu0
  %v696 = vadd.f32 0.0, %v695
  %697 = vdwg.mxu0
  %698 = vrot.lane.b32.xlu0 %v539, 32
  %v699 = vpop.permute.xlu0 %698
  %700 = vrot.lane.b32.xlu0 %v540, 32
  %v701 = vpop.permute.xlu0 %700
  %702 = vrot.lane.b32.xlu0 %v541, 32
  %v703 = vpop.permute.xlu0 %702
  %704 = vrot.lane.b32.xlu0 %v542, 32
  %v705 = vpop.permute.xlu0 %704
  %706 = vrot.lane.b32.xlu0 %v97, 80
  %v707 = vpop.permute.xlu0 %706
  %708 = vrot.lane.b32.xlu0 %v100, 80
  %v709 = vpop.permute.xlu0 %708
  %710 = vrot.lane.b32.xlu0 %v103, 80
  %v711 = vpop.permute.xlu0 %710
  %712 = vrot.lane.b32.xlu0 %v106, 80
  %v713 = vpop.permute.xlu0 %712
  %v718 = vsel %vm317, %v699, 0
  %v720 = vsel %vm317, %v701, 0
  %v722 = vsel %vm317, %v703, 0
  %v724 = vsel %vm317, %v705, 0
  %726 = vmatpush.msra.mxu0 0.0
  %727 = vmatpush.msra.mxu0 0.0
  %728 = vmatpush.msra.mxu0 0.0
  %729 = vmatpush.msra.mxu0 0.0
  %730 = vmatpush.msra.mxu0 0.0
  %731 = vmatpush.msra.mxu0 0.0
  %732 = vmatpush.msra.mxu0 0.0
  %733 = vmatpush.msra.mxu0 0.0
  %734 = vmatpush.msra.mxu0 0.0
  %735 = vmatpush.msra.mxu0 0.0
  %736 = vmatpush.msra.mxu0 0.0
  %737 = vmatpush.msra.mxu0 0.0
  %738 = vmatpush.msra.mxu0 %v713
  %739 = vmatpush.msra.mxu0 %v711
  %740 = vmatpush.msra.mxu0 %v709
  %741 = vmatpush.msra.mxu0 %v707
  %742 = vmatmul.f32.gmra.mxu0 %v718
  %v743 = vpop.f32.mrf.mxu0
  %v744 = vadd.f32 0.0, %v743
  %745 = vmatmul.f32.gmra.mxu0 %v720
  %v746 = vpop.f32.mrf.mxu0
  %v747 = vadd.f32 0.0, %v746
  %748 = vmatmul.f32.gmra.mxu0 %v722
  %v749 = vpop.f32.mrf.mxu0
  %v750 = vadd.f32 0.0, %v749
  %751 = vmatmul.f32.gmra.mxu0 %v724
  %v752 = vpop.f32.mrf.mxu0
  %v753 = vadd.f32 0.0, %v752
  %754 = vdwg.mxu0
  %759 = vrot.lane.b32.xlu0 %v630, 16
  %v760 = vpop.permute.xlu0 %759
  %761 = vrot.lane.b32.xlu0 %v633, 16
  %v762 = vpop.permute.xlu0 %761
  %763 = vrot.lane.b32.xlu0 %v636, 16
  %v764 = vpop.permute.xlu0 %763
  %765 = vrot.lane.b32.xlu0 %v639, 16
  %v766 = vpop.permute.xlu0 %765
  %775 = vrot.lane.b32.xlu0 %v687, 32
  %v776 = vpop.permute.xlu0 %775
  %777 = vrot.lane.b32.xlu0 %v690, 32
  %v778 = vpop.permute.xlu0 %777
  %779 = vrot.lane.b32.xlu0 %v693, 32
  %v780 = vpop.permute.xlu0 %779
  %781 = vrot.lane.b32.xlu0 %v696, 32
  %v782 = vpop.permute.xlu0 %781
  %791 = vrot.lane.b32.xlu0 %v744, 48
  %v792 = vpop.permute.xlu0 %791
  %793 = vrot.lane.b32.xlu0 %v747, 48
  %v794 = vpop.permute.xlu0 %793
  %795 = vrot.lane.b32.xlu0 %v750, 48
  %v796 = vpop.permute.xlu0 %795
  %797 = vrot.lane.b32.xlu0 %v753, 48
  %v798 = vpop.permute.xlu0 %797
  %vm803 = vcmask 130048
  %v804 = vsel %vm803, %v573, %v760
  %v805 = vsel %vm803, %v576, %v762
  %v806 = vsel %vm803, %v579, %v764
  %v807 = vsel %vm803, %v582, %v766
  %v808 = vsel %vm317, %v804, %v776
  %v809 = vsel %vm317, %v805, %v778
  %v810 = vsel %vm317, %v806, %v780
  %v811 = vsel %vm317, %v807, %v782
  %vm812 = vcmask 392192
  %v813 = vsel %vm812, %v808, %v792
  %v814 = vsel %vm812, %v809, %v794
  %v815 = vsel %vm812, %v810, %v796
  %v816 = vsel %vm812, %v811, %v798
  %v817 = vld [vmem:[%s4] sm:$0x1]
  %v819 = vperm.slane %v817, 0
  %v821 = vadd.f32 %v813, %v819
  %v822 = vadd.f32 %v814, %v819
  %v823 = vadd.f32 %v815, %v819
  %v824 = vadd.f32 %v816, %v819
  %v825 = vsel %vm66, %v821, 0.0
  %v826 = vsel %vm66, %v822, 0.0
  %v827 = vadd.f32 %v825, %v826
  %v828 = vsel %vm66, %v823, 0.0
  %v829 = vadd.f32 %v827, %v828
  %v830 = vsel %vm66, %v824, 0.0
  %v831 = vadd.f32 %v829, %v830
  %v832 = vrot.slane %v831, 4
  %v833 = vadd.f32 %v831, %v832
  %v834 = vrot.slane %v833, 2
  %v835 = vadd.f32 %v833, %v834
  %v836 = vrot.slane %v835, 1
  %v837 = vadd.f32 %v835, %v836
  %v838 = vrcp.pop 32.0
  %v839 = vmul.f32 32.0, %v838
  %v840 = vsub.f32 1.0, %v839
  %v841 = vmul.f32 %v838, %v840
  %v842 = vadd.f32 %v838, %v841
  %vm843 = vweird.f32 %v838
  %v844 = vsel %vm843, %v838, %v842
  %v845 = vmul.f32 %v837, %v844
  %v846 = vsub.f32 %v821, %v845
  %v847 = vsub.f32 %v822, %v845
  %v848 = vsub.f32 %v823, %v845
  %v849 = vsub.f32 %v824, %v845
  %v850 = vmul.f32 %v846, %v846
  %v851 = vmul.f32 %v847, %v847
  %v852 = vmul.f32 %v848, %v848
  %v853 = vmul.f32 %v849, %v849
  %v854 = vsel %vm66, %v850, 0.0
  %v855 = vsel %vm66, %v851, 0.0
  %v856 = vadd.f32 %v854, %v855
  %v857 = vsel %vm66, %v852, 0.0
  %v858 = vadd.f32 %v856, %v857
  %v859 = vsel %vm66, %v853, 0.0
  %v860 = vadd.f32 %v858, %v859
  %v861 = vrot.slane %v860, 4
  %v862 = vadd.f32 %v860, %v861
  %v863 = vrot.slane %v862, 2
  %v864 = vadd.f32 %v862, %v863
  %v865 = vrot.slane %v864, 1
  %v866 = vadd.f32 %v864, %v865
  %v867 = vmul.f32 %v866, %v844
  %v868 = vadd.f32 %v867, 1e-05
  %v869 = vrsqrt.pop %v868
  %v870 = vmul.f32 %v869, %v868
  %v871 = vmul.f32 %v870, %v869
  %v872 = vmul.f32 0.5, %v871
  %v873 = vsub.f32 1.5, %v872
  %v874 = vmul.f32 %v869, %v873
  %vm875 = vweird.f32 %v868
  %vm876 = vweird.f32 %v869
  %vm877 = vmor %vm875, %vm876
  %v878 = vsel %vm877, %v869, %v874
  %v879 = vmul.f32 %v846, %v878
  %v880 = vmul.f32 %v847, %v878
  %v881 = vmul.f32 %v848, %v878
  %v882 = vmul.f32 %v849, %v878
  %v883 = vld [vmem:[%s5] sm:$0x1]
  %v885 = vperm.slane %v883, 0
  %v887 = vmul.f32 %v879, %v885
  %v888 = vmul.f32 %v880, %v885
  %v889 = vmul.f32 %v881, %v885
  %v890 = vmul.f32 %v882, %v885
  %v891 = vld [vmem:[%s6] sm:$0x1]
  %v893 = vperm.slane %v891, 0
  %v895 = vadd.f32 %v887, %v893
  %v896 = vadd.f32 %v888, %v893
  %v897 = vadd.f32 %v889, %v893
  %v898 = vadd.f32 %v890, %v893
  %v899 = vmax.f32 %v895, 0.0
  %v900 = vmax.f32 %v896, 0.0
  %v901 = vmax.f32 %v897, 0.0
  %v902 = vmax.f32 %v898, 0.0
  %s903 = scalar_lea.vmem %s1, 64
  %v904 = vld [vmem:[%s903] sm:$0xff]
  %v905 = vld [vmem:[%s903 + $0x8] sm:$0xff]
  %v906 = vld [vmem:[%s903 + $0x10] sm:$0xff]
  %v907 = vld [vmem:[%s903 + $0x18] sm:$0xff]
  %v908 = vld [vmem:[%s903 + $0x20] sm:$0xff]
  %v909 = vld [vmem:[%s903 + $0x28] sm:$0xff]
  %v910 = vld [vmem:[%s903 + $0x30] sm:$0xff]
  %v911 = vld [vmem:[%s903 + $0x38] sm:$0xff]
  %v913 = vsel %vm66, %v899, 0
  %v916 = vsel %vm66, %v900, 0
  %v919 = vsel %vm66, %v901, 0
  %v922 = vsel %vm66, %v902, 0
  %924 = vmatpush.msra.mxu0 0.0
  %925 = vmatpush.msra.mxu0 0.0
  %926 = vmatpush.msra.mxu0 0.0
  %927 = vmatpush.msra.mxu0 0.0
  %928 = vmatpush.msra.mxu0 0.0
  %929 = vmatpush.msra.mxu0 0.0
  %930 = vmatpush.msra.mxu0 0.0
  %931 = vmatpush.msra.mxu0 0.0
  %932 = vmatpush.msra.mxu0 %v911
  %933 = vmatpush.msra.mxu0 %v910
  %934 = vmatpush.msra.mxu0 %v909
  %935 = vmatpush.msra.mxu0 %v908
  %936 = vmatpush.msra.mxu0 %v907
  %937 = vmatpush.msra.mxu0 %v906
  %938 = vmatpush.msra.mxu0 %v905
  %939 = vmatpush.msra.mxu0 %v904
  %940 = vmatmul.f32.gmra.mxu0 %v913
  %v941 = vpop.f32.mrf.mxu0
  %v942 = vadd.f32 0.0, %v941
  %943 = vmatmul.f32.gmra.mxu0 %v916
  %v944 = vpop.f32.mrf.mxu0
  %v945 = vadd.f32 0.0, %v944
  %946 = vmatmul.f32.gmra.mxu0 %v919
  %v947 = vpop.f32.mrf.mxu0
  %v948 = vadd.f32 0.0, %v947
  %949 = vmatmul.f32.gmra.mxu0 %v922
  %v950 = vpop.f32.mrf.mxu0
  %v951 = vadd.f32 0.0, %v950
  %952 = vdwg.mxu0
  %s953 = scalar_lea.vmem %s2, 64
  %v954 = vld [vmem:[%s953] sm:$0xff]
  %v955 = vld [vmem:[%s953 + $0x8] sm:$0xff]
  %v956 = vld [vmem:[%s953 + $0x10] sm:$0xff]
  %v957 = vld [vmem:[%s953 + $0x18] sm:$0xff]
  %v958 = vld [vmem:[%s953 + $0x20] sm:$0xff]
  %v959 = vld [vmem:[%s953 + $0x28] sm:$0xff]
  %v960 = vld [vmem:[%s953 + $0x30] sm:$0xff]
  %v961 = vld [vmem:[%s953 + $0x38] sm:$0xff]
  %v963 = vsel %vm66, %v942, 0
  %v966 = vsel %vm66, %v945, 0
  %v969 = vsel %vm66, %v948, 0
  %v972 = vsel %vm66, %v951, 0
  %974 = vmatpush.msra.mxu0 0.0
  %975 = vmatpush.msra.mxu0 0.0
  %976 = vmatpush.msra.mxu0 0.0
  %977 = vmatpush.msra.mxu0 0.0
  %978 = vmatpush.msra.mxu0 0.0
  %979 = vmatpush.msra.mxu0 0.0
  %980 = vmatpush.msra.mxu0 0.0
  %981 = vmatpush.msra.mxu0 0.0
  %982 = vmatpush.msra.mxu0 %v961
  %983 = vmatpush.msra.mxu0 %v960
  %984 = vmatpush.msra.mxu0 %v959
  %985 = vmatpush.msra.mxu0 %v958
  %986 = vmatpush.msra.mxu0 %v957
  %987 = vmatpush.msra.mxu0 %v956
  %988 = vmatpush.msra.mxu0 %v955
  %989 = vmatpush.msra.mxu0 %v954
  %990 = vmatmul.f32.gmra.mxu0 %v963
  %v991 = vpop.f32.mrf.mxu0
  %v992 = vadd.f32 0.0, %v991
  %993 = vmatmul.f32.gmra.mxu0 %v966
  %v994 = vpop.f32.mrf.mxu0
  %v995 = vadd.f32 0.0, %v994
  %996 = vmatmul.f32.gmra.mxu0 %v969
  %v997 = vpop.f32.mrf.mxu0
  %v998 = vadd.f32 0.0, %v997
  %999 = vmatmul.f32.gmra.mxu0 %v972
  %v1000 = vpop.f32.mrf.mxu0
  %v1001 = vadd.f32 0.0, %v1000
  %1002 = vdwg.mxu0
  %s1003 = scalar_lea.vmem %s3, 4
  %v1004 = vld [vmem:[%s1003] sm:$0xf]
  %v1006 = vsel %vm66, %v1004, 0
  %1008 = vmatpush.xpose.msra.mxu0 0.0
  %1009 = vmatpush.xpose.msra.mxu0 0.0
  %1010 = vmatpush.xpose.msra.mxu0 0.0
  %1011 = vmatpush.xpose.msra.mxu0 0.0
  %1012 = vmatpush.xpose.msra.mxu0 0.0
  %1013 = vmatpush.xpose.msra.mxu0 0.0
  %1014 = vmatpush.xpose.msra.mxu0 0.0
  %1015 = vmatpush.xpose.msra.mxu0 0.0
  %1016 = vmatpush.xpose.msra.mxu0 0.0
  %1017 = vmatpush.xpose.msra.mxu0 0.0
  %1018 = vmatpush.xpose.msra.mxu0 0.0
  %1019 = vmatpush.xpose.msra.mxu0 0.0
  %1020 = vmatpush.xpose.msra.mxu0 %v972
  %1021 = vmatpush.xpose.msra.mxu0 %v969
  %1022 = vmatpush.xpose.msra.mxu0 %v966
  %1023 = vmatpush.xpose.msra.mxu0 %v963
  %1024 = vmatmul.f32.gmra.mxu0 %v1006
  %v1025 = vpop.f32.mrf.mxu0
  %v1026 = vadd.f32 0.0, %v1025
  %1027 = vdwg.mxu0
  %1029 = vset.pattern.permute.xlu0 0
  %1030 = vperm.xlu0 %1029, %v992
  %v1031 = vpop.permute.xlu0 %1030
  %1034 = vset.pattern.permute.xlu0 0
  %1035 = vperm.xlu0 %1034, %v995
  %v1036 = vpop.permute.xlu0 %1035
  %1039 = vset.pattern.permute.xlu0 0
  %1040 = vperm.xlu0 %1039, %v998
  %v1041 = vpop.permute.xlu0 %1040
  %1044 = vset.pattern.permute.xlu0 0
  %1045 = vperm.xlu0 %1044, %v1001
  %v1046 = vpop.permute.xlu0 %1045
  %v1048 = vperm.slane %v1026, 0
  %v1049 = vadd.f32 %v1031, %v1048
  %v1050 = vadd.f32 %v1036, %v1048
  %v1051 = vadd.f32 %v1041, %v1048
  %v1052 = vadd.f32 %v1046, %v1048
  %1053 = vset.pattern.permute.xlu0 1
  %1054 = vperm.xlu0 %1053, %v992
  %v1055 = vpop.permute.xlu0 %1054
  %1057 = vset.pattern.permute.xlu0 1
  %1058 = vperm.xlu0 %1057, %v995
  %v1059 = vpop.permute.xlu0 %1058
  %1061 = vset.pattern.permute.xlu0 1
  %1062 = vperm.xlu0 %1061, %v998
  %v1063 = vpop.permute.xlu0 %1062
  %1065 = vset.pattern.permute.xlu0 1
  %1066 = vperm.xlu0 %1065, %v1001
  %v1067 = vpop.permute.xlu0 %1066
  %v1069 = vperm.slane %v1026, 1
  %v1070 = vadd.f32 %v1055, %v1069
  %v1071 = vadd.f32 %v1059, %v1069
  %v1072 = vadd.f32 %v1063, %v1069
  %v1073 = vadd.f32 %v1067, %v1069
  %1074 = vset.pattern.permute.xlu0 2
  %1075 = vperm.xlu0 %1074, %v992
  %v1076 = vpop.permute.xlu0 %1075
  %1078 = vset.pattern.permute.xlu0 2
  %1079 = vperm.xlu0 %1078, %v995
  %v1080 = vpop.permute.xlu0 %1079
  %1082 = vset.pattern.permute.xlu0 2
  %1083 = vperm.xlu0 %1082, %v998
  %v1084 = vpop.permute.xlu0 %1083
  %1086 = vset.pattern.permute.xlu0 2
  %1087 = vperm.xlu0 %1086, %v1001
  %v1088 = vpop.permute.xlu0 %1087
  %v1090 = vperm.slane %v1026, 2
  %v1091 = vadd.f32 %v1076, %v1090
  %v1092 = vadd.f32 %v1080, %v1090
  %v1093 = vadd.f32 %v1084, %v1090
  %v1094 = vadd.f32 %v1088, %v1090
  %1095 = vset.pattern.permute.xlu0 3
  %1096 = vperm.xlu0 %1095, %v992
  %v1097 = vpop.permute.xlu0 %1096
  %1099 = vset.pattern.permute.xlu0 3
  %1100 = vperm.xlu0 %1099, %v995
  %v1101 = vpop.permute.xlu0 %1100
  %1103 = vset.pattern.permute.xlu0 3
  %1104 = vperm.xlu0 %1103, %v998
  %v1105 = vpop.permute.xlu0 %1104
  %1107 = vset.pattern.permute.xlu0 3
  %1108 = vperm.xlu0 %1107, %v1001
  %v1109 = vpop.permute.xlu0 %1108
  %v1111 = vperm.slane %v1026, 3
  %v1112 = vadd.f32 %v1097, %v1111
  %v1113 = vadd.f32 %v1101, %v1111
  %v1114 = vadd.f32 %v1105, %v1111
  %v1115 = vadd.f32 %v1109, %v1111
  %1120 = vrot.lane.b32.xlu0 %v1070, 32
  %v1121 = vpop.permute.xlu0 %1120
  %1122 = vrot.lane.b32.xlu0 %v1071, 32
  %v1123 = vpop.permute.xlu0 %1122
  %1124 = vrot.lane.b32.xlu0 %v1072, 32
  %v1125 = vpop.permute.xlu0 %1124
  %1126 = vrot.lane.b32.xlu0 %v1073, 32
  %v1127 = vpop.permute.xlu0 %1126
  %1136 = vrot.lane.b32.xlu0 %v1091, 64
  %v1137 = vpop.permute.xlu0 %1136
  %1138 = vrot.lane.b32.xlu0 %v1092, 64
  %v1139 = vpop.permute.xlu0 %1138
  %1140 = vrot.lane.b32.xlu0 %v1093, 64
  %v1141 = vpop.permute.xlu0 %1140
  %1142 = vrot.lane.b32.xlu0 %v1094, 64
  %v1143 = vpop.permute.xlu0 %1142
  %1152 = vrot.lane.b32.xlu0 %v1112, 96
  %v1153 = vpop.permute.xlu0 %1152
  %1154 = vrot.lane.b32.xlu0 %v1113, 96
  %v1155 = vpop.permute.xlu0 %1154
  %1156 = vrot.lane.b32.xlu0 %v1114, 96
  %v1157 = vpop.permute.xlu0 %1156
  %1158 = vrot.lane.b32.xlu0 %v1115, 96
  %v1159 = vpop.permute.xlu0 %1158
  %v1164 = vsel %vm317, %v1049, %v1121
  %v1165 = vsel %vm317, %v1050, %v1123
  %v1166 = vsel %vm317, %v1051, %v1125
  %v1167 = vsel %vm317, %v1052, %v1127
  %v1168 = vsel %vm66, %v1164, %v1137
  %v1169 = vsel %vm66, %v1165, %v1139
  %v1170 = vsel %vm66, %v1166, %v1141
  %v1171 = vsel %vm66, %v1167, %v1143
  %v1172 = vsel %vm326, %v1168, %v1153
  %v1173 = vsel %vm326, %v1169, %v1155
  %v1174 = vsel %vm326, %v1170, %v1157
  %v1175 = vsel %vm326, %v1171, %v1159
  %vm1176 = vcmp.gt.f32.partialorder %v1172, 0.0
  %vm1177 = vcmp.gt.f32.partialorder %v1173, 0.0
  %vm1178 = vcmp.gt.f32.partialorder %v1174, 0.0
  %vm1179 = vcmp.gt.f32.partialorder %v1175, 0.0
  %v1180 = vmul.f32 %v1172, 0.2
  %v1181 = vmul.f32 %v1173, 0.2
  %v1182 = vmul.f32 %v1174, 0.2
  %v1183 = vmul.f32 %v1175, 0.2
  %v1184 = vsel %vm1176, %v1172, %v1180
  %v1185 = vsel %vm1177, %v1173, %v1181
  %v1186 = vsel %vm1178, %v1174, %v1182
  %v1187 = vsel %vm1179, %v1175, %v1183
  %s1188 = scalar_lea.vmem %s7, 32
  %v1189 = vld [vmem:[%s1188] sm:$0xff]
  %v1190 = vld [vmem:[%s1188 + $0x8] sm:$0xff]
  %v1191 = vld [vmem:[%s1188 + $0x10] sm:$0xff]
  %v1192 = vld [vmem:[%s1188 + $0x18] sm:$0xff]
  %v1193 = vadd.f32 %v1184, %v1189
  %v1194 = vadd.f32 %v1185, %v1190
  %v1195 = vadd.f32 %v1186, %v1191
  %v1196 = vadd.f32 %v1187, %v1192
  %v1197 = vsel %vm317, %v1193, -inf
  %1198 = vmax.xlane.f32.xlu0 %v1197
  %v1199 = vpop.xlane.xlu0 %1198
  %v1200 = vsel %vm317, %v1194, -inf
  %1201 = vmax.xlane.f32.xlu0 %v1200
  %v1202 = vpop.xlane.xlu0 %1201
  %v1203 = vsel %vm317, %v1195, -inf
  %1204 = vmax.xlane.f32.xlu0 %v1203
  %v1205 = vpop.xlane.xlu0 %1204
  %v1206 = vsel %vm317, %v1196, -inf
  %1207 = vmax.xlane.f32.xlu0 %v1206
  %v1208 = vpop.xlane.xlu0 %1207
  %v1209 = vsel %vm363, %v1193, -inf
  %1210 = vmax.xlane.f32.xlu0 %v1209
  %v1211 = vpop.xlane.xlu0 %1210
  %v1212 = vsel %vm363, %v1194, -inf
  %1213 = vmax.xlane.f32.xlu0 %v1212
  %v1214 = vpop.xlane.xlu0 %1213
  %v1215 = vsel %vm363, %v1195, -inf
  %1216 = vmax.xlane.f32.xlu0 %v1215
  %v1217 = vpop.xlane.xlu0 %1216
  %v1218 = vsel %vm363, %v1196, -inf
  %1219 = vmax.xlane.f32.xlu0 %v1218
  %v1220 = vpop.xlane.xlu0 %1219
  %v1221 = vsel %vm376, %v1193, -inf
  %1222 = vmax.xlane.f32.xlu0 %v1221
  %v1223 = vpop.xlane.xlu0 %1222
  %v1224 = vsel %vm376, %v1194, -inf
  %1225 = vmax.xlane.f32.xlu0 %v1224
  %v1226 = vpop.xlane.xlu0 %1225
  %v1227 = vsel %vm376, %v1195, -inf
  %1228 = vmax.xlane.f32.xlu0 %v1227
  %v1229 = vpop.xlane.xlu0 %1228
  %v1230 = vsel %vm376, %v1196, -inf
  %1231 = vmax.xlane.f32.xlu0 %v1230
  %v1232 = vpop.xlane.xlu0 %1231
  %v1233 = vsel %vm389, %v1193, -inf
  %1234 = vmax.xlane.f32.xlu0 %v1233
  %v1235 = vpop.xlane.xlu0 %1234
  %v1236 = vsel %vm389, %v1194, -inf
  %1237 = vmax.xlane.f32.xlu0 %v1236
  %v1238 = vpop.xlane.xlu0 %1237
  %v1239 = vsel %vm389, %v1195, -inf
  %1240 = vmax.xlane.f32.xlu0 %v1239
  %v1241 = vpop.xlane.xlu0 %1240
  %v1242 = vsel %vm389, %v1196, -inf
  %1243 = vmax.xlane.f32.xlu0 %v1242
  %v1244 = vpop.xlane.xlu0 %1243
  %v1245 = vsel %vm317, %v1199, %v1211
  %v1246 = vsel %vm317, %v1202, %v1214
  %v1247 = vsel %vm317, %v1205, %v1217
  %v1248 = vsel %vm317, %v1208, %v1220
  %v1249 = vsel %vm66, %v1245, %v1223
  %v1250 = vsel %vm66, %v1246, %v1226
  %v1251 = vsel %vm66, %v1247, %v1229
  %v1252 = vsel %vm66, %v1248, %v1232
  %v1253 = vsel %vm326, %v1249, %v1235
  %v1254 = vsel %vm326, %v1250, %v1238
  %v1255 = vsel %vm326, %v1251, %v1241
  %v1256 = vsel %vm326, %v1252, %v1244
  %v1257 = vsub.f32 %v1193, %v1253
  %v1258 = vsub.f32 %v1194, %v1254
  %v1259 = vsub.f32 %v1195, %v1255
  %v1260 = vsub.f32 %v1196, %v1256
  %v1261 = vmul.f32 %v1257, 1.442695
  %v1262 = vpow.pop %v1261
  %v1263 = vmul.f32 %v1258, 1.442695
  %v1264 = vpow.pop %v1263
  %v1265 = vmul.f32 %v1259, 1.442695
  %v1266 = vpow.pop %v1265
  %v1267 = vmul.f32 %v1260, 1.442695
  %v1268 = vpow.pop %v1267
  %1269 = vmatpush.msra.mxu0 %v57
  %1270 = vmatpush.msra.mxu0 %v56
  %1271 = vmatpush.msra.mxu0 %v55
  %1272 = vmatpush.msra.mxu0 %v54
  %1273 = vmatpush.msra.mxu0 %v53
  %1274 = vmatpush.msra.mxu0 %v52
  %1275 = vmatpush.msra.mxu0 %v51
  %1276 = vmatpush.msra.mxu0 %v50
  %1277 = vmatpush.msra.mxu0 %v49
  %1278 = vmatpush.msra.mxu0 %v48
  %1279 = vmatpush.msra.mxu0 %v47
  %1280 = vmatpush.msra.mxu0 %v46
  %1281 = vmatpush.msra.mxu0 %v45
  %1282 = vmatpush.msra.mxu0 %v44
  %1283 = vmatpush.msra.mxu0 %v43
  %1284 = vmatpush.msra.mxu0 %v42
  %1285 = vmatmul.f32.gmra.mxu0 %v1262
  %v1286 = vpop.f32.mrf.mxu0
  %v1287 = vadd.f32 0.0, %v1286
  %1288 = vmatmul.f32.gmra.mxu0 %v1264
  %v1289 = vpop.f32.mrf.mxu0
  %v1290 = vadd.f32 0.0, %v1289
  %1291 = vmatmul.f32.gmra.mxu0 %v1266
  %v1292 = vpop.f32.mrf.mxu0
  %v1293 = vadd.f32 0.0, %v1292
  %1294 = vmatmul.f32.gmra.mxu0 %v1268
  %v1295 = vpop.f32.mrf.mxu0
  %v1296 = vadd.f32 0.0, %v1295
  %1297 = vdwg.mxu0
  %v1298 = vrcp.pop %v1287
  %v1299 = vrcp.pop %v1290
  %v1300 = vrcp.pop %v1293
  %v1301 = vrcp.pop %v1296
  %1303 = vset.pattern.permute.xlu0 0
  %1304 = vperm.xlu0 %1303, %v1298
  %v1305 = vpop.permute.xlu0 %1304
  %1308 = vset.pattern.permute.xlu0 0
  %1309 = vperm.xlu0 %1308, %v1299
  %v1310 = vpop.permute.xlu0 %1309
  %1313 = vset.pattern.permute.xlu0 0
  %1314 = vperm.xlu0 %1313, %v1300
  %v1315 = vpop.permute.xlu0 %1314
  %1318 = vset.pattern.permute.xlu0 0
  %1319 = vperm.xlu0 %1318, %v1301
  %v1320 = vpop.permute.xlu0 %1319
  %1322 = vset.pattern.permute.xlu0 1
  %1323 = vperm.xlu0 %1322, %v1298
  %v1324 = vpop.permute.xlu0 %1323
  %1326 = vset.pattern.permute.xlu0 1
  %1327 = vperm.xlu0 %1326, %v1299
  %v1328 = vpop.permute.xlu0 %1327
  %1330 = vset.pattern.permute.xlu0 1
  %1331 = vperm.xlu0 %1330, %v1300
  %v1332 = vpop.permute.xlu0 %1331
  %1334 = vset.pattern.permute.xlu0 1
  %1335 = vperm.xlu0 %1334, %v1301
  %v1336 = vpop.permute.xlu0 %1335
  %1338 = vset.pattern.permute.xlu0 2
  %1339 = vperm.xlu0 %1338, %v1298
  %v1340 = vpop.permute.xlu0 %1339
  %1342 = vset.pattern.permute.xlu0 2
  %1343 = vperm.xlu0 %1342, %v1299
  %v1344 = vpop.permute.xlu0 %1343
  %1346 = vset.pattern.permute.xlu0 2
  %1347 = vperm.xlu0 %1346, %v1300
  %v1348 = vpop.permute.xlu0 %1347
  %1350 = vset.pattern.permute.xlu0 2
  %1351 = vperm.xlu0 %1350, %v1301
  %v1352 = vpop.permute.xlu0 %1351
  %1354 = vset.pattern.permute.xlu0 3
  %1355 = vperm.xlu0 %1354, %v1298
  %v1356 = vpop.permute.xlu0 %1355
  %1358 = vset.pattern.permute.xlu0 3
  %1359 = vperm.xlu0 %1358, %v1299
  %v1360 = vpop.permute.xlu0 %1359
  %1362 = vset.pattern.permute.xlu0 3
  %1363 = vperm.xlu0 %1362, %v1300
  %v1364 = vpop.permute.xlu0 %1363
  %1366 = vset.pattern.permute.xlu0 3
  %1367 = vperm.xlu0 %1366, %v1301
  %v1368 = vpop.permute.xlu0 %1367
  %v1370 = vsel %vm317, %v1305, %v1324
  %v1371 = vsel %vm317, %v1310, %v1328
  %v1372 = vsel %vm317, %v1315, %v1332
  %v1373 = vsel %vm317, %v1320, %v1336
  %v1374 = vsel %vm66, %v1370, %v1340
  %v1375 = vsel %vm66, %v1371, %v1344
  %v1376 = vsel %vm66, %v1372, %v1348
  %v1377 = vsel %vm66, %v1373, %v1352
  %v1378 = vsel %vm326, %v1374, %v1356
  %v1379 = vsel %vm326, %v1375, %v1360
  %v1380 = vsel %vm326, %v1376, %v1364
  %v1381 = vsel %vm326, %v1377, %v1368
  %v1382 = vmul.f32 %v1262, %v1378
  %v1383 = vmul.f32 %v1264, %v1379
  %v1384 = vmul.f32 %v1266, %v1380
  %v1385 = vmul.f32 %v1268, %v1381
  %v1387 = vsel %vm317, %v1382, 0
  %v1390 = vsel %vm317, %v1383, 0
  %v1393 = vsel %vm317, %v1384, 0
  %v1396 = vsel %vm317, %v1385, 0
  %1398 = vmatpush.msra.mxu0 0.0
  %1399 = vmatpush.msra.mxu0 0.0
  %1400 = vmatpush.msra.mxu0 0.0
  %1401 = vmatpush.msra.mxu0 0.0
  %1402 = vmatpush.msra.mxu0 0.0
  %1403 = vmatpush.msra.mxu0 0.0
  %1404 = vmatpush.msra.mxu0 0.0
  %1405 = vmatpush.msra.mxu0 0.0
  %1406 = vmatpush.msra.mxu0 0.0
  %1407 = vmatpush.msra.mxu0 0.0
  %1408 = vmatpush.msra.mxu0 0.0
  %1409 = vmatpush.msra.mxu0 0.0
  %1410 = vmatpush.msra.mxu0 %v951
  %1411 = vmatpush.msra.mxu0 %v948
  %1412 = vmatpush.msra.mxu0 %v945
  %1413 = vmatpush.msra.mxu0 %v942
  %1414 = vmatmul.f32.gmra.mxu0 %v1387
  %v1415 = vpop.f32.mrf.mxu0
  %v1416 = vadd.f32 0.0, %v1415
  %1417 = vmatmul.f32.gmra.mxu0 %v1390
  %v1418 = vpop.f32.mrf.mxu0
  %v1419 = vadd.f32 0.0, %v1418
  %1420 = vmatmul.f32.gmra.mxu0 %v1393
  %v1421 = vpop.f32.mrf.mxu0
  %v1422 = vadd.f32 0.0, %v1421
  %1423 = vmatmul.f32.gmra.mxu0 %v1396
  %v1424 = vpop.f32.mrf.mxu0
  %v1425 = vadd.f32 0.0, %v1424
  %1426 = vdwg.mxu0
  %1427 = vrot.lane.b32.xlu0 %v1382, 96
  %v1428 = vpop.permute.xlu0 %1427
  %1429 = vrot.lane.b32.xlu0 %v1383, 96
  %v1430 = vpop.permute.xlu0 %1429
  %1431 = vrot.lane.b32.xlu0 %v1384, 96
  %v1432 = vpop.permute.xlu0 %1431
  %1433 = vrot.lane.b32.xlu0 %v1385, 96
  %v1434 = vpop.permute.xlu0 %1433
  %1435 = vrot.lane.b32.xlu0 %v942, 112
  %v1436 = vpop.permute.xlu0 %1435
  %1437 = vrot.lane.b32.xlu0 %v945, 112
  %v1438 = vpop.permute.xlu0 %1437
  %1439 = vrot.lane.b32.xlu0 %v948, 112
  %v1440 = vpop.permute.xlu0 %1439
  %1441 = vrot.lane.b32.xlu0 %v951, 112
  %v1442 = vpop.permute.xlu0 %1441
  %v1447 = vsel %vm317, %v1428, 0
  %v1449 = vsel %vm317, %v1430, 0
  %v1451 = vsel %vm317, %v1432, 0
  %v1453 = vsel %vm317, %v1434, 0
  %1455 = vmatpush.msra.mxu0 0.0
  %1456 = vmatpush.msra.mxu0 0.0
  %1457 = vmatpush.msra.mxu0 0.0
  %1458 = vmatpush.msra.mxu0 0.0
  %1459 = vmatpush.msra.mxu0 0.0
  %1460 = vmatpush.msra.mxu0 0.0
  %1461 = vmatpush.msra.mxu0 0.0
  %1462 = vmatpush.msra.mxu0 0.0
  %1463 = vmatpush.msra.mxu0 0.0
  %1464 = vmatpush.msra.mxu0 0.0
  %1465 = vmatpush.msra.mxu0 0.0
  %1466 = vmatpush.msra.mxu0 0.0
  %1467 = vmatpush.msra.mxu0 %v1442
  %1468 = vmatpush.msra.mxu0 %v1440
  %1469 = vmatpush.msra.mxu0 %v1438
  %1470 = vmatpush.msra.mxu0 %v1436
  %1471 = vmatmul.f32.gmra.mxu0 %v1447
  %v1472 = vpop.f32.mrf.mxu0
  %v1473 = vadd.f32 0.0, %v1472
  %1474 = vmatmul.f32.gmra.mxu0 %v1449
  %v1475 = vpop.f32.mrf.mxu0
  %v1476 = vadd.f32 0.0, %v1475
  %1477 = vmatmul.f32.gmra.mxu0 %v1451
  %v1478 = vpop.f32.mrf.mxu0
  %v1479 = vadd.f32 0.0, %v1478
  %1480 = vmatmul.f32.gmra.mxu0 %v1453
  %v1481 = vpop.f32.mrf.mxu0
  %v1482 = vadd.f32 0.0, %v1481
  %1483 = vdwg.mxu0
  %1484 = vrot.lane.b32.xlu0 %v1382, 64
  %v1485 = vpop.permute.xlu0 %1484
  %1486 = vrot.lane.b32.xlu0 %v1383, 64
  %v1487 = vpop.permute.xlu0 %1486
  %1488 = vrot.lane.b32.xlu0 %v1384, 64
  %v1489 = vpop.permute.xlu0 %1488
  %1490 = vrot.lane.b32.xlu0 %v1385, 64
  %v1491 = vpop.permute.xlu0 %1490
  %1492 = vrot.lane.b32.xlu0 %v942, 96
  %v1493 = vpop.permute.xlu0 %1492
  %1494 = vrot.lane.b32.xlu0 %v945, 96
  %v1495 = vpop.permute.xlu0 %1494
  %1496 = vrot.lane.b32.xlu0 %v948, 96
  %v1497 = vpop.permute.xlu0 %1496
  %1498 = vrot.lane.b32.xlu0 %v951, 96
  %v1499 = vpop.permute.xlu0 %1498
  %v1504 = vsel %vm317, %v1485, 0
  %v1506 = vsel %vm317, %v1487, 0
  %v1508 = vsel %vm317, %v1489, 0
  %v1510 = vsel %vm317, %v1491, 0
  %1512 = vmatpush.msra.mxu0 0.0
  %1513 = vmatpush.msra.mxu0 0.0
  %1514 = vmatpush.msra.mxu0 0.0
  %1515 = vmatpush.msra.mxu0 0.0
  %1516 = vmatpush.msra.mxu0 0.0
  %1517 = vmatpush.msra.mxu0 0.0
  %1518 = vmatpush.msra.mxu0 0.0
  %1519 = vmatpush.msra.mxu0 0.0
  %1520 = vmatpush.msra.mxu0 0.0
  %1521 = vmatpush.msra.mxu0 0.0
  %1522 = vmatpush.msra.mxu0 0.0
  %1523 = vmatpush.msra.mxu0 0.0
  %1524 = vmatpush.msra.mxu0 %v1499
  %1525 = vmatpush.msra.mxu0 %v1497
  %1526 = vmatpush.msra.mxu0 %v1495
  %1527 = vmatpush.msra.mxu0 %v1493
  %1528 = vmatmul.f32.gmra.mxu0 %v1504
  %v1529 = vpop.f32.mrf.mxu0
  %v1530 = vadd.f32 0.0, %v1529
  %1531 = vmatmul.f32.gmra.mxu0 %v1506
  %v1532 = vpop.f32.mrf.mxu0
  %v1533 = vadd.f32 0.0, %v1532
  %1534 = vmatmul.f32.gmra.mxu0 %v1508
  %v1535 = vpop.f32.mrf.mxu0
  %v1536 = vadd.f32 0.0, %v1535
  %1537 = vmatmul.f32.gmra.mxu0 %v1510
  %v1538 = vpop.f32.mrf.mxu0
  %v1539 = vadd.f32 0.0, %v1538
  %1540 = vdwg.mxu0
  %1541 = vrot.lane.b32.xlu0 %v1382, 32
  %v1542 = vpop.permute.xlu0 %1541
  %1543 = vrot.lane.b32.xlu0 %v1383, 32
  %v1544 = vpop.permute.xlu0 %1543
  %1545 = vrot.lane.b32.xlu0 %v1384, 32
  %v1546 = vpop.permute.xlu0 %1545
  %1547 = vrot.lane.b32.xlu0 %v1385, 32
  %v1548 = vpop.permute.xlu0 %1547
  %1549 = vrot.lane.b32.xlu0 %v942, 80
  %v1550 = vpop.permute.xlu0 %1549
  %1551 = vrot.lane.b32.xlu0 %v945, 80
  %v1552 = vpop.permute.xlu0 %1551
  %1553 = vrot.lane.b32.xlu0 %v948, 80
  %v1554 = vpop.permute.xlu0 %1553
  %1555 = vrot.lane.b32.xlu0 %v951, 80
  %v1556 = vpop.permute.xlu0 %1555
  %v1561 = vsel %vm317, %v1542, 0
  %v1563 = vsel %vm317, %v1544, 0
  %v1565 = vsel %vm317, %v1546, 0
  %v1567 = vsel %vm317, %v1548, 0
  %1569 = vmatpush.msra.mxu0 0.0
  %1570 = vmatpush.msra.mxu0 0.0
  %1571 = vmatpush.msra.mxu0 0.0
  %1572 = vmatpush.msra.mxu0 0.0
  %1573 = vmatpush.msra.mxu0 0.0
  %1574 = vmatpush.msra.mxu0 0.0
  %1575 = vmatpush.msra.mxu0 0.0
  %1576 = vmatpush.msra.mxu0 0.0
  %1577 = vmatpush.msra.mxu0 0.0
  %1578 = vmatpush.msra.mxu0 0.0
  %1579 = vmatpush.msra.mxu0 0.0
  %1580 = vmatpush.msra.mxu0 0.0
  %1581 = vmatpush.msra.mxu0 %v1556
  %1582 = vmatpush.msra.mxu0 %v1554
  %1583 = vmatpush.msra.mxu0 %v1552
  %1584 = vmatpush.msra.mxu0 %v1550
  %1585 = vmatmul.f32.gmra.mxu0 %v1561
  %v1586 = vpop.f32.mrf.mxu0
  %v1587 = vadd.f32 0.0, %v1586
  %1588 = vmatmul.f32.gmra.mxu0 %v1563
  %v1589 = vpop.f32.mrf.mxu0
  %v1590 = vadd.f32 0.0, %v1589
  %1591 = vmatmul.f32.gmra.mxu0 %v1565
  %v1592 = vpop.f32.mrf.mxu0
  %v1593 = vadd.f32 0.0, %v1592
  %1594 = vmatmul.f32.gmra.mxu0 %v1567
  %v1595 = vpop.f32.mrf.mxu0
  %v1596 = vadd.f32 0.0, %v1595
  %1597 = vdwg.mxu0
  %1602 = vrot.lane.b32.xlu0 %v1473, 16
  %v1603 = vpop.permute.xlu0 %1602
  %1604 = vrot.lane.b32.xlu0 %v1476, 16
  %v1605 = vpop.permute.xlu0 %1604
  %1606 = vrot.lane.b32.xlu0 %v1479, 16
  %v1607 = vpop.permute.xlu0 %1606
  %1608 = vrot.lane.b32.xlu0 %v1482, 16
  %v1609 = vpop.permute.xlu0 %1608
  %1618 = vrot.lane.b32.xlu0 %v1530, 32
  %v1619 = vpop.permute.xlu0 %1618
  %1620 = vrot.lane.b32.xlu0 %v1533, 32
  %v1621 = vpop.permute.xlu0 %1620
  %1622 = vrot.lane.b32.xlu0 %v1536, 32
  %v1623 = vpop.permute.xlu0 %1622
  %1624 = vrot.lane.b32.xlu0 %v1539, 32
  %v1625 = vpop.permute.xlu0 %1624
  %1634 = vrot.lane.b32.xlu0 %v1587, 48
  %v1635 = vpop.permute.xlu0 %1634
  %1636 = vrot.lane.b32.xlu0 %v1590, 48
  %v1637 = vpop.permute.xlu0 %1636
  %1638 = vrot.lane.b32.xlu0 %v1593, 48
  %v1639 = vpop.permute.xlu0 %1638
  %1640 = vrot.lane.b32.xlu0 %v1596, 48
  %v1641 = vpop.permute.xlu0 %1640
  %v1646 = vsel %vm803, %v1416, %v1603
  %v1647 = vsel %vm803, %v1419, %v1605
  %v1648 = vsel %vm803, %v1422, %v1607
  %v1649 = vsel %vm803, %v1425, %v1609
  %v1650 = vsel %vm317, %v1646, %v1619
  %v1651 = vsel %vm317, %v1647, %v1621
  %v1652 = vsel %vm317, %v1648, %v1623
  %v1653 = vsel %vm317, %v1649, %v1625
  %v1654 = vsel %vm812, %v1650, %v1635
  %v1655 = vsel %vm812, %v1651, %v1637
  %v1656 = vsel %vm812, %v1652, %v1639
  %v1657 = vsel %vm812, %v1653, %v1641
  %s1658 = scalar_lea.vmem %s4, 1
  %v1659 = vld [vmem:[%s1658] sm:$0x1]
  %v1661 = vperm.slane %v1659, 0
  %v1663 = vadd.f32 %v1654, %v1661
  %v1664 = vadd.f32 %v1655, %v1661
  %v1665 = vadd.f32 %v1656, %v1661
  %v1666 = vadd.f32 %v1657, %v1661
  %v1667 = vsel %vm66, %v1663, 0.0
  %v1668 = vsel %vm66, %v1664, 0.0
  %v1669 = vadd.f32 %v1667, %v1668
  %v1670 = vsel %vm66, %v1665, 0.0
  %v1671 = vadd.f32 %v1669, %v1670
  %v1672 = vsel %vm66, %v1666, 0.0
  %v1673 = vadd.f32 %v1671, %v1672
  %v1674 = vrot.slane %v1673, 4
  %v1675 = vadd.f32 %v1673, %v1674
  %v1676 = vrot.slane %v1675, 2
  %v1677 = vadd.f32 %v1675, %v1676
  %v1678 = vrot.slane %v1677, 1
  %v1679 = vadd.f32 %v1677, %v1678
  %v1680 = vmul.f32 %v1679, %v844
  %v1681 = vsub.f32 %v1663, %v1680
  %v1682 = vsub.f32 %v1664, %v1680
  %v1683 = vsub.f32 %v1665, %v1680
  %v1684 = vsub.f32 %v1666, %v1680
  %v1685 = vmul.f32 %v1681, %v1681
  %v1686 = vmul.f32 %v1682, %v1682
  %v1687 = vmul.f32 %v1683, %v1683
  %v1688 = vmul.f32 %v1684, %v1684
  %v1689 = vsel %vm66, %v1685, 0.0
  %v1690 = vsel %vm66, %v1686, 0.0
  %v1691 = vadd.f32 %v1689, %v1690
  %v1692 = vsel %vm66, %v1687, 0.0
  %v1693 = vadd.f32 %v1691, %v1692
  %v1694 = vsel %vm66, %v1688, 0.0
  %v1695 = vadd.f32 %v1693, %v1694
  %v1696 = vrot.slane %v1695, 4
  %v1697 = vadd.f32 %v1695, %v1696
  %v1698 = vrot.slane %v1697, 2
  %v1699 = vadd.f32 %v1697, %v1698
  %v1700 = vrot.slane %v1699, 1
  %v1701 = vadd.f32 %v1699, %v1700
  %v1702 = vmul.f32 %v1701, %v844
  %v1703 = vadd.f32 %v1702, 1e-05
  %v1704 = vrsqrt.pop %v1703
  %v1705 = vmul.f32 %v1704, %v1703
  %v1706 = vmul.f32 %v1705, %v1704
  %v1707 = vmul.f32 0.5, %v1706
  %v1708 = vsub.f32 1.5, %v1707
  %v1709 = vmul.f32 %v1704, %v1708
  %vm1710 = vweird.f32 %v1703
  %vm1711 = vweird.f32 %v1704
  %vm1712 = vmor %vm1710, %vm1711
  %v1713 = vsel %vm1712, %v1704, %v1709
  %v1714 = vmul.f32 %v1681, %v1713
  %v1715 = vmul.f32 %v1682, %v1713
  %v1716 = vmul.f32 %v1683, %v1713
  %v1717 = vmul.f32 %v1684, %v1713
  %s1718 = scalar_lea.vmem %s5, 1
  %v1719 = vld [vmem:[%s1718] sm:$0x1]
  %v1721 = vperm.slane %v1719, 0
  %v1723 = vmul.f32 %v1714, %v1721
  %v1724 = vmul.f32 %v1715, %v1721
  %v1725 = vmul.f32 %v1716, %v1721
  %v1726 = vmul.f32 %v1717, %v1721
  %s1727 = scalar_lea.vmem %s6, 1
  %v1728 = vld [vmem:[%s1727] sm:$0x1]
  %v1730 = vperm.slane %v1728, 0
  %v1732 = vadd.f32 %v1723, %v1730
  %v1733 = vadd.f32 %v1724, %v1730
  %v1734 = vadd.f32 %v1725, %v1730
  %v1735 = vadd.f32 %v1726, %v1730
  %v1736 = vmax.f32 %v1732, 0.0
  %v1737 = vmax.f32 %v1733, 0.0
  %v1738 = vmax.f32 %v1734, 0.0
  %v1739 = vmax.f32 %v1735, 0.0
  %s1740 = scalar_lea.vmem %s1, 128
  %v1741 = vld [vmem:[%s1740] sm:$0xff]
  %v1742 = vld [vmem:[%s1740 + $0x8] sm:$0xff]
  %v1743 = vld [vmem:[%s1740 + $0x10] sm:$0xff]
  %v1744 = vld [vmem:[%s1740 + $0x18] sm:$0xff]
  %v1745 = vld [vmem:[%s1740 + $0x20] sm:$0xff]
  %v1746 = vld [vmem:[%s1740 + $0x28] sm:$0xff]
  %v1747 = vld [vmem:[%s1740 + $0x30] sm:$0xff]
  %v1748 = vld [vmem:[%s1740 + $0x38] sm:$0xff]
  %v1750 = vsel %vm66, %v1736, 0
  %v1753 = vsel %vm66, %v1737, 0
  %v1756 = vsel %vm66, %v1738, 0
  %v1759 = vsel %vm66, %v1739, 0
  %1761 = vmatpush.msra.mxu0 0.0
  %1762 = vmatpush.msra.mxu0 0.0
  %1763 = vmatpush.msra.mxu0 0.0
  %1764 = vmatpush.msra.mxu0 0.0
  %1765 = vmatpush.msra.mxu0 0.0
  %1766 = vmatpush.msra.mxu0 0.0
  %1767 = vmatpush.msra.mxu0 0.0
  %1768 = vmatpush.msra.mxu0 0.0
  %1769 = vmatpush.msra.mxu0 %v1748
  %1770 = vmatpush.msra.mxu0 %v1747
  %1771 = vmatpush.msra.mxu0 %v1746
  %1772 = vmatpush.msra.mxu0 %v1745
  %1773 = vmatpush.msra.mxu0 %v1744
  %1774 = vmatpush.msra.mxu0 %v1743
  %1775 = vmatpush.msra.mxu0 %v1742
  %1776 = vmatpush.msra.mxu0 %v1741
  %1777 = vmatmul.f32.gmra.mxu0 %v1750
  %v1778 = vpop.f32.mrf.mxu0
  %v1779 = vadd.f32 0.0, %v1778
  %1780 = vmatmul.f32.gmra.mxu0 %v1753
  %v1781 = vpop.f32.mrf.mxu0
  %v1782 = vadd.f32 0.0, %v1781
  %1783 = vmatmul.f32.gmra.mxu0 %v1756
  %v1784 = vpop.f32.mrf.mxu0
  %v1785 = vadd.f32 0.0, %v1784
  %1786 = vmatmul.f32.gmra.mxu0 %v1759
  %v1787 = vpop.f32.mrf.mxu0
  %v1788 = vadd.f32 0.0, %v1787
  %1789 = vdwg.mxu0
  %s1790 = scalar_lea.vmem %s2, 128
  %v1791 = vld [vmem:[%s1790] sm:$0xff]
  %v1792 = vld [vmem:[%s1790 + $0x8] sm:$0xff]
  %v1793 = vld [vmem:[%s1790 + $0x10] sm:$0xff]
  %v1794 = vld [vmem:[%s1790 + $0x18] sm:$0xff]
  %v1795 = vld [vmem:[%s1790 + $0x20] sm:$0xff]
  %v1796 = vld [vmem:[%s1790 + $0x28] sm:$0xff]
  %v1797 = vld [vmem:[%s1790 + $0x30] sm:$0xff]
  %v1798 = vld [vmem:[%s1790 + $0x38] sm:$0xff]
  %v1800 = vsel %vm66, %v1779, 0
  %v1803 = vsel %vm66, %v1782, 0
  %v1806 = vsel %vm66, %v1785, 0
  %v1809 = vsel %vm66, %v1788, 0
  %1811 = vmatpush.msra.mxu0 0.0
  %1812 = vmatpush.msra.mxu0 0.0
  %1813 = vmatpush.msra.mxu0 0.0
  %1814 = vmatpush.msra.mxu0 0.0
  %1815 = vmatpush.msra.mxu0 0.0
  %1816 = vmatpush.msra.mxu0 0.0
  %1817 = vmatpush.msra.mxu0 0.0
  %1818 = vmatpush.msra.mxu0 0.0
  %1819 = vmatpush.msra.mxu0 %v1798
  %1820 = vmatpush.msra.mxu0 %v1797
  %1821 = vmatpush.msra.mxu0 %v1796
  %1822 = vmatpush.msra.mxu0 %v1795
  %1823 = vmatpush.msra.mxu0 %v1794
  %1824 = vmatpush.msra.mxu0 %v1793
  %1825 = vmatpush.msra.mxu0 %v1792
  %1826 = vmatpush.msra.mxu0 %v1791
  %1827 = vmatmul.f32.gmra.mxu0 %v1800
  %v1828 = vpop.f32.mrf.mxu0
  %v1829 = vadd.f32 0.0, %v1828
  %1830 = vmatmul.f32.gmra.mxu0 %v1803
  %v1831 = vpop.f32.mrf.mxu0
  %v1832 = vadd.f32 0.0, %v1831
  %1833 = vmatmul.f32.gmra.mxu0 %v1806
  %v1834 = vpop.f32.mrf.mxu0
  %v1835 = vadd.f32 0.0, %v1834
  %1836 = vmatmul.f32.gmra.mxu0 %v1809
  %v1837 = vpop.f32.mrf.mxu0
  %v1838 = vadd.f32 0.0, %v1837
  %1839 = vdwg.mxu0
  %s1840 = scalar_lea.vmem %s3, 8
  %v1841 = vld [vmem:[%s1840] sm:$0xf]
  %v1843 = vsel %vm66, %v1841, 0
  %1845 = vmatpush.xpose.msra.mxu0 0.0
  %1846 = vmatpush.xpose.msra.mxu0 0.0
  %1847 = vmatpush.xpose.msra.mxu0 0.0
  %1848 = vmatpush.xpose.msra.mxu0 0.0
  %1849 = vmatpush.xpose.msra.mxu0 0.0
  %1850 = vmatpush.xpose.msra.mxu0 0.0
  %1851 = vmatpush.xpose.msra.mxu0 0.0
  %1852 = vmatpush.xpose.msra.mxu0 0.0
  %1853 = vmatpush.xpose.msra.mxu0 0.0
  %1854 = vmatpush.xpose.msra.mxu0 0.0
  %1855 = vmatpush.xpose.msra.mxu0 0.0
  %1856 = vmatpush.xpose.msra.mxu0 0.0
  %1857 = vmatpush.xpose.msra.mxu0 %v1809
  %1858 = vmatpush.xpose.msra.mxu0 %v1806
  %1859 = vmatpush.xpose.msra.mxu0 %v1803
  %1860 = vmatpush.xpose.msra.mxu0 %v1800
  %1861 = vmatmul.f32.gmra.mxu0 %v1843
  %v1862 = vpop.f32.mrf.mxu0
  %v1863 = vadd.f32 0.0, %v1862
  %1864 = vdwg.mxu0
  %1866 = vset.pattern.permute.xlu0 0
  %1867 = vperm.xlu0 %1866, %v1829
  %v1868 = vpop.permute.xlu0 %1867
  %1871 = vset.pattern.permute.xlu0 0
  %1872 = vperm.xlu0 %1871, %v1832
  %v1873 = vpop.permute.xlu0 %1872
  %1876 = vset.pattern.permute.xlu0 0
  %1877 = vperm.xlu0 %1876, %v1835
  %v1878 = vpop.permute.xlu0 %1877
  %1881 = vset.pattern.permute.xlu0 0
  %1882 = vperm.xlu0 %1881, %v1838
  %v1883 = vpop.permute.xlu0 %1882
  %v1885 = vperm.slane %v1863, 0
  %v1886 = vadd.f32 %v1868, %v1885
  %v1887 = vadd.f32 %v1873, %v1885
  %v1888 = vadd.f32 %v1878, %v1885
  %v1889 = vadd.f32 %v1883, %v1885
  %1890 = vset.pattern.permute.xlu0 1
  %1891 = vperm.xlu0 %1890, %v1829
  %v1892 = vpop.permute.xlu0 %1891
  %1894 = vset.pattern.permute.xlu0 1
  %1895 = vperm.xlu0 %1894, %v1832
  %v1896 = vpop.permute.xlu0 %1895
  %1898 = vset.pattern.permute.xlu0 1
  %1899 = vperm.xlu0 %1898, %v1835
  %v1900 = vpop.permute.xlu0 %1899
  %1902 = vset.pattern.permute.xlu0 1
  %1903 = vperm.xlu0 %1902, %v1838
  %v1904 = vpop.permute.xlu0 %1903
  %v1906 = vperm.slane %v1863, 1
  %v1907 = vadd.f32 %v1892, %v1906
  %v1908 = vadd.f32 %v1896, %v1906
  %v1909 = vadd.f32 %v1900, %v1906
  %v1910 = vadd.f32 %v1904, %v1906
  %1911 = vset.pattern.permute.xlu0 2
  %1912 = vperm.xlu0 %1911, %v1829
  %v1913 = vpop.permute.xlu0 %1912
  %1915 = vset.pattern.permute.xlu0 2
  %1916 = vperm.xlu0 %1915, %v1832
  %v1917 = vpop.permute.xlu0 %1916
  %1919 = vset.pattern.permute.xlu0 2
  %1920 = vperm.xlu0 %1919, %v1835
  %v1921 = vpop.permute.xlu0 %1920
  %1923 = vset.pattern.permute.xlu0 2
  %1924 = vperm.xlu0 %1923, %v1838
  %v1925 = vpop.permute.xlu0 %1924
  %v1927 = vperm.slane %v1863, 2
  %v1928 = vadd.f32 %v1913, %v1927
  %v1929 = vadd.f32 %v1917, %v1927
  %v1930 = vadd.f32 %v1921, %v1927
  %v1931 = vadd.f32 %v1925, %v1927
  %1932 = vset.pattern.permute.xlu0 3
  %1933 = vperm.xlu0 %1932, %v1829
  %v1934 = vpop.permute.xlu0 %1933
  %1936 = vset.pattern.permute.xlu0 3
  %1937 = vperm.xlu0 %1936, %v1832
  %v1938 = vpop.permute.xlu0 %1937
  %1940 = vset.pattern.permute.xlu0 3
  %1941 = vperm.xlu0 %1940, %v1835
  %v1942 = vpop.permute.xlu0 %1941
  %1944 = vset.pattern.permute.xlu0 3
  %1945 = vperm.xlu0 %1944, %v1838
  %v1946 = vpop.permute.xlu0 %1945
  %v1948 = vperm.slane %v1863, 3
  %v1949 = vadd.f32 %v1934, %v1948
  %v1950 = vadd.f32 %v1938, %v1948
  %v1951 = vadd.f32 %v1942, %v1948
  %v1952 = vadd.f32 %v1946, %v1948
  %1957 = vrot.lane.b32.xlu0 %v1907, 32
  %v1958 = vpop.permute.xlu0 %1957
  %1959 = vrot.lane.b32.xlu0 %v1908, 32
  %v1960 = vpop.permute.xlu0 %1959
  %1961 = vrot.lane.b32.xlu0 %v1909, 32
  %v1962 = vpop.permute.xlu0 %1961
  %1963 = vrot.lane.b32.xlu0 %v1910, 32
  %v1964 = vpop.permute.xlu0 %1963
  %1973 = vrot.lane.b32.xlu0 %v1928, 64
  %v1974 = vpop.permute.xlu0 %1973
  %1975 = vrot.lane.b32.xlu0 %v1929, 64
  %v1976 = vpop.permute.xlu0 %1975
  %1977 = vrot.lane.b32.xlu0 %v1930, 64
  %v1978 = vpop.permute.xlu0 %1977
  %1979 = vrot.lane.b32.xlu0 %v1931, 64
  %v1980 = vpop.permute.xlu0 %1979
  %1989 = vrot.lane.b32.xlu0 %v1949, 96
  %v1990 = vpop.permute.xlu0 %1989
  %1991 = vrot.lane.b32.xlu0 %v1950, 96
  %v1992 = vpop.permute.xlu0 %1991
  %1993 = vrot.lane.b32.xlu0 %v1951, 96
  %v1994 = vpop.permute.xlu0 %1993
  %1995 = vrot.lane.b32.xlu0 %v1952, 96
  %v1996 = vpop.permute.xlu0 %1995
  %v2001 = vsel %vm317, %v1886, %v1958
  %v2002 = vsel %vm317, %v1887, %v1960
  %v2003 = vsel %vm317, %v1888, %v1962
  %v2004 = vsel %vm317, %v1889, %v1964
  %v2005 = vsel %vm66, %v2001, %v1974
  %v2006 = vsel %vm66, %v2002, %v1976
  %v2007 = vsel %vm66, %v2003, %v1978
  %v2008 = vsel %vm66, %v2004, %v1980
  %v2009 = vsel %vm326, %v2005, %v1990
  %v2010 = vsel %vm326, %v2006, %v1992
  %v2011 = vsel %vm326, %v2007, %v1994
  %v2012 = vsel %vm326, %v2008, %v1996
  %vm2013 = vcmp.gt.f32.partialorder %v2009, 0.0
  %vm2014 = vcmp.gt.f32.partialorder %v2010, 0.0
  %vm2015 = vcmp.gt.f32.partialorder %v2011, 0.0
  %vm2016 = vcmp.gt.f32.partialorder %v2012, 0.0
  %v2017 = vmul.f32 %v2009, 0.2
  %v2018 = vmul.f32 %v2010, 0.2
  %v2019 = vmul.f32 %v2011, 0.2
  %v2020 = vmul.f32 %v2012, 0.2
  %v2021 = vsel %vm2013, %v2009, %v2017
  %v2022 = vsel %vm2014, %v2010, %v2018
  %v2023 = vsel %vm2015, %v2011, %v2019
  %v2024 = vsel %vm2016, %v2012, %v2020
  %s2025 = scalar_lea.vmem %s7, 64
  %v2026 = vld [vmem:[%s2025] sm:$0xff]
  %v2027 = vld [vmem:[%s2025 + $0x8] sm:$0xff]
  %v2028 = vld [vmem:[%s2025 + $0x10] sm:$0xff]
  %v2029 = vld [vmem:[%s2025 + $0x18] sm:$0xff]
  %v2030 = vadd.f32 %v2021, %v2026
  %v2031 = vadd.f32 %v2022, %v2027
  %v2032 = vadd.f32 %v2023, %v2028
  %v2033 = vadd.f32 %v2024, %v2029
  %v2034 = vsel %vm317, %v2030, -inf
  %2035 = vmax.xlane.f32.xlu0 %v2034
  %v2036 = vpop.xlane.xlu0 %2035
  %v2037 = vsel %vm317, %v2031, -inf
  %2038 = vmax.xlane.f32.xlu0 %v2037
  %v2039 = vpop.xlane.xlu0 %2038
  %v2040 = vsel %vm317, %v2032, -inf
  %2041 = vmax.xlane.f32.xlu0 %v2040
  %v2042 = vpop.xlane.xlu0 %2041
  %v2043 = vsel %vm317, %v2033, -inf
  %2044 = vmax.xlane.f32.xlu0 %v2043
  %v2045 = vpop.xlane.xlu0 %2044
  %v2046 = vsel %vm363, %v2030, -inf
  %2047 = vmax.xlane.f32.xlu0 %v2046
  %v2048 = vpop.xlane.xlu0 %2047
  %v2049 = vsel %vm363, %v2031, -inf
  %2050 = vmax.xlane.f32.xlu0 %v2049
  %v2051 = vpop.xlane.xlu0 %2050
  %v2052 = vsel %vm363, %v2032, -inf
  %2053 = vmax.xlane.f32.xlu0 %v2052
  %v2054 = vpop.xlane.xlu0 %2053
  %v2055 = vsel %vm363, %v2033, -inf
  %2056 = vmax.xlane.f32.xlu0 %v2055
  %v2057 = vpop.xlane.xlu0 %2056
  %v2058 = vsel %vm376, %v2030, -inf
  %2059 = vmax.xlane.f32.xlu0 %v2058
  %v2060 = vpop.xlane.xlu0 %2059
  %v2061 = vsel %vm376, %v2031, -inf
  %2062 = vmax.xlane.f32.xlu0 %v2061
  %v2063 = vpop.xlane.xlu0 %2062
  %v2064 = vsel %vm376, %v2032, -inf
  %2065 = vmax.xlane.f32.xlu0 %v2064
  %v2066 = vpop.xlane.xlu0 %2065
  %v2067 = vsel %vm376, %v2033, -inf
  %2068 = vmax.xlane.f32.xlu0 %v2067
  %v2069 = vpop.xlane.xlu0 %2068
  %v2070 = vsel %vm389, %v2030, -inf
  %2071 = vmax.xlane.f32.xlu0 %v2070
  %v2072 = vpop.xlane.xlu0 %2071
  %v2073 = vsel %vm389, %v2031, -inf
  %2074 = vmax.xlane.f32.xlu0 %v2073
  %v2075 = vpop.xlane.xlu0 %2074
  %v2076 = vsel %vm389, %v2032, -inf
  %2077 = vmax.xlane.f32.xlu0 %v2076
  %v2078 = vpop.xlane.xlu0 %2077
  %v2079 = vsel %vm389, %v2033, -inf
  %2080 = vmax.xlane.f32.xlu0 %v2079
  %v2081 = vpop.xlane.xlu0 %2080
  %v2082 = vsel %vm317, %v2036, %v2048
  %v2083 = vsel %vm317, %v2039, %v2051
  %v2084 = vsel %vm317, %v2042, %v2054
  %v2085 = vsel %vm317, %v2045, %v2057
  %v2086 = vsel %vm66, %v2082, %v2060
  %v2087 = vsel %vm66, %v2083, %v2063
  %v2088 = vsel %vm66, %v2084, %v2066
  %v2089 = vsel %vm66, %v2085, %v2069
  %v2090 = vsel %vm326, %v2086, %v2072
  %v2091 = vsel %vm326, %v2087, %v2075
  %v2092 = vsel %vm326, %v2088, %v2078
  %v2093 = vsel %vm326, %v2089, %v2081
  %v2094 = vsub.f32 %v2030, %v2090
  %v2095 = vsub.f32 %v2031, %v2091
  %v2096 = vsub.f32 %v2032, %v2092
  %v2097 = vsub.f32 %v2033, %v2093
  %v2098 = vmul.f32 %v2094, 1.442695
  %v2099 = vpow.pop %v2098
  %v2100 = vmul.f32 %v2095, 1.442695
  %v2101 = vpow.pop %v2100
  %v2102 = vmul.f32 %v2096, 1.442695
  %v2103 = vpow.pop %v2102
  %v2104 = vmul.f32 %v2097, 1.442695
  %v2105 = vpow.pop %v2104
  %2106 = vmatpush.msra.mxu0 %v57
  %2107 = vmatpush.msra.mxu0 %v56
  %2108 = vmatpush.msra.mxu0 %v55
  %2109 = vmatpush.msra.mxu0 %v54
  %2110 = vmatpush.msra.mxu0 %v53
  %2111 = vmatpush.msra.mxu0 %v52
  %2112 = vmatpush.msra.mxu0 %v51
  %2113 = vmatpush.msra.mxu0 %v50
  %2114 = vmatpush.msra.mxu0 %v49
  %2115 = vmatpush.msra.mxu0 %v48
  %2116 = vmatpush.msra.mxu0 %v47
  %2117 = vmatpush.msra.mxu0 %v46
  %2118 = vmatpush.msra.mxu0 %v45
  %2119 = vmatpush.msra.mxu0 %v44
  %2120 = vmatpush.msra.mxu0 %v43
  %2121 = vmatpush.msra.mxu0 %v42
  %2122 = vmatmul.f32.gmra.mxu0 %v2099
  %v2123 = vpop.f32.mrf.mxu0
  %v2124 = vadd.f32 0.0, %v2123
  %2125 = vmatmul.f32.gmra.mxu0 %v2101
  %v2126 = vpop.f32.mrf.mxu0
  %v2127 = vadd.f32 0.0, %v2126
  %2128 = vmatmul.f32.gmra.mxu0 %v2103
  %v2129 = vpop.f32.mrf.mxu0
  %v2130 = vadd.f32 0.0, %v2129
  %2131 = vmatmul.f32.gmra.mxu0 %v2105
  %v2132 = vpop.f32.mrf.mxu0
  %v2133 = vadd.f32 0.0, %v2132
  %2134 = vdwg.mxu0
  %v2135 = vrcp.pop %v2124
  %v2136 = vrcp.pop %v2127
  %v2137 = vrcp.pop %v2130
  %v2138 = vrcp.pop %v2133
  %2140 = vset.pattern.permute.xlu0 0
  %2141 = vperm.xlu0 %2140, %v2135
  %v2142 = vpop.permute.xlu0 %2141
  %2145 = vset.pattern.permute.xlu0 0
  %2146 = vperm.xlu0 %2145, %v2136
  %v2147 = vpop.permute.xlu0 %2146
  %2150 = vset.pattern.permute.xlu0 0
  %2151 = vperm.xlu0 %2150, %v2137
  %v2152 = vpop.permute.xlu0 %2151
  %2155 = vset.pattern.permute.xlu0 0
  %2156 = vperm.xlu0 %2155, %v2138
  %v2157 = vpop.permute.xlu0 %2156
  %2159 = vset.pattern.permute.xlu0 1
  %2160 = vperm.xlu0 %2159, %v2135
  %v2161 = vpop.permute.xlu0 %2160
  %2163 = vset.pattern.permute.xlu0 1
  %2164 = vperm.xlu0 %2163, %v2136
  %v2165 = vpop.permute.xlu0 %2164
  %2167 = vset.pattern.permute.xlu0 1
  %2168 = vperm.xlu0 %2167, %v2137
  %v2169 = vpop.permute.xlu0 %2168
  %2171 = vset.pattern.permute.xlu0 1
  %2172 = vperm.xlu0 %2171, %v2138
  %v2173 = vpop.permute.xlu0 %2172
  %2175 = vset.pattern.permute.xlu0 2
  %2176 = vperm.xlu0 %2175, %v2135
  %v2177 = vpop.permute.xlu0 %2176
  %2179 = vset.pattern.permute.xlu0 2
  %2180 = vperm.xlu0 %2179, %v2136
  %v2181 = vpop.permute.xlu0 %2180
  %2183 = vset.pattern.permute.xlu0 2
  %2184 = vperm.xlu0 %2183, %v2137
  %v2185 = vpop.permute.xlu0 %2184
  %2187 = vset.pattern.permute.xlu0 2
  %2188 = vperm.xlu0 %2187, %v2138
  %v2189 = vpop.permute.xlu0 %2188
  %2191 = vset.pattern.permute.xlu0 3
  %2192 = vperm.xlu0 %2191, %v2135
  %v2193 = vpop.permute.xlu0 %2192
  %2195 = vset.pattern.permute.xlu0 3
  %2196 = vperm.xlu0 %2195, %v2136
  %v2197 = vpop.permute.xlu0 %2196
  %2199 = vset.pattern.permute.xlu0 3
  %2200 = vperm.xlu0 %2199, %v2137
  %v2201 = vpop.permute.xlu0 %2200
  %2203 = vset.pattern.permute.xlu0 3
  %2204 = vperm.xlu0 %2203, %v2138
  %v2205 = vpop.permute.xlu0 %2204
  %v2207 = vsel %vm317, %v2142, %v2161
  %v2208 = vsel %vm317, %v2147, %v2165
  %v2209 = vsel %vm317, %v2152, %v2169
  %v2210 = vsel %vm317, %v2157, %v2173
  %v2211 = vsel %vm66, %v2207, %v2177
  %v2212 = vsel %vm66, %v2208, %v2181
  %v2213 = vsel %vm66, %v2209, %v2185
  %v2214 = vsel %vm66, %v2210, %v2189
  %v2215 = vsel %vm326, %v2211, %v2193
  %v2216 = vsel %vm326, %v2212, %v2197
  %v2217 = vsel %vm326, %v2213, %v2201
  %v2218 = vsel %vm326, %v2214, %v2205
  %v2219 = vmul.f32 %v2099, %v2215
  %v2220 = vmul.f32 %v2101, %v2216
  %v2221 = vmul.f32 %v2103, %v2217
  %v2222 = vmul.f32 %v2105, %v2218
  %v2224 = vsel %vm317, %v2219, 0
  %v2227 = vsel %vm317, %v2220, 0
  %v2230 = vsel %vm317, %v2221, 0
  %v2233 = vsel %vm317, %v2222, 0
  %2235 = vmatpush.msra.mxu0 0.0
  %2236 = vmatpush.msra.mxu0 0.0
  %2237 = vmatpush.msra.mxu0 0.0
  %2238 = vmatpush.msra.mxu0 0.0
  %2239 = vmatpush.msra.mxu0 0.0
  %2240 = vmatpush.msra.mxu0 0.0
  %2241 = vmatpush.msra.mxu0 0.0
  %2242 = vmatpush.msra.mxu0 0.0
  %2243 = vmatpush.msra.mxu0 0.0
  %2244 = vmatpush.msra.mxu0 0.0
  %2245 = vmatpush.msra.mxu0 0.0
  %2246 = vmatpush.msra.mxu0 0.0
  %2247 = vmatpush.msra.mxu0 %v1788
  %2248 = vmatpush.msra.mxu0 %v1785
  %2249 = vmatpush.msra.mxu0 %v1782
  %2250 = vmatpush.msra.mxu0 %v1779
  %2251 = vmatmul.f32.gmra.mxu0 %v2224
  %v2252 = vpop.f32.mrf.mxu0
  %v2253 = vadd.f32 0.0, %v2252
  %2254 = vmatmul.f32.gmra.mxu0 %v2227
  %v2255 = vpop.f32.mrf.mxu0
  %v2256 = vadd.f32 0.0, %v2255
  %2257 = vmatmul.f32.gmra.mxu0 %v2230
  %v2258 = vpop.f32.mrf.mxu0
  %v2259 = vadd.f32 0.0, %v2258
  %2260 = vmatmul.f32.gmra.mxu0 %v2233
  %v2261 = vpop.f32.mrf.mxu0
  %v2262 = vadd.f32 0.0, %v2261
  %2263 = vdwg.mxu0
  %2264 = vrot.lane.b32.xlu0 %v2219, 96
  %v2265 = vpop.permute.xlu0 %2264
  %2266 = vrot.lane.b32.xlu0 %v2220, 96
  %v2267 = vpop.permute.xlu0 %2266
  %2268 = vrot.lane.b32.xlu0 %v2221, 96
  %v2269 = vpop.permute.xlu0 %2268
  %2270 = vrot.lane.b32.xlu0 %v2222, 96
  %v2271 = vpop.permute.xlu0 %2270
  %2272 = vrot.lane.b32.xlu0 %v1779, 112
  %v2273 = vpop.permute.xlu0 %2272
  %2274 = vrot.lane.b32.xlu0 %v1782, 112
  %v2275 = vpop.permute.xlu0 %2274
  %2276 = vrot.lane.b32.xlu0 %v1785, 112
  %v2277 = vpop.permute.xlu0 %2276
  %2278 = vrot.lane.b32.xlu0 %v1788, 112
  %v2279 = vpop.permute.xlu0 %2278
  %v2284 = vsel %vm317, %v2265, 0
  %v2286 = vsel %vm317, %v2267, 0
  %v2288 = vsel %vm317, %v2269, 0
  %v2290 = vsel %vm317, %v2271, 0
  %2292 = vmatpush.msra.mxu0 0.0
  %2293 = vmatpush.msra.mxu0 0.0
  %2294 = vmatpush.msra.mxu0 0.0
  %2295 = vmatpush.msra.mxu0 0.0
  %2296 = vmatpush.msra.mxu0 0.0
  %2297 = vmatpush.msra.mxu0 0.0
  %2298 = vmatpush.msra.mxu0 0.0
  %2299 = vmatpush.msra.mxu0 0.0
  %2300 = vmatpush.msra.mxu0 0.0
  %2301 = vmatpush.msra.mxu0 0.0
  %2302 = vmatpush.msra.mxu0 0.0
  %2303 = vmatpush.msra.mxu0 0.0
  %2304 = vmatpush.msra.mxu0 %v2279
  %2305 = vmatpush.msra.mxu0 %v2277
  %2306 = vmatpush.msra.mxu0 %v2275
  %2307 = vmatpush.msra.mxu0 %v2273
  %2308 = vmatmul.f32.gmra.mxu0 %v2284
  %v2309 = vpop.f32.mrf.mxu0
  %v2310 = vadd.f32 0.0, %v2309
  %2311 = vmatmul.f32.gmra.mxu0 %v2286
  %v2312 = vpop.f32.mrf.mxu0
  %v2313 = vadd.f32 0.0, %v2312
  %2314 = vmatmul.f32.gmra.mxu0 %v2288
  %v2315 = vpop.f32.mrf.mxu0
  %v2316 = vadd.f32 0.0, %v2315
  %2317 = vmatmul.f32.gmra.mxu0 %v2290
  %v2318 = vpop.f32.mrf.mxu0
  %v2319 = vadd.f32 0.0, %v2318
  %2320 = vdwg.mxu0
  %2321 = vrot.lane.b32.xlu0 %v2219, 64
  %v2322 = vpop.permute.xlu0 %2321
  %2323 = vrot.lane.b32.xlu0 %v2220, 64
  %v2324 = vpop.permute.xlu0 %2323
  %2325 = vrot.lane.b32.xlu0 %v2221, 64
  %v2326 = vpop.permute.xlu0 %2325
  %2327 = vrot.lane.b32.xlu0 %v2222, 64
  %v2328 = vpop.permute.xlu0 %2327
  %2329 = vrot.lane.b32.xlu0 %v1779, 96
  %v2330 = vpop.permute.xlu0 %2329
  %2331 = vrot.lane.b32.xlu0 %v1782, 96
  %v2332 = vpop.permute.xlu0 %2331
  %2333 = vrot.lane.b32.xlu0 %v1785, 96
  %v2334 = vpop.permute.xlu0 %2333
  %2335 = vrot.lane.b32.xlu0 %v1788, 96
  %v2336 = vpop.permute.xlu0 %2335
  %v2341 = vsel %vm317, %v2322, 0
  %v2343 = vsel %vm317, %v2324, 0
  %v2345 = vsel %vm317, %v2326, 0
  %v2347 = vsel %vm317, %v2328, 0
  %2349 = vmatpush.msra.mxu0 0.0
  %2350 = vmatpush.msra.mxu0 0.0
  %2351 = vmatpush.msra.mxu0 0.0
  %2352 = vmatpush.msra.mxu0 0.0
  %2353 = vmatpush.msra.mxu0 0.0
  %2354 = vmatpush.msra.mxu0 0.0
  %2355 = vmatpush.msra.mxu0 0.0
  %2356 = vmatpush.msra.mxu0 0.0
  %2357 = vmatpush.msra.mxu0 0.0
  %2358 = vmatpush.msra.mxu0 0.0
  %2359 = vmatpush.msra.mxu0 0.0
  %2360 = vmatpush.msra.mxu0 0.0
  %2361 = vmatpush.msra.mxu0 %v2336
  %2362 = vmatpush.msra.mxu0 %v2334
  %2363 = vmatpush.msra.mxu0 %v2332
  %2364 = vmatpush.msra.mxu0 %v2330
  %2365 = vmatmul.f32.gmra.mxu0 %v2341
  %v2366 = vpop.f32.mrf.mxu0
  %v2367 = vadd.f32 0.0, %v2366
  %2368 = vmatmul.f32.gmra.mxu0 %v2343
  %v2369 = vpop.f32.mrf.mxu0
  %v2370 = vadd.f32 0.0, %v2369
  %2371 = vmatmul.f32.gmra.mxu0 %v2345
  %v2372 = vpop.f32.mrf.mxu0
  %v2373 = vadd.f32 0.0, %v2372
  %2374 = vmatmul.f32.gmra.mxu0 %v2347
  %v2375 = vpop.f32.mrf.mxu0
  %v2376 = vadd.f32 0.0, %v2375
  %2377 = vdwg.mxu0
  %2378 = vrot.lane.b32.xlu0 %v2219, 32
  %v2379 = vpop.permute.xlu0 %2378
  %2380 = vrot.lane.b32.xlu0 %v2220, 32
  %v2381 = vpop.permute.xlu0 %2380
  %2382 = vrot.lane.b32.xlu0 %v2221, 32
  %v2383 = vpop.permute.xlu0 %2382
  %2384 = vrot.lane.b32.xlu0 %v2222, 32
  %v2385 = vpop.permute.xlu0 %2384
  %2386 = vrot.lane.b32.xlu0 %v1779, 80
  %v2387 = vpop.permute.xlu0 %2386
  %2388 = vrot.lane.b32.xlu0 %v1782, 80
  %v2389 = vpop.permute.xlu0 %2388
  %2390 = vrot.lane.b32.xlu0 %v1785, 80
  %v2391 = vpop.permute.xlu0 %2390
  %2392 = vrot.lane.b32.xlu0 %v1788, 80
  %v2393 = vpop.permute.xlu0 %2392
  %v2398 = vsel %vm317, %v2379, 0
  %v2400 = vsel %vm317, %v2381, 0
  %v2402 = vsel %vm317, %v2383, 0
  %v2404 = vsel %vm317, %v2385, 0
  %2406 = vmatpush.msra.mxu0 0.0
  %2407 = vmatpush.msra.mxu0 0.0
  %2408 = vmatpush.msra.mxu0 0.0
  %2409 = vmatpush.msra.mxu0 0.0
  %2410 = vmatpush.msra.mxu0 0.0
  %2411 = vmatpush.msra.mxu0 0.0
  %2412 = vmatpush.msra.mxu0 0.0
  %2413 = vmatpush.msra.mxu0 0.0
  %2414 = vmatpush.msra.mxu0 0.0
  %2415 = vmatpush.msra.mxu0 0.0
  %2416 = vmatpush.msra.mxu0 0.0
  %2417 = vmatpush.msra.mxu0 0.0
  %2418 = vmatpush.msra.mxu0 %v2393
  %2419 = vmatpush.msra.mxu0 %v2391
  %2420 = vmatpush.msra.mxu0 %v2389
  %2421 = vmatpush.msra.mxu0 %v2387
  %2422 = vmatmul.f32.gmra.mxu0 %v2398
  %v2423 = vpop.f32.mrf.mxu0
  %v2424 = vadd.f32 0.0, %v2423
  %2425 = vmatmul.f32.gmra.mxu0 %v2400
  %v2426 = vpop.f32.mrf.mxu0
  %v2427 = vadd.f32 0.0, %v2426
  %2428 = vmatmul.f32.gmra.mxu0 %v2402
  %v2429 = vpop.f32.mrf.mxu0
  %v2430 = vadd.f32 0.0, %v2429
  %2431 = vmatmul.f32.gmra.mxu0 %v2404
  %v2432 = vpop.f32.mrf.mxu0
  %v2433 = vadd.f32 0.0, %v2432
  %2434 = vdwg.mxu0
  %2439 = vrot.lane.b32.xlu0 %v2310, 16
  %v2440 = vpop.permute.xlu0 %2439
  %2441 = vrot.lane.b32.xlu0 %v2313, 16
  %v2442 = vpop.permute.xlu0 %2441
  %2443 = vrot.lane.b32.xlu0 %v2316, 16
  %v2444 = vpop.permute.xlu0 %2443
  %2445 = vrot.lane.b32.xlu0 %v2319, 16
  %v2446 = vpop.permute.xlu0 %2445
  %2455 = vrot.lane.b32.xlu0 %v2367, 32
  %v2456 = vpop.permute.xlu0 %2455
  %2457 = vrot.lane.b32.xlu0 %v2370, 32
  %v2458 = vpop.permute.xlu0 %2457
  %2459 = vrot.lane.b32.xlu0 %v2373, 32
  %v2460 = vpop.permute.xlu0 %2459
  %2461 = vrot.lane.b32.xlu0 %v2376, 32
  %v2462 = vpop.permute.xlu0 %2461
  %2471 = vrot.lane.b32.xlu0 %v2424, 48
  %v2472 = vpop.permute.xlu0 %2471
  %2473 = vrot.lane.b32.xlu0 %v2427, 48
  %v2474 = vpop.permute.xlu0 %2473
  %2475 = vrot.lane.b32.xlu0 %v2430, 48
  %v2476 = vpop.permute.xlu0 %2475
  %2477 = vrot.lane.b32.xlu0 %v2433, 48
  %v2478 = vpop.permute.xlu0 %2477
  %v2483 = vsel %vm803, %v2253, %v2440
  %v2484 = vsel %vm803, %v2256, %v2442
  %v2485 = vsel %vm803, %v2259, %v2444
  %v2486 = vsel %vm803, %v2262, %v2446
  %v2487 = vsel %vm317, %v2483, %v2456
  %v2488 = vsel %vm317, %v2484, %v2458
  %v2489 = vsel %vm317, %v2485, %v2460
  %v2490 = vsel %vm317, %v2486, %v2462
  %v2491 = vsel %vm812, %v2487, %v2472
  %v2492 = vsel %vm812, %v2488, %v2474
  %v2493 = vsel %vm812, %v2489, %v2476
  %v2494 = vsel %vm812, %v2490, %v2478
  %s2495 = scalar_lea.vmem %s4, 2
  %v2496 = vld [vmem:[%s2495] sm:$0x1]
  %v2498 = vperm.slane %v2496, 0
  %v2500 = vadd.f32 %v2491, %v2498
  %v2501 = vadd.f32 %v2492, %v2498
  %v2502 = vadd.f32 %v2493, %v2498
  %v2503 = vadd.f32 %v2494, %v2498
  %v2504 = vsel %vm66, %v2500, 0.0
  %v2505 = vsel %vm66, %v2501, 0.0
  %v2506 = vadd.f32 %v2504, %v2505
  %v2507 = vsel %vm66, %v2502, 0.0
  %v2508 = vadd.f32 %v2506, %v2507
  %v2509 = vsel %vm66, %v2503, 0.0
  %v2510 = vadd.f32 %v2508, %v2509
  %v2511 = vrot.slane %v2510, 4
  %v2512 = vadd.f32 %v2510, %v2511
  %v2513 = vrot.slane %v2512, 2
  %v2514 = vadd.f32 %v2512, %v2513
  %v2515 = vrot.slane %v2514, 1
  %v2516 = vadd.f32 %v2514, %v2515
  %v2517 = vmul.f32 %v2516, %v844
  %v2518 = vsub.f32 %v2500, %v2517
  %v2519 = vsub.f32 %v2501, %v2517
  %v2520 = vsub.f32 %v2502, %v2517
  %v2521 = vsub.f32 %v2503, %v2517
  %v2522 = vmul.f32 %v2518, %v2518
  %v2523 = vmul.f32 %v2519, %v2519
  %v2524 = vmul.f32 %v2520, %v2520
  %v2525 = vmul.f32 %v2521, %v2521
  %v2526 = vsel %vm66, %v2522, 0.0
  %v2527 = vsel %vm66, %v2523, 0.0
  %v2528 = vadd.f32 %v2526, %v2527
  %v2529 = vsel %vm66, %v2524, 0.0
  %v2530 = vadd.f32 %v2528, %v2529
  %v2531 = vsel %vm66, %v2525, 0.0
  %v2532 = vadd.f32 %v2530, %v2531
  %v2533 = vrot.slane %v2532, 4
  %v2534 = vadd.f32 %v2532, %v2533
  %v2535 = vrot.slane %v2534, 2
  %v2536 = vadd.f32 %v2534, %v2535
  %v2537 = vrot.slane %v2536, 1
  %v2538 = vadd.f32 %v2536, %v2537
  %v2539 = vmul.f32 %v2538, %v844
  %v2540 = vadd.f32 %v2539, 1e-05
  %v2541 = vrsqrt.pop %v2540
  %v2542 = vmul.f32 %v2541, %v2540
  %v2543 = vmul.f32 %v2542, %v2541
  %v2544 = vmul.f32 0.5, %v2543
  %v2545 = vsub.f32 1.5, %v2544
  %v2546 = vmul.f32 %v2541, %v2545
  %vm2547 = vweird.f32 %v2540
  %vm2548 = vweird.f32 %v2541
  %vm2549 = vmor %vm2547, %vm2548
  %v2550 = vsel %vm2549, %v2541, %v2546
  %v2551 = vmul.f32 %v2518, %v2550
  %v2552 = vmul.f32 %v2519, %v2550
  %v2553 = vmul.f32 %v2520, %v2550
  %v2554 = vmul.f32 %v2521, %v2550
  %s2555 = scalar_lea.vmem %s5, 2
  %v2556 = vld [vmem:[%s2555] sm:$0x1]
  %v2558 = vperm.slane %v2556, 0
  %v2560 = vmul.f32 %v2551, %v2558
  %v2561 = vmul.f32 %v2552, %v2558
  %v2562 = vmul.f32 %v2553, %v2558
  %v2563 = vmul.f32 %v2554, %v2558
  %s2564 = scalar_lea.vmem %s6, 2
  %v2565 = vld [vmem:[%s2564] sm:$0x1]
  %v2567 = vperm.slane %v2565, 0
  %v2569 = vadd.f32 %v2560, %v2567
  %v2570 = vadd.f32 %v2561, %v2567
  %v2571 = vadd.f32 %v2562, %v2567
  %v2572 = vadd.f32 %v2563, %v2567
  %v2573 = vmax.f32 %v2569, 0.0
  %v2574 = vmax.f32 %v2570, 0.0
  %v2575 = vmax.f32 %v2571, 0.0
  %v2576 = vmax.f32 %v2572, 0.0
  %s2577 = scalar_lea.vmem %s1, 192
  %v2578 = vld [vmem:[%s2577] sm:$0xff]
  %v2579 = vld [vmem:[%s2577 + $0x8] sm:$0xff]
  %v2580 = vld [vmem:[%s2577 + $0x10] sm:$0xff]
  %v2581 = vld [vmem:[%s2577 + $0x18] sm:$0xff]
  %v2582 = vld [vmem:[%s2577 + $0x20] sm:$0xff]
  %v2583 = vld [vmem:[%s2577 + $0x28] sm:$0xff]
  %v2584 = vld [vmem:[%s2577 + $0x30] sm:$0xff]
  %v2585 = vld [vmem:[%s2577 + $0x38] sm:$0xff]
  %v2587 = vsel %vm66, %v2573, 0
  %v2590 = vsel %vm66, %v2574, 0
  %v2593 = vsel %vm66, %v2575, 0
  %v2596 = vsel %vm66, %v2576, 0
  %2598 = vmatpush.msra.mxu0 0.0
  %2599 = vmatpush.msra.mxu0 0.0
  %2600 = vmatpush.msra.mxu0 0.0
  %2601 = vmatpush.msra.mxu0 0.0
  %2602 = vmatpush.msra.mxu0 0.0
  %2603 = vmatpush.msra.mxu0 0.0
  %2604 = vmatpush.msra.mxu0 0.0
  %2605 = vmatpush.msra.mxu0 0.0
  %2606 = vmatpush.msra.mxu0 %v2585
  %2607 = vmatpush.msra.mxu0 %v2584
  %2608 = vmatpush.msra.mxu0 %v2583
  %2609 = vmatpush.msra.mxu0 %v2582
  %2610 = vmatpush.msra.mxu0 %v2581
  %2611 = vmatpush.msra.mxu0 %v2580
  %2612 = vmatpush.msra.mxu0 %v2579
  %2613 = vmatpush.msra.mxu0 %v2578
  %2614 = vmatmul.f32.gmra.mxu0 %v2587
  %v2615 = vpop.f32.mrf.mxu0
  %v2616 = vadd.f32 0.0, %v2615
  %2617 = vmatmul.f32.gmra.mxu0 %v2590
  %v2618 = vpop.f32.mrf.mxu0
  %v2619 = vadd.f32 0.0, %v2618
  %2620 = vmatmul.f32.gmra.mxu0 %v2593
  %v2621 = vpop.f32.mrf.mxu0
  %v2622 = vadd.f32 0.0, %v2621
  %2623 = vmatmul.f32.gmra.mxu0 %v2596
  %v2624 = vpop.f32.mrf.mxu0
  %v2625 = vadd.f32 0.0, %v2624
  %2626 = vdwg.mxu0
  %s2627 = scalar_lea.vmem %s2, 192
  %v2628 = vld [vmem:[%s2627] sm:$0xff]
  %v2629 = vld [vmem:[%s2627 + $0x8] sm:$0xff]
  %v2630 = vld [vmem:[%s2627 + $0x10] sm:$0xff]
  %v2631 = vld [vmem:[%s2627 + $0x18] sm:$0xff]
  %v2632 = vld [vmem:[%s2627 + $0x20] sm:$0xff]
  %v2633 = vld [vmem:[%s2627 + $0x28] sm:$0xff]
  %v2634 = vld [vmem:[%s2627 + $0x30] sm:$0xff]
  %v2635 = vld [vmem:[%s2627 + $0x38] sm:$0xff]
  %v2637 = vsel %vm66, %v2616, 0
  %v2640 = vsel %vm66, %v2619, 0
  %v2643 = vsel %vm66, %v2622, 0
  %v2646 = vsel %vm66, %v2625, 0
  %2648 = vmatpush.msra.mxu0 0.0
  %2649 = vmatpush.msra.mxu0 0.0
  %2650 = vmatpush.msra.mxu0 0.0
  %2651 = vmatpush.msra.mxu0 0.0
  %2652 = vmatpush.msra.mxu0 0.0
  %2653 = vmatpush.msra.mxu0 0.0
  %2654 = vmatpush.msra.mxu0 0.0
  %2655 = vmatpush.msra.mxu0 0.0
  %2656 = vmatpush.msra.mxu0 %v2635
  %2657 = vmatpush.msra.mxu0 %v2634
  %2658 = vmatpush.msra.mxu0 %v2633
  %2659 = vmatpush.msra.mxu0 %v2632
  %2660 = vmatpush.msra.mxu0 %v2631
  %2661 = vmatpush.msra.mxu0 %v2630
  %2662 = vmatpush.msra.mxu0 %v2629
  %2663 = vmatpush.msra.mxu0 %v2628
  %2664 = vmatmul.f32.gmra.mxu0 %v2637
  %v2665 = vpop.f32.mrf.mxu0
  %v2666 = vadd.f32 0.0, %v2665
  %2667 = vmatmul.f32.gmra.mxu0 %v2640
  %v2668 = vpop.f32.mrf.mxu0
  %v2669 = vadd.f32 0.0, %v2668
  %2670 = vmatmul.f32.gmra.mxu0 %v2643
  %v2671 = vpop.f32.mrf.mxu0
  %v2672 = vadd.f32 0.0, %v2671
  %2673 = vmatmul.f32.gmra.mxu0 %v2646
  %v2674 = vpop.f32.mrf.mxu0
  %v2675 = vadd.f32 0.0, %v2674
  %2676 = vdwg.mxu0
  %s2677 = scalar_lea.vmem %s3, 12
  %v2678 = vld [vmem:[%s2677] sm:$0xf]
  %v2680 = vsel %vm66, %v2678, 0
  %2682 = vmatpush.xpose.msra.mxu0 0.0
  %2683 = vmatpush.xpose.msra.mxu0 0.0
  %2684 = vmatpush.xpose.msra.mxu0 0.0
  %2685 = vmatpush.xpose.msra.mxu0 0.0
  %2686 = vmatpush.xpose.msra.mxu0 0.0
  %2687 = vmatpush.xpose.msra.mxu0 0.0
  %2688 = vmatpush.xpose.msra.mxu0 0.0
  %2689 = vmatpush.xpose.msra.mxu0 0.0
  %2690 = vmatpush.xpose.msra.mxu0 0.0
  %2691 = vmatpush.xpose.msra.mxu0 0.0
  %2692 = vmatpush.xpose.msra.mxu0 0.0
  %2693 = vmatpush.xpose.msra.mxu0 0.0
  %2694 = vmatpush.xpose.msra.mxu0 %v2646
  %2695 = vmatpush.xpose.msra.mxu0 %v2643
  %2696 = vmatpush.xpose.msra.mxu0 %v2640
  %2697 = vmatpush.xpose.msra.mxu0 %v2637
  %2698 = vmatmul.f32.gmra.mxu0 %v2680
  %v2699 = vpop.f32.mrf.mxu0
  %v2700 = vadd.f32 0.0, %v2699
  %2701 = vdwg.mxu0
  %2703 = vset.pattern.permute.xlu0 0
  %2704 = vperm.xlu0 %2703, %v2666
  %v2705 = vpop.permute.xlu0 %2704
  %2708 = vset.pattern.permute.xlu0 0
  %2709 = vperm.xlu0 %2708, %v2669
  %v2710 = vpop.permute.xlu0 %2709
  %2713 = vset.pattern.permute.xlu0 0
  %2714 = vperm.xlu0 %2713, %v2672
  %v2715 = vpop.permute.xlu0 %2714
  %2718 = vset.pattern.permute.xlu0 0
  %2719 = vperm.xlu0 %2718, %v2675
  %v2720 = vpop.permute.xlu0 %2719
  %v2722 = vperm.slane %v2700, 0
  %v2723 = vadd.f32 %v2705, %v2722
  %v2724 = vadd.f32 %v2710, %v2722
  %v2725 = vadd.f32 %v2715, %v2722
  %v2726 = vadd.f32 %v2720, %v2722
  %2727 = vset.pattern.permute.xlu0 1
  %2728 = vperm.xlu0 %2727, %v2666
  %v2729 = vpop.permute.xlu0 %2728
  %2731 = vset.pattern.permute.xlu0 1
  %2732 = vperm.xlu0 %2731, %v2669
  %v2733 = vpop.permute.xlu0 %2732
  %2735 = vset.pattern.permute.xlu0 1
  %2736 = vperm.xlu0 %2735, %v2672
  %v2737 = vpop.permute.xlu0 %2736
  %2739 = vset.pattern.permute.xlu0 1
  %2740 = vperm.xlu0 %2739, %v2675
  %v2741 = vpop.permute.xlu0 %2740
  %v2743 = vperm.slane %v2700, 1
  %v2744 = vadd.f32 %v2729, %v2743
  %v2745 = vadd.f32 %v2733, %v2743
  %v2746 = vadd.f32 %v2737, %v2743
  %v2747 = vadd.f32 %v2741, %v2743
  %2748 = vset.pattern.permute.xlu0 2
  %2749 = vperm.xlu0 %2748, %v2666
  %v2750 = vpop.permute.xlu0 %2749
  %2752 = vset.pattern.permute.xlu0 2
  %2753 = vperm.xlu0 %2752, %v2669
  %v2754 = vpop.permute.xlu0 %2753
  %2756 = vset.pattern.permute.xlu0 2
  %2757 = vperm.xlu0 %2756, %v2672
  %v2758 = vpop.permute.xlu0 %2757
  %2760 = vset.pattern.permute.xlu0 2
  %2761 = vperm.xlu0 %2760, %v2675
  %v2762 = vpop.permute.xlu0 %2761
  %v2764 = vperm.slane %v2700, 2
  %v2765 = vadd.f32 %v2750, %v2764
  %v2766 = vadd.f32 %v2754, %v2764
  %v2767 = vadd.f32 %v2758, %v2764
  %v2768 = vadd.f32 %v2762, %v2764
  %2769 = vset.pattern.permute.xlu0 3
  %2770 = vperm.xlu0 %2769, %v2666
  %v2771 = vpop.permute.xlu0 %2770
  %2773 = vset.pattern.permute.xlu0 3
  %2774 = vperm.xlu0 %2773, %v2669
  %v2775 = vpop.permute.xlu0 %2774
  %2777 = vset.pattern.permute.xlu0 3
  %2778 = vperm.xlu0 %2777, %v2672
  %v2779 = vpop.permute.xlu0 %2778
  %2781 = vset.pattern.permute.xlu0 3
  %2782 = vperm.xlu0 %2781, %v2675
  %v2783 = vpop.permute.xlu0 %2782
  %v2785 = vperm.slane %v2700, 3
  %v2786 = vadd.f32 %v2771, %v2785
  %v2787 = vadd.f32 %v2775, %v2785
  %v2788 = vadd.f32 %v2779, %v2785
  %v2789 = vadd.f32 %v2783, %v2785
  %2794 = vrot.lane.b32.xlu0 %v2744, 32
  %v2795 = vpop.permute.xlu0 %2794
  %2796 = vrot.lane.b32.xlu0 %v2745, 32
  %v2797 = vpop.permute.xlu0 %2796
  %2798 = vrot.lane.b32.xlu0 %v2746, 32
  %v2799 = vpop.permute.xlu0 %2798
  %2800 = vrot.lane.b32.xlu0 %v2747, 32
  %v2801 = vpop.permute.xlu0 %2800
  %2810 = vrot.lane.b32.xlu0 %v2765, 64
  %v2811 = vpop.permute.xlu0 %2810
  %2812 = vrot.lane.b32.xlu0 %v2766, 64
  %v2813 = vpop.permute.xlu0 %2812
  %2814 = vrot.lane.b32.xlu0 %v2767, 64
  %v2815 = vpop.permute.xlu0 %2814
  %2816 = vrot.lane.b32.xlu0 %v2768, 64
  %v2817 = vpop.permute.xlu0 %2816
  %2826 = vrot.lane.b32.xlu0 %v2786, 96
  %v2827 = vpop.permute.xlu0 %2826
  %2828 = vrot.lane.b32.xlu0 %v2787, 96
  %v2829 = vpop.permute.xlu0 %2828
  %2830 = vrot.lane.b32.xlu0 %v2788, 96
  %v2831 = vpop.permute.xlu0 %2830
  %2832 = vrot.lane.b32.xlu0 %v2789, 96
  %v2833 = vpop.permute.xlu0 %2832
  %v2838 = vsel %vm317, %v2723, %v2795
  %v2839 = vsel %vm317, %v2724, %v2797
  %v2840 = vsel %vm317, %v2725, %v2799
  %v2841 = vsel %vm317, %v2726, %v2801
  %v2842 = vsel %vm66, %v2838, %v2811
  %v2843 = vsel %vm66, %v2839, %v2813
  %v2844 = vsel %vm66, %v2840, %v2815
  %v2845 = vsel %vm66, %v2841, %v2817
  %v2846 = vsel %vm326, %v2842, %v2827
  %v2847 = vsel %vm326, %v2843, %v2829
  %v2848 = vsel %vm326, %v2844, %v2831
  %v2849 = vsel %vm326, %v2845, %v2833
  %vm2850 = vcmp.gt.f32.partialorder %v2846, 0.0
  %vm2851 = vcmp.gt.f32.partialorder %v2847, 0.0
  %vm2852 = vcmp.gt.f32.partialorder %v2848, 0.0
  %vm2853 = vcmp.gt.f32.partialorder %v2849, 0.0
  %v2854 = vmul.f32 %v2846, 0.2
  %v2855 = vmul.f32 %v2847, 0.2
  %v2856 = vmul.f32 %v2848, 0.2
  %v2857 = vmul.f32 %v2849, 0.2
  %v2858 = vsel %vm2850, %v2846, %v2854
  %v2859 = vsel %vm2851, %v2847, %v2855
  %v2860 = vsel %vm2852, %v2848, %v2856
  %v2861 = vsel %vm2853, %v2849, %v2857
  %s2862 = scalar_lea.vmem %s7, 96
  %v2863 = vld [vmem:[%s2862] sm:$0xff]
  %v2864 = vld [vmem:[%s2862 + $0x8] sm:$0xff]
  %v2865 = vld [vmem:[%s2862 + $0x10] sm:$0xff]
  %v2866 = vld [vmem:[%s2862 + $0x18] sm:$0xff]
  %v2867 = vadd.f32 %v2858, %v2863
  %v2868 = vadd.f32 %v2859, %v2864
  %v2869 = vadd.f32 %v2860, %v2865
  %v2870 = vadd.f32 %v2861, %v2866
  %v2871 = vsel %vm317, %v2867, -inf
  %2872 = vmax.xlane.f32.xlu0 %v2871
  %v2873 = vpop.xlane.xlu0 %2872
  %v2874 = vsel %vm317, %v2868, -inf
  %2875 = vmax.xlane.f32.xlu0 %v2874
  %v2876 = vpop.xlane.xlu0 %2875
  %v2877 = vsel %vm317, %v2869, -inf
  %2878 = vmax.xlane.f32.xlu0 %v2877
  %v2879 = vpop.xlane.xlu0 %2878
  %v2880 = vsel %vm317, %v2870, -inf
  %2881 = vmax.xlane.f32.xlu0 %v2880
  %v2882 = vpop.xlane.xlu0 %2881
  %v2883 = vsel %vm363, %v2867, -inf
  %2884 = vmax.xlane.f32.xlu0 %v2883
  %v2885 = vpop.xlane.xlu0 %2884
  %v2886 = vsel %vm363, %v2868, -inf
  %2887 = vmax.xlane.f32.xlu0 %v2886
  %v2888 = vpop.xlane.xlu0 %2887
  %v2889 = vsel %vm363, %v2869, -inf
  %2890 = vmax.xlane.f32.xlu0 %v2889
  %v2891 = vpop.xlane.xlu0 %2890
  %v2892 = vsel %vm363, %v2870, -inf
  %2893 = vmax.xlane.f32.xlu0 %v2892
  %v2894 = vpop.xlane.xlu0 %2893
  %v2895 = vsel %vm376, %v2867, -inf
  %2896 = vmax.xlane.f32.xlu0 %v2895
  %v2897 = vpop.xlane.xlu0 %2896
  %v2898 = vsel %vm376, %v2868, -inf
  %2899 = vmax.xlane.f32.xlu0 %v2898
  %v2900 = vpop.xlane.xlu0 %2899
  %v2901 = vsel %vm376, %v2869, -inf
  %2902 = vmax.xlane.f32.xlu0 %v2901
  %v2903 = vpop.xlane.xlu0 %2902
  %v2904 = vsel %vm376, %v2870, -inf
  %2905 = vmax.xlane.f32.xlu0 %v2904
  %v2906 = vpop.xlane.xlu0 %2905
  %v2907 = vsel %vm389, %v2867, -inf
  %2908 = vmax.xlane.f32.xlu0 %v2907
  %v2909 = vpop.xlane.xlu0 %2908
  %v2910 = vsel %vm389, %v2868, -inf
  %2911 = vmax.xlane.f32.xlu0 %v2910
  %v2912 = vpop.xlane.xlu0 %2911
  %v2913 = vsel %vm389, %v2869, -inf
  %2914 = vmax.xlane.f32.xlu0 %v2913
  %v2915 = vpop.xlane.xlu0 %2914
  %v2916 = vsel %vm389, %v2870, -inf
  %2917 = vmax.xlane.f32.xlu0 %v2916
  %v2918 = vpop.xlane.xlu0 %2917
  %v2919 = vsel %vm317, %v2873, %v2885
  %v2920 = vsel %vm317, %v2876, %v2888
  %v2921 = vsel %vm317, %v2879, %v2891
  %v2922 = vsel %vm317, %v2882, %v2894
  %v2923 = vsel %vm66, %v2919, %v2897
  %v2924 = vsel %vm66, %v2920, %v2900
  %v2925 = vsel %vm66, %v2921, %v2903
  %v2926 = vsel %vm66, %v2922, %v2906
  %v2927 = vsel %vm326, %v2923, %v2909
  %v2928 = vsel %vm326, %v2924, %v2912
  %v2929 = vsel %vm326, %v2925, %v2915
  %v2930 = vsel %vm326, %v2926, %v2918
  %v2931 = vsub.f32 %v2867, %v2927
  %v2932 = vsub.f32 %v2868, %v2928
  %v2933 = vsub.f32 %v2869, %v2929
  %v2934 = vsub.f32 %v2870, %v2930
  %v2935 = vmul.f32 %v2931, 1.442695
  %v2936 = vpow.pop %v2935
  %v2937 = vmul.f32 %v2932, 1.442695
  %v2938 = vpow.pop %v2937
  %v2939 = vmul.f32 %v2933, 1.442695
  %v2940 = vpow.pop %v2939
  %v2941 = vmul.f32 %v2934, 1.442695
  %v2942 = vpow.pop %v2941
  %2943 = vmatpush.msra.mxu0 %v57
  %2944 = vmatpush.msra.mxu0 %v56
  %2945 = vmatpush.msra.mxu0 %v55
  %2946 = vmatpush.msra.mxu0 %v54
  %2947 = vmatpush.msra.mxu0 %v53
  %2948 = vmatpush.msra.mxu0 %v52
  %2949 = vmatpush.msra.mxu0 %v51
  %2950 = vmatpush.msra.mxu0 %v50
  %2951 = vmatpush.msra.mxu0 %v49
  %2952 = vmatpush.msra.mxu0 %v48
  %2953 = vmatpush.msra.mxu0 %v47
  %2954 = vmatpush.msra.mxu0 %v46
  %2955 = vmatpush.msra.mxu0 %v45
  %2956 = vmatpush.msra.mxu0 %v44
  %2957 = vmatpush.msra.mxu0 %v43
  %2958 = vmatpush.msra.mxu0 %v42
  %2959 = vmatmul.f32.gmra.mxu0 %v2936
  %v2960 = vpop.f32.mrf.mxu0
  %v2961 = vadd.f32 0.0, %v2960
  %2962 = vmatmul.f32.gmra.mxu0 %v2938
  %v2963 = vpop.f32.mrf.mxu0
  %v2964 = vadd.f32 0.0, %v2963
  %2965 = vmatmul.f32.gmra.mxu0 %v2940
  %v2966 = vpop.f32.mrf.mxu0
  %v2967 = vadd.f32 0.0, %v2966
  %2968 = vmatmul.f32.gmra.mxu0 %v2942
  %v2969 = vpop.f32.mrf.mxu0
  %v2970 = vadd.f32 0.0, %v2969
  %2971 = vdwg.mxu0
  %v2972 = vrcp.pop %v2961
  %v2973 = vrcp.pop %v2964
  %v2974 = vrcp.pop %v2967
  %v2975 = vrcp.pop %v2970
  %2977 = vset.pattern.permute.xlu0 0
  %2978 = vperm.xlu0 %2977, %v2972
  %v2979 = vpop.permute.xlu0 %2978
  %2982 = vset.pattern.permute.xlu0 0
  %2983 = vperm.xlu0 %2982, %v2973
  %v2984 = vpop.permute.xlu0 %2983
  %2987 = vset.pattern.permute.xlu0 0
  %2988 = vperm.xlu0 %2987, %v2974
  %v2989 = vpop.permute.xlu0 %2988
  %2992 = vset.pattern.permute.xlu0 0
  %2993 = vperm.xlu0 %2992, %v2975
  %v2994 = vpop.permute.xlu0 %2993
  %2996 = vset.pattern.permute.xlu0 1
  %2997 = vperm.xlu0 %2996, %v2972
  %v2998 = vpop.permute.xlu0 %2997
  %3000 = vset.pattern.permute.xlu0 1
  %3001 = vperm.xlu0 %3000, %v2973
  %v3002 = vpop.permute.xlu0 %3001
  %3004 = vset.pattern.permute.xlu0 1
  %3005 = vperm.xlu0 %3004, %v2974
  %v3006 = vpop.permute.xlu0 %3005
  %3008 = vset.pattern.permute.xlu0 1
  %3009 = vperm.xlu0 %3008, %v2975
  %v3010 = vpop.permute.xlu0 %3009
  %3012 = vset.pattern.permute.xlu0 2
  %3013 = vperm.xlu0 %3012, %v2972
  %v3014 = vpop.permute.xlu0 %3013
  %3016 = vset.pattern.permute.xlu0 2
  %3017 = vperm.xlu0 %3016, %v2973
  %v3018 = vpop.permute.xlu0 %3017
  %3020 = vset.pattern.permute.xlu0 2
  %3021 = vperm.xlu0 %3020, %v2974
  %v3022 = vpop.permute.xlu0 %3021
  %3024 = vset.pattern.permute.xlu0 2
  %3025 = vperm.xlu0 %3024, %v2975
  %v3026 = vpop.permute.xlu0 %3025
  %3028 = vset.pattern.permute.xlu0 3
  %3029 = vperm.xlu0 %3028, %v2972
  %v3030 = vpop.permute.xlu0 %3029
  %3032 = vset.pattern.permute.xlu0 3
  %3033 = vperm.xlu0 %3032, %v2973
  %v3034 = vpop.permute.xlu0 %3033
  %3036 = vset.pattern.permute.xlu0 3
  %3037 = vperm.xlu0 %3036, %v2974
  %v3038 = vpop.permute.xlu0 %3037
  %3040 = vset.pattern.permute.xlu0 3
  %3041 = vperm.xlu0 %3040, %v2975
  %v3042 = vpop.permute.xlu0 %3041
  %v3044 = vsel %vm317, %v2979, %v2998
  %v3045 = vsel %vm317, %v2984, %v3002
  %v3046 = vsel %vm317, %v2989, %v3006
  %v3047 = vsel %vm317, %v2994, %v3010
  %v3048 = vsel %vm66, %v3044, %v3014
  %v3049 = vsel %vm66, %v3045, %v3018
  %v3050 = vsel %vm66, %v3046, %v3022
  %v3051 = vsel %vm66, %v3047, %v3026
  %v3052 = vsel %vm326, %v3048, %v3030
  %v3053 = vsel %vm326, %v3049, %v3034
  %v3054 = vsel %vm326, %v3050, %v3038
  %v3055 = vsel %vm326, %v3051, %v3042
  %v3056 = vmul.f32 %v2936, %v3052
  %v3057 = vmul.f32 %v2938, %v3053
  %v3058 = vmul.f32 %v2940, %v3054
  %v3059 = vmul.f32 %v2942, %v3055
  %v3061 = vsel %vm317, %v3056, 0
  %v3064 = vsel %vm317, %v3057, 0
  %v3067 = vsel %vm317, %v3058, 0
  %v3070 = vsel %vm317, %v3059, 0
  %3072 = vmatpush.msra.mxu0 0.0
  %3073 = vmatpush.msra.mxu0 0.0
  %3074 = vmatpush.msra.mxu0 0.0
  %3075 = vmatpush.msra.mxu0 0.0
  %3076 = vmatpush.msra.mxu0 0.0
  %3077 = vmatpush.msra.mxu0 0.0
  %3078 = vmatpush.msra.mxu0 0.0
  %3079 = vmatpush.msra.mxu0 0.0
  %3080 = vmatpush.msra.mxu0 0.0
  %3081 = vmatpush.msra.mxu0 0.0
  %3082 = vmatpush.msra.mxu0 0.0
  %3083 = vmatpush.msra.mxu0 0.0
  %3084 = vmatpush.msra.mxu0 %v2625
  %3085 = vmatpush.msra.mxu0 %v2622
  %3086 = vmatpush.msra.mxu0 %v2619
  %3087 = vmatpush.msra.mxu0 %v2616
  %3088 = vmatmul.f32.gmra.mxu0 %v3061
  %v3089 = vpop.f32.mrf.mxu0
  %v3090 = vadd.f32 0.0, %v3089
  %3091 = vmatmul.f32.gmra.mxu0 %v3064
  %v3092 = vpop.f32.mrf.mxu0
  %v3093 = vadd.f32 0.0, %v3092
  %3094 = vmatmul.f32.gmra.mxu0 %v3067
  %v3095 = vpop.f32.mrf.mxu0
  %v3096 = vadd.f32 0.0, %v3095
  %3097 = vmatmul.f32.gmra.mxu0 %v3070
  %v3098 = vpop.f32.mrf.mxu0
  %v3099 = vadd.f32 0.0, %v3098
  %3100 = vdwg.mxu0
  %3101 = vrot.lane.b32.xlu0 %v3056, 96
  %v3102 = vpop.permute.xlu0 %3101
  %3103 = vrot.lane.b32.xlu0 %v3057, 96
  %v3104 = vpop.permute.xlu0 %3103
  %3105 = vrot.lane.b32.xlu0 %v3058, 96
  %v3106 = vpop.permute.xlu0 %3105
  %3107 = vrot.lane.b32.xlu0 %v3059, 96
  %v3108 = vpop.permute.xlu0 %3107
  %3109 = vrot.lane.b32.xlu0 %v2616, 112
  %v3110 = vpop.permute.xlu0 %3109
  %3111 = vrot.lane.b32.xlu0 %v2619, 112
  %v3112 = vpop.permute.xlu0 %3111
  %3113 = vrot.lane.b32.xlu0 %v2622, 112
  %v3114 = vpop.permute.xlu0 %3113
  %3115 = vrot.lane.b32.xlu0 %v2625, 112
  %v3116 = vpop.permute.xlu0 %3115
  %v3121 = vsel %vm317, %v3102, 0
  %v3123 = vsel %vm317, %v3104, 0
  %v3125 = vsel %vm317, %v3106, 0
  %v3127 = vsel %vm317, %v3108, 0
  %3129 = vmatpush.msra.mxu0 0.0
  %3130 = vmatpush.msra.mxu0 0.0
  %3131 = vmatpush.msra.mxu0 0.0
  %3132 = vmatpush.msra.mxu0 0.0
  %3133 = vmatpush.msra.mxu0 0.0
  %3134 = vmatpush.msra.mxu0 0.0
  %3135 = vmatpush.msra.mxu0 0.0
  %3136 = vmatpush.msra.mxu0 0.0
  %3137 = vmatpush.msra.mxu0 0.0
  %3138 = vmatpush.msra.mxu0 0.0
  %3139 = vmatpush.msra.mxu0 0.0
  %3140 = vmatpush.msra.mxu0 0.0
  %3141 = vmatpush.msra.mxu0 %v3116
  %3142 = vmatpush.msra.mxu0 %v3114
  %3143 = vmatpush.msra.mxu0 %v3112
  %3144 = vmatpush.msra.mxu0 %v3110
  %3145 = vmatmul.f32.gmra.mxu0 %v3121
  %v3146 = vpop.f32.mrf.mxu0
  %v3147 = vadd.f32 0.0, %v3146
  %3148 = vmatmul.f32.gmra.mxu0 %v3123
  %v3149 = vpop.f32.mrf.mxu0
  %v3150 = vadd.f32 0.0, %v3149
  %3151 = vmatmul.f32.gmra.mxu0 %v3125
  %v3152 = vpop.f32.mrf.mxu0
  %v3153 = vadd.f32 0.0, %v3152
  %3154 = vmatmul.f32.gmra.mxu0 %v3127
  %v3155 = vpop.f32.mrf.mxu0
  %v3156 = vadd.f32 0.0, %v3155
  %3157 = vdwg.mxu0
  %3158 = vrot.lane.b32.xlu0 %v3056, 64
  %v3159 = vpop.permute.xlu0 %3158
  %3160 = vrot.lane.b32.xlu0 %v3057, 64
  %v3161 = vpop.permute.xlu0 %3160
  %3162 = vrot.lane.b32.xlu0 %v3058, 64
  %v3163 = vpop.permute.xlu0 %3162
  %3164 = vrot.lane.b32.xlu0 %v3059, 64
  %v3165 = vpop.permute.xlu0 %3164
  %3166 = vrot.lane.b32.xlu0 %v2616, 96
  %v3167 = vpop.permute.xlu0 %3166
  %3168 = vrot.lane.b32.xlu0 %v2619, 96
  %v3169 = vpop.permute.xlu0 %3168
  %3170 = vrot.lane.b32.xlu0 %v2622, 96
  %v3171 = vpop.permute.xlu0 %3170
  %3172 = vrot.lane.b32.xlu0 %v2625, 96
  %v3173 = vpop.permute.xlu0 %3172
  %v3178 = vsel %vm317, %v3159, 0
  %v3180 = vsel %vm317, %v3161, 0
  %v3182 = vsel %vm317, %v3163, 0
  %v3184 = vsel %vm317, %v3165, 0
  %3186 = vmatpush.msra.mxu0 0.0
  %3187 = vmatpush.msra.mxu0 0.0
  %3188 = vmatpush.msra.mxu0 0.0
  %3189 = vmatpush.msra.mxu0 0.0
  %3190 = vmatpush.msra.mxu0 0.0
  %3191 = vmatpush.msra.mxu0 0.0
  %3192 = vmatpush.msra.mxu0 0.0
  %3193 = vmatpush.msra.mxu0 0.0
  %3194 = vmatpush.msra.mxu0 0.0
  %3195 = vmatpush.msra.mxu0 0.0
  %3196 = vmatpush.msra.mxu0 0.0
  %3197 = vmatpush.msra.mxu0 0.0
  %3198 = vmatpush.msra.mxu0 %v3173
  %3199 = vmatpush.msra.mxu0 %v3171
  %3200 = vmatpush.msra.mxu0 %v3169
  %3201 = vmatpush.msra.mxu0 %v3167
  %3202 = vmatmul.f32.gmra.mxu0 %v3178
  %v3203 = vpop.f32.mrf.mxu0
  %v3204 = vadd.f32 0.0, %v3203
  %3205 = vmatmul.f32.gmra.mxu0 %v3180
  %v3206 = vpop.f32.mrf.mxu0
  %v3207 = vadd.f32 0.0, %v3206
  %3208 = vmatmul.f32.gmra.mxu0 %v3182
  %v3209 = vpop.f32.mrf.mxu0
  %v3210 = vadd.f32 0.0, %v3209
  %3211 = vmatmul.f32.gmra.mxu0 %v3184
  %v3212 = vpop.f32.mrf.mxu0
  %v3213 = vadd.f32 0.0, %v3212
  %3214 = vdwg.mxu0
  %3215 = vrot.lane.b32.xlu0 %v3056, 32
  %v3216 = vpop.permute.xlu0 %3215
  %3217 = vrot.lane.b32.xlu0 %v3057, 32
  %v3218 = vpop.permute.xlu0 %3217
  %3219 = vrot.lane.b32.xlu0 %v3058, 32
  %v3220 = vpop.permute.xlu0 %3219
  %3221 = vrot.lane.b32.xlu0 %v3059, 32
  %v3222 = vpop.permute.xlu0 %3221
  %3223 = vrot.lane.b32.xlu0 %v2616, 80
  %v3224 = vpop.permute.xlu0 %3223
  %3225 = vrot.lane.b32.xlu0 %v2619, 80
  %v3226 = vpop.permute.xlu0 %3225
  %3227 = vrot.lane.b32.xlu0 %v2622, 80
  %v3228 = vpop.permute.xlu0 %3227
  %3229 = vrot.lane.b32.xlu0 %v2625, 80
  %v3230 = vpop.permute.xlu0 %3229
  %v3235 = vsel %vm317, %v3216, 0
  %v3237 = vsel %vm317, %v3218, 0
  %v3239 = vsel %vm317, %v3220, 0
  %v3241 = vsel %vm317, %v3222, 0
  %3243 = vmatpush.msra.mxu0 0.0
  %3244 = vmatpush.msra.mxu0 0.0
  %3245 = vmatpush.msra.mxu0 0.0
  %3246 = vmatpush.msra.mxu0 0.0
  %3247 = vmatpush.msra.mxu0 0.0
  %3248 = vmatpush.msra.mxu0 0.0
  %3249 = vmatpush.msra.mxu0 0.0
  %3250 = vmatpush.msra.mxu0 0.0
  %3251 = vmatpush.msra.mxu0 0.0
  %3252 = vmatpush.msra.mxu0 0.0
  %3253 = vmatpush.msra.mxu0 0.0
  %3254 = vmatpush.msra.mxu0 0.0
  %3255 = vmatpush.msra.mxu0 %v3230
  %3256 = vmatpush.msra.mxu0 %v3228
  %3257 = vmatpush.msra.mxu0 %v3226
  %3258 = vmatpush.msra.mxu0 %v3224
  %3259 = vmatmul.f32.gmra.mxu0 %v3235
  %v3260 = vpop.f32.mrf.mxu0
  %v3261 = vadd.f32 0.0, %v3260
  %3262 = vmatmul.f32.gmra.mxu0 %v3237
  %v3263 = vpop.f32.mrf.mxu0
  %v3264 = vadd.f32 0.0, %v3263
  %3265 = vmatmul.f32.gmra.mxu0 %v3239
  %v3266 = vpop.f32.mrf.mxu0
  %v3267 = vadd.f32 0.0, %v3266
  %3268 = vmatmul.f32.gmra.mxu0 %v3241
  %v3269 = vpop.f32.mrf.mxu0
  %v3270 = vadd.f32 0.0, %v3269
  %3271 = vdwg.mxu0
  %3276 = vrot.lane.b32.xlu0 %v3147, 16
  %v3277 = vpop.permute.xlu0 %3276
  %3278 = vrot.lane.b32.xlu0 %v3150, 16
  %v3279 = vpop.permute.xlu0 %3278
  %3280 = vrot.lane.b32.xlu0 %v3153, 16
  %v3281 = vpop.permute.xlu0 %3280
  %3282 = vrot.lane.b32.xlu0 %v3156, 16
  %v3283 = vpop.permute.xlu0 %3282
  %3292 = vrot.lane.b32.xlu0 %v3204, 32
  %v3293 = vpop.permute.xlu0 %3292
  %3294 = vrot.lane.b32.xlu0 %v3207, 32
  %v3295 = vpop.permute.xlu0 %3294
  %3296 = vrot.lane.b32.xlu0 %v3210, 32
  %v3297 = vpop.permute.xlu0 %3296
  %3298 = vrot.lane.b32.xlu0 %v3213, 32
  %v3299 = vpop.permute.xlu0 %3298
  %3308 = vrot.lane.b32.xlu0 %v3261, 48
  %v3309 = vpop.permute.xlu0 %3308
  %3310 = vrot.lane.b32.xlu0 %v3264, 48
  %v3311 = vpop.permute.xlu0 %3310
  %3312 = vrot.lane.b32.xlu0 %v3267, 48
  %v3313 = vpop.permute.xlu0 %3312
  %3314 = vrot.lane.b32.xlu0 %v3270, 48
  %v3315 = vpop.permute.xlu0 %3314
  %v3320 = vsel %vm803, %v3090, %v3277
  %v3321 = vsel %vm803, %v3093, %v3279
  %v3322 = vsel %vm803, %v3096, %v3281
  %v3323 = vsel %vm803, %v3099, %v3283
  %v3324 = vsel %vm317, %v3320, %v3293
  %v3325 = vsel %vm317, %v3321, %v3295
  %v3326 = vsel %vm317, %v3322, %v3297
  %v3327 = vsel %vm317, %v3323, %v3299
  %v3328 = vsel %vm812, %v3324, %v3309
  %v3329 = vsel %vm812, %v3325, %v3311
  %v3330 = vsel %vm812, %v3326, %v3313
  %v3331 = vsel %vm812, %v3327, %v3315
  %s3332 = scalar_lea.vmem %s4, 3
  %v3333 = vld [vmem:[%s3332] sm:$0x1]
  %v3335 = vperm.slane %v3333, 0
  %v3337 = vadd.f32 %v3328, %v3335
  %v3338 = vadd.f32 %v3329, %v3335
  %v3339 = vadd.f32 %v3330, %v3335
  %v3340 = vadd.f32 %v3331, %v3335
  %v3341 = vsel %vm66, %v3337, 0.0
  %v3342 = vsel %vm66, %v3338, 0.0
  %v3343 = vadd.f32 %v3341, %v3342
  %v3344 = vsel %vm66, %v3339, 0.0
  %v3345 = vadd.f32 %v3343, %v3344
  %v3346 = vsel %vm66, %v3340, 0.0
  %v3347 = vadd.f32 %v3345, %v3346
  %v3348 = vrot.slane %v3347, 4
  %v3349 = vadd.f32 %v3347, %v3348
  %v3350 = vrot.slane %v3349, 2
  %v3351 = vadd.f32 %v3349, %v3350
  %v3352 = vrot.slane %v3351, 1
  %v3353 = vadd.f32 %v3351, %v3352
  %v3354 = vmul.f32 %v3353, %v844
  %v3355 = vsub.f32 %v3337, %v3354
  %v3356 = vsub.f32 %v3338, %v3354
  %v3357 = vsub.f32 %v3339, %v3354
  %v3358 = vsub.f32 %v3340, %v3354
  %v3359 = vmul.f32 %v3355, %v3355
  %v3360 = vmul.f32 %v3356, %v3356
  %v3361 = vmul.f32 %v3357, %v3357
  %v3362 = vmul.f32 %v3358, %v3358
  %v3363 = vsel %vm66, %v3359, 0.0
  %v3364 = vsel %vm66, %v3360, 0.0
  %v3365 = vadd.f32 %v3363, %v3364
  %v3366 = vsel %vm66, %v3361, 0.0
  %v3367 = vadd.f32 %v3365, %v3366
  %v3368 = vsel %vm66, %v3362, 0.0
  %v3369 = vadd.f32 %v3367, %v3368
  %v3370 = vrot.slane %v3369, 4
  %v3371 = vadd.f32 %v3369, %v3370
  %v3372 = vrot.slane %v3371, 2
  %v3373 = vadd.f32 %v3371, %v3372
  %v3374 = vrot.slane %v3373, 1
  %v3375 = vadd.f32 %v3373, %v3374
  %v3376 = vmul.f32 %v3375, %v844
  %v3377 = vadd.f32 %v3376, 1e-05
  %v3378 = vrsqrt.pop %v3377
  %v3379 = vmul.f32 %v3378, %v3377
  %v3380 = vmul.f32 %v3379, %v3378
  %v3381 = vmul.f32 0.5, %v3380
  %v3382 = vsub.f32 1.5, %v3381
  %v3383 = vmul.f32 %v3378, %v3382
  %vm3384 = vweird.f32 %v3377
  %vm3385 = vweird.f32 %v3378
  %vm3386 = vmor %vm3384, %vm3385
  %v3387 = vsel %vm3386, %v3378, %v3383
  %v3388 = vmul.f32 %v3355, %v3387
  %v3389 = vmul.f32 %v3356, %v3387
  %v3390 = vmul.f32 %v3357, %v3387
  %v3391 = vmul.f32 %v3358, %v3387
  %s3392 = scalar_lea.vmem %s5, 3
  %v3393 = vld [vmem:[%s3392] sm:$0x1]
  %v3395 = vperm.slane %v3393, 0
  %v3397 = vmul.f32 %v3388, %v3395
  %v3398 = vmul.f32 %v3389, %v3395
  %v3399 = vmul.f32 %v3390, %v3395
  %v3400 = vmul.f32 %v3391, %v3395
  %s3401 = scalar_lea.vmem %s6, 3
  %v3402 = vld [vmem:[%s3401] sm:$0x1]
  %v3404 = vperm.slane %v3402, 0
  %v3406 = vadd.f32 %v3397, %v3404
  %v3407 = vadd.f32 %v3398, %v3404
  %v3408 = vadd.f32 %v3399, %v3404
  %v3409 = vadd.f32 %v3400, %v3404
  %v3410 = vmax.f32 %v3406, 0.0
  %v3411 = vmax.f32 %v3407, 0.0
  %v3412 = vmax.f32 %v3408, 0.0
  %v3413 = vmax.f32 %v3409, 0.0
  %v3414 = vld [vmem:[%s9] sm:$0xff]
  %v3415 = vld [vmem:[%s9 + $0x8] sm:$0xff]
  %v3416 = vld [vmem:[%s9 + $0x10] sm:$0xff]
  %v3417 = vld [vmem:[%s9 + $0x18] sm:$0xff]
  %v3418 = vld [vmem:[%s9 + $0x20] sm:$0xff]
  %v3419 = vld [vmem:[%s9 + $0x28] sm:$0xff]
  %v3420 = vld [vmem:[%s9 + $0x30] sm:$0xff]
  %v3421 = vld [vmem:[%s9 + $0x38] sm:$0xff]
  %v3422 = vld [vmem:[%s10] sm:$0x1]
  %v3424 = vperm.slane %v3422, 0
  %v3427 = vsel %vm66, %v3410, 0
  %v3430 = vsel %vm66, %v3411, 0
  %v3433 = vsel %vm66, %v3412, 0
  %v3436 = vsel %vm66, %v3413, 0
  %3438 = vmatpush.msra.mxu0 0.0
  %3439 = vmatpush.msra.mxu0 0.0
  %3440 = vmatpush.msra.mxu0 0.0
  %3441 = vmatpush.msra.mxu0 0.0
  %3442 = vmatpush.msra.mxu0 0.0
  %3443 = vmatpush.msra.mxu0 0.0
  %3444 = vmatpush.msra.mxu0 0.0
  %3445 = vmatpush.msra.mxu0 0.0
  %3446 = vmatpush.msra.mxu0 %v3421
  %3447 = vmatpush.msra.mxu0 %v3420
  %3448 = vmatpush.msra.mxu0 %v3419
  %3449 = vmatpush.msra.mxu0 %v3418
  %3450 = vmatpush.msra.mxu0 %v3417
  %3451 = vmatpush.msra.mxu0 %v3416
  %3452 = vmatpush.msra.mxu0 %v3415
  %3453 = vmatpush.msra.mxu0 %v3414
  %3454 = vmatmul.f32.gmra.mxu0 %v3427
  %v3455 = vpop.f32.mrf.mxu0
  %v3456 = vadd.f32 %v3424, %v3455
  %3457 = vmatmul.f32.gmra.mxu0 %v3430
  %v3458 = vpop.f32.mrf.mxu0
  %v3459 = vadd.f32 %v3424, %v3458
  %3460 = vmatmul.f32.gmra.mxu0 %v3433
  %v3461 = vpop.f32.mrf.mxu0
  %v3462 = vadd.f32 %v3424, %v3461
  %3463 = vmatmul.f32.gmra.mxu0 %v3436
  %v3464 = vpop.f32.mrf.mxu0
  %v3465 = vadd.f32 %v3424, %v3464
  %3466 = vdwg.mxu0
  %vm3467 = vcmask 31744
  %3468 = vst.msk [vmem:[%s11] sm:$0xff] %vm3467, %v3456
  %3469 = vst.msk [vmem:[%s11 + $0x8] sm:$0xff] %vm3467, %v3459
  %3470 = vst.msk [vmem:[%s11 + $0x10] sm:$0xff] %vm3467, %v3462
  %3471 = vst.msk [vmem:[%s11 + $0x18] sm:$0xff] %vm3467, %v3465
  // Predicated region
  $region46: #{tpu_custom_call.1} parent=0 // pred_check
    _
  $region47: #{tpu_custom_call.1} parent=0 // pred_check_branch
    %3473 = sbr.rel (0) target = $region49
  $region48: #{tpu_custom_call.1} parent=0 // pred_region
    _
  $region49: #{tpu_custom_call.1} parent=0 // pred_fallthru
    _
  // Predicated region
  $region50: #{tpu_custom_call.1} parent=0 // pred_check
    _
  $region51: #{tpu_custom_call.1} parent=0 // pred_check_branch
    %3475 = sbr.rel (0) target = $region53
  $region52: #{tpu_custom_call.1} parent=0 // pred_region
    _
  $region53: #{tpu_custom_call.1} parent=0 // pred_fallthru
    _

</llo_original>
